<compile_context>
chip_gen: v5e
topology: v5e:2x2
jax: 0.10.0
libtpu: 0.0.40
codegen_flags: <defaults>
</compile_context>

<pallas_src>
import math
from collections import defaultdict as ddict

import numpy as np
import jax
import jax.numpy as jnp
from jax import lax
from jax.experimental import pallas as pl
from jax.experimental.pallas import tpu as pltpu


_VMEM = pl.BlockSpec(memory_space=pltpu.MemorySpace.VMEM)

S_DIM = 16                      # s_emb_dim
T_DIM = 16                      # t_emb_dim
D = S_DIM + T_DIM               # native feature width (32 lanes, NOT padded to 128)
VMEM_LIMIT = 64 * 1024 * 1024


def _round_up(n, m):
    return ((int(n) + m - 1) // m) * m


def _pow2_bucket(n, minimum=8):
    """Bucket a data-dependent size to a power of two (>= minimum) to avoid recompiles."""
    n = max(int(n), minimum)
    return 1 << (n - 1).bit_length()


# ------------------------------ Pallas kernels ------------------------------ #

def fused_embed_transition(counts, tab_rows, tvals, w_rows, p_rows, *, gm, g_tile):
    """Fused diachronic embedding + grouped TransitionBlocks (Linear -> BN -> ReLU).

    counts   : (NGp,)          int32  scalar-prefetched true group sizes
    tab_rows : (10, NR, D)     f32    component table gathered in bundle-row order
                                      comp0 = entity emb (lanes 0:16),
                                      comps1-9 = y/m/d amp,freq,phi (lanes 16:32)
    tvals    : (3, NR, 1)      f32    per-row year / month / day values
    w_rows   : (NGp, D, D)     bf16   per-group W^T (pre-gathered, pre-cast)
    p_rows   : (NGp, 8, D)     f32    row0 = bias, row1 = gamma, row2 = beta
    """
    ngp = counts.shape[0]
    nr = tab_rows.shape[1]
    g_rows = g_tile * gm
    assert nr == ngp * gm

    def kernel(cnts_ref, tab_ref, tv_ref, w_ref, p_ref, o_ref):
        gt = pl.program_id(0)

        # --- diachronic time embedding + entity "concat" (the add IS the concat) ---
        ent = tab_ref[0]
        y = tab_ref[1] * jnp.sin(tab_ref[2] * tv_ref[0] + tab_ref[3])
        m = tab_ref[4] * jnp.sin(tab_ref[5] * tv_ref[1] + tab_ref[6])
        dd = tab_ref[7] * jnp.sin(tab_ref[8] * tv_ref[2] + tab_ref[9])
        x = (ent + y + m + dd).astype(jnp.bfloat16)          # (G_ROWS, D)

        # --- G_TILE relation-space groups per step, statically unrolled ---
        for g in range(g_tile):
            cnt = cnts_ref[gt * g_tile + g]                  # true rows in this group
            xg = x[g * gm:(g + 1) * gm, :]                   # (gm, D) bf16
            w = w_ref[g]                                     # (D, D)  bf16
            pg = p_ref[g]                                    # (8, D)  f32
            bias = pg[0:1, :]
            gamma = pg[1:2, :]
            beta = pg[2:3, :]

            z = jnp.dot(xg, w, preferred_element_type=jnp.float32) + bias

            # BatchNorm1d, training-mode (biased) stats over the true rows only.
            rows = lax.broadcasted_iota(jnp.int32, z.shape, 0)
            maskf = (rows < cnt).astype(jnp.float32)
            denom = 1.0 / jnp.maximum(cnt, 1).astype(jnp.float32)
            mean = jnp.sum(z * maskf, axis=0, keepdims=True) * denom
            cen = (z - mean) * maskf
            var = jnp.sum(cen * cen, axis=0, keepdims=True) * denom
            z_bn = (z - mean) * lax.rsqrt(var + 1e-5) * gamma + beta

            use_bn = (cnt > 1).astype(jnp.float32)           # matches `if z.shape[0] > 1`
            z = use_bn * z_bn + (1.0 - use_bn) * z
            z = jnp.maximum(z, 0.0) * maskf                  # ReLU; zero padded rows
            o_ref[g * gm:(g + 1) * gm, :] = z

    grid_spec = pltpu.PrefetchScalarGridSpec(
        num_scalar_prefetch=1,
        grid=(ngp // g_tile,),
        in_specs=[
            pl.BlockSpec((10, g_rows, D), lambda gt, cnts: (0, gt, 0)),
            pl.BlockSpec((3, g_rows, 1), lambda gt, cnts: (0, gt, 0)),
            pl.BlockSpec((g_tile, D, D), lambda gt, cnts: (gt, 0, 0)),
            pl.BlockSpec((g_tile, 8, D), lambda gt, cnts: (gt, 0, 0)),
        ],
        out_specs=pl.BlockSpec((g_rows, D), lambda gt, cnts: (gt, 0)),
    )
    return pl.pallas_call(
        kernel,
        grid_spec=grid_spec,
        out_shape=jax.ShapeDtypeStruct((nr, D), jnp.float32),
        compiler_params=pltpu.CompilerParams(
            dimension_semantics=("parallel",),
            vmem_limit_bytes=VMEM_LIMIT),
    )(counts, tab_rows, tvals, w_rows, p_rows)


def mean_pool_matmul(a_mat, x, inv_deg, *, te, tk):
    """MXU segment-mean pooling: pooled = (A @ X) * 1/deg.

    a_mat  : (E_pad, NR) bf16  0/1 indicator (entity i, transition row j)
    x      : (NR, D)     f32   grouped transition outputs (padded rows are zero)
    inv_deg: (E_pad, 1)  f32   1 / neighbour count (0 for padding rows)
    """
    e_pad, nr = a_mat.shape

    def kernel(a_ref, x_ref, inv_ref, o_ref, acc_ref):
        k = pl.program_id(1)

        @pl.when(k == 0)
        def _():
            acc_ref[...] = jnp.zeros_like(acc_ref)

        acc_ref[...] += jnp.dot(a_ref[...], x_ref[...].astype(jnp.bfloat16),
                                preferred_element_type=jnp.float32)

        @pl.when(k == pl.num_programs(1) - 1)
        def _():
            o_ref[...] = acc_ref[...] * inv_ref[...]

    return pl.pallas_call(
        kernel,
        out_shape=jax.ShapeDtypeStruct((e_pad, D), jnp.float32),
        grid_spec=pltpu.PrefetchScalarGridSpec(
            num_scalar_prefetch=0,
            grid=(e_pad // te, nr // tk),
            in_specs=[
                pl.BlockSpec((te, tk), lambda e, k: (e, k)),
                pl.BlockSpec((tk, D), lambda e, k: (k, 0)),
                pl.BlockSpec((te, 1), lambda e, k: (e, 0)),
            ],
            out_specs=pl.BlockSpec((te, D), lambda e, k: (e, 0)),
            scratch_shapes=[pltpu.VMEM((te, D), jnp.float32)]),
        compiler_params=pltpu.CompilerParams(
            dimension_semantics=("parallel", "arbitrary"),
            vmem_limit_bytes=VMEM_LIMIT),
    )(a_mat, x, inv_deg)


def _score_kernel(h_ref, r_ref, t_ref, o_ref):
    """Translational score -||h + r - t||_2, reduced over the D=32 lanes."""
    s = h_ref[...] + r_ref[...] - t_ref[...]
    o_ref[...] = -jnp.sqrt(jnp.sum(s * s, axis=1, keepdims=True))


def trans_score(h_rows, r_rows, t_rows):
    b_pad = h_rows.shape[0]
    # TODO(synk): fold this epilogue into the pooling kernel via scalar-prefetched
    # head/tail/relation indices to remove the last three tiny gathers + launch.
    return pl.pallas_call(
        _score_kernel,
        out_shape=jax.ShapeDtypeStruct((b_pad, 1), jnp.float32),
        in_specs=[_VMEM, _VMEM, _VMEM],
        out_specs=_VMEM,
    )(h_rows, r_rows, t_rows)


# -------------------------------- model (glue) ------------------------------- #

class Params:
    s_emb_dim = S_DIM
    t_emb_dim = T_DIM
    dropout = 0.0               # p=0 -> F.dropout is the identity (deterministic)
    pooling_method = "avg"
    num_neighbor_samples = 100  # larger than any degree -> no random sampling


class Dataset:
    def __init__(self, triples, n_ent, n_rel):
        self.data = {"train": triples}   # list of (h, r, t, y, m, d) int tuples
        self._n_ent = n_ent
        self._n_rel = n_rel

    def num_ent(self):
        return self._n_ent

    def num_rel(self):
        return self._n_rel


class DE_TGraphPallas:
    def __init__(self, dataset, params, key):
        self.dataset = dataset
        self.params = params
        self.train_link = self._get_link()
        self.gold_rels = self._get_gold_relations()

        s, t = params.s_emb_dim, params.t_emb_dim
        assert s + t == D
        ne, nr = dataset.num_ent(), dataset.num_rel()
        self.num_spaces = 2 * nr

        keys = iter(jax.random.split(key, 16 + 4 * nr))

        def xavier(shape):
            bound = math.sqrt(6.0 / (shape[0] + shape[1]))
            return np.asarray(
                jax.random.uniform(next(keys), shape, jnp.float32, -bound, bound))

        ent = xavier((ne, s))
        rel = xavier((nr, D))
        comps = [xavier((ne, t)) for _ in range(9)]   # y/m/d x amp,freq,phi

        # Dense component-major table (10, ne, 32): entity emb in lanes [0:16),
        # time components in lanes [16:32).  2x native footprint (vs 8x for the old
        # 128-lane padded tables); zero half-lanes make the in-kernel concat a plain add.
        tabs = np.zeros((10, ne, D), np.float32)
        tabs[0, :, :s] = ent
        for c, comp in enumerate(comps):
            tabs[1 + c, :, s:] = comp
        self.tabs = jnp.asarray(tabs)
        self.rel_tab = jnp.asarray(rel)                       # (nr, 32) native width

        # TransitionLayer params: space 2r -> transformH[r], 2r+1 -> transformT[r].
        w_all = np.zeros((self.num_spaces, D, D), np.float32)
        p_all = np.zeros((self.num_spaces, 8, D), np.float32)
        bound = 1.0 / math.sqrt(D)
        for space in range(self.num_spaces):
            w = np.asarray(jax.random.uniform(next(keys), (D, D), jnp.float32, -bound, bound))
            b = np.asarray(jax.random.uniform(next(keys), (D,), jnp.float32, -bound, bound))
            w_all[space] = w.T                 # kernel computes x @ W^T
            p_all[space, 0] = b                # bias
            p_all[space, 1] = 1.0              # BatchNorm gamma (default init)
            # row 2 (beta) stays zero
        self.w_all = jnp.asarray(w_all).astype(jnp.bfloat16)  # pre-cast for the MXU
        self.p_all = jnp.asarray(p_all)

    # ------- graph bookkeeping (pure Python, mirrors the torch module) -------- #
    def _get_link(self):
        train_link = ddict(set)
        for (h, _r, tt, y, m, dd) in self.dataset.data["train"]:
            train_link[h].add((tt, y, m, dd))
            train_link[tt].add((h, y, m, dd))
        # sorted for determinism; ordering does not change the math
        return ddict(list, ((k, sorted(v)) for k, v in train_link.items()))

    def _get_gold_relations(self):
        gold = dict()
        for (h, r, tt, y, m, dd) in self.dataset.data["train"]:
            gold[(h, tt, y, m, dd)] = r
        return gold

    def _get_context(self, entities):
        assign = ddict(list)
        neighbor_dict = {}
        for i, e in enumerate(entities):
            near = self.train_link[e]
            if len(near) >= self.params.num_neighbor_samples:
                # TODO(synk): torch uses random.sample here; deterministic truncation instead
                near = near[: self.params.num_neighbor_samples]
            assert len(near) > 0, f"Entity {e} has no neighbors"
            for k in near:
                if k not in neighbor_dict:
                    neighbor_dict[k] = len(neighbor_dict)
                assign[neighbor_dict[k]].append(i)
        neighbor = [k for k, _v in sorted(neighbor_dict.items(), key=lambda l: l[1])]
        return neighbor, neighbor_dict, assign

    # ------------------------------ numeric path ------------------------------ #
    def forward(self, heads, rels, tails, years, months, days):
        heads = [int(x) for x in heads]
        rels = [int(x) for x in rels]
        tails = [int(x) for x in tails]
        # query years/months/days are unused by the reference forward (only the
        # neighbours' timestamps enter the computation).

        entities = sorted(set(heads) | set(tails))           # torch.unique is sorted
        neighbor, _neighbor_dict, assign = self._get_context(entities)
        n = len(neighbor)
        num_e = len(entities)

        nb_ent = np.fromiter((k[0] for k in neighbor), dtype=np.int32, count=n)
        nb_y = np.fromiter((k[1] for k in neighbor), dtype=np.float32, count=n)
        nb_m = np.fromiter((k[2] for k in neighbor), dtype=np.float32, count=n)
        nb_d = np.fromiter((k[3] for k in neighbor), dtype=np.float32, count=n)

        # --------- relation-space bundling (host-side index construction) ----------
        # TODO(synk): cache this per unique entity set and ship all index arrays as a
        # single packed int32 upload; the dict plumbing mirrors the reference exactly.
        bundle_order, bundle_rows = [], {}
        for v, key in enumerate(neighbor):
            e_nb, yy, mm, dd = key
            for i in assign[v]:
                e = entities[i]
                if (e, e_nb, yy, mm, dd) in self.gold_rels:
                    r = self.gold_rels[(e, e_nb, yy, mm, dd)] * 2
                else:
                    r = self.gold_rels[(e_nb, e, yy, mm, dd)] * 2 + 1
                if r not in bundle_rows:
                    bundle_rows[r] = []
                    bundle_order.append(r)
                bundle_rows[r].append(v)

        ng = len(bundle_order)
        gm = _pow2_bucket(max(len(v) for v in bundle_rows.values()), 8)
        g_tile = max(1, min(8, 512 // gm))        # groups per grid step (<= 512 rows/step)
        ngp = _pow2_bucket(ng, g_tile)            # pow2 => multiple of g_tile
        nr_rows = ngp * gm

        space_ids = np.zeros((ngp,), np.int32)
        counts = np.zeros((ngp,), np.int32)
        src_nb = np.zeros((nr_rows,), np.int32)
        tvals = np.zeros((3, nr_rows, 1), np.float32)
        final_row = np.zeros((n,), np.int64)
        for g, r in enumerate(bundle_order):
            vs = np.asarray(bundle_rows[r], dtype=np.int64)
            space_ids[g] = r
            counts[g] = vs.shape[0]
            rows = g * gm + np.arange(vs.shape[0], dtype=np.int64)
            src_nb[rows] = nb_ent[vs]
            tvals[0, rows, 0] = nb_y[vs]
            tvals[1, rows, 0] = nb_m[vs]
            tvals[2, rows, 0] = nb_d[vs]
            for pos, v in enumerate(bundle_rows[r]):
                final_row[v] = g * gm + pos       # last write wins, same as the reference

        # -------------------- pooling / degree bookkeeping -------------------------
        pair_e, pair_r = [], []
        deg = np.zeros((num_e,), np.float32)
        for v in range(n):
            row = int(final_row[v])
            for i in assign[v]:
                pair_e.append(i)
                pair_r.append(row)
                deg[i] += 1.0

        e_pad = _pow2_bucket(num_e, 8)
        te = min(e_pad, 256)
        tk = min(nr_rows, 2048)
        inv_deg = np.zeros((e_pad, 1), np.float32)
        inv_deg[:num_e, 0] = 1.0 / np.maximum(deg, 1.0)

        # ------- device-side gathers / scatter from compact index arrays -----------
        tab_rows = self.tabs[:, jnp.asarray(src_nb), :]            # (10, NR, 32)
        w_rows = self.w_all[jnp.asarray(space_ids)]                # (NGp, 32, 32) bf16
        p_rows = self.p_all[jnp.asarray(space_ids)]                # (NGp, 8, 32)  f32
        a_mat = jnp.zeros((e_pad, nr_rows), jnp.bfloat16).at[
            jnp.asarray(np.asarray(pair_e, np.int32)),
            jnp.asarray(np.asarray(pair_r, np.int32))].set(1.0)

        # ---- kernel 1: fused diachronic embedding + grouped TransitionBlocks ------
        x_rows = fused_embed_transition(jnp.asarray(counts), tab_rows,
                                        jnp.asarray(tvals), w_rows, p_rows,
                                        gm=gm, g_tile=g_tile)       # (NR, 32)

        # ---- kernel 2: MXU segment-mean pooling  pooled = (A @ X) * 1/deg ---------
        pooled = mean_pool_matmul(a_mat, x_rows, jnp.asarray(inv_deg),
                                  te=te, tk=tk)                     # (E_pad, 32)

        # ---- kernel 3: translational score  -||h + r - t||_2 ----------------------
        ent_pos = {e: i for i, e in enumerate(entities)}
        b = len(heads)
        b_pad = _pow2_bucket(b, 8)
        h_idx = np.zeros((b_pad,), np.int32); h_idx[:b] = [ent_pos[x] for x in heads]
        t_idx = np.zeros((b_pad,), np.int32); t_idx[:b] = [ent_pos[x] for x in tails]
        r_idx = np.zeros((b_pad,), np.int32); r_idx[:b] = rels

        h_rows = pooled[jnp.asarray(h_idx)]                         # (B_pad, 32)
        t_rows = pooled[jnp.asarray(t_idx)]
        r_rows = self.rel_tab[jnp.asarray(r_idx)]
        # F.dropout with p = params.dropout = 0.0 is the identity.
        return trans_score(h_rows, r_rows, t_rows)[:b, 0]           # (B,)


# ----------------------------------- main ------------------------------------ #

if __name__ == "__main__":
    triples = [
        (0, 0, 1, 1, 2, 3),
        (1, 1, 2, 2, 3, 4),
        (2, 2, 3, 1, 1, 1),
        (3, 0, 4, 3, 2, 1),
        (4, 1, 5, 2, 2, 2),
        (5, 2, 0, 1, 3, 5),
        (0, 1, 3, 4, 1, 2),
        (1, 2, 4, 2, 5, 3),
    ]
    dataset = Dataset(triples, n_ent=6, n_rel=3)
    params = Params()

    model = DE_TGraphPallas(dataset, params, jax.random.PRNGKey(0))

    heads = [0, 1, 2, 3]
    rels = [0, 1, 2, 0]
    tails = [1, 2, 3, 4]
    years = [1, 2, 1, 3]
    months = [2, 3, 1, 2]
    days = [3, 4, 1, 1]

    scores = model.forward(heads, rels, tails, years, months, days)
    jax.block_until_ready(scores)
    assert scores.shape == (4,) and scores.dtype == jnp.float32
    assert bool(jnp.all(jnp.isfinite(scores)))
    print("KERNEL_OK")
</pallas_src>

<mosaic_0001>
module attributes {stable_mosaic.version = 11 : i64} {
  func.func @kernel(%arg0: i32, %arg1: memref<8xi32, #tpu.memory_space<smem>>, %arg2: memref<10x64x32xf32, #tpu.memory_space<vmem>>, %arg3: memref<3x64x1xf32, #tpu.memory_space<vmem>>, %arg4: memref<8x32x32xbf16, #tpu.memory_space<vmem>>, %arg5: memref<8x8x32xf32, #tpu.memory_space<vmem>>, %arg6: memref<64x32xf32, #tpu.memory_space<vmem>>) attributes {dimension_semantics = [#tpu.dimension_semantics<parallel>], iteration_bounds = array<i64: 1>, scalar_prefetch = 1 : i64, scratch_operands = 0 : i64, tpu.core_type = #tpu.core_type<tc>, window_params = [{transform_indices = @transform_0, window_bounds = array<i64: 10, 64, 32>}, {transform_indices = @transform_1, window_bounds = array<i64: 3, 64, 1>}, {transform_indices = @transform_2, window_bounds = array<i64: 8, 32, 32>}, {transform_indices = @transform_3, window_bounds = array<i64: 8, 8, 32>}, {transform_indices = @transform_4, window_bounds = array<i64: 64, 32>}]} {
    %c0 = arith.constant 0 : index
    %c0_0 = arith.constant 0 : index
    %c0_1 = arith.constant 0 : index
    %0 = vector.load %arg2[%c0, %c0_0, %c0_1] : memref<10x64x32xf32, #tpu.memory_space<vmem>>, vector<1x64x32xf32>
    %1 = vector.shape_cast %0 : vector<1x64x32xf32> to vector<64x32xf32>
    %c1 = arith.constant 1 : index
    %c0_2 = arith.constant 0 : index
    %c0_3 = arith.constant 0 : index
    %2 = vector.load %arg2[%c1, %c0_2, %c0_3] : memref<10x64x32xf32, #tpu.memory_space<vmem>>, vector<1x64x32xf32>
    %3 = vector.shape_cast %2 : vector<1x64x32xf32> to vector<64x32xf32>
    %c2 = arith.constant 2 : index
    %c0_4 = arith.constant 0 : index
    %c0_5 = arith.constant 0 : index
    %4 = vector.load %arg2[%c2, %c0_4, %c0_5] : memref<10x64x32xf32, #tpu.memory_space<vmem>>, vector<1x64x32xf32>
    %5 = vector.shape_cast %4 : vector<1x64x32xf32> to vector<64x32xf32>
    %c0_6 = arith.constant 0 : index
    %c0_7 = arith.constant 0 : index
    %c0_8 = arith.constant 0 : index
    %6 = vector.load %arg3[%c0_6, %c0_7, %c0_8] : memref<3x64x1xf32, #tpu.memory_space<vmem>>, vector<1x64x1xf32>
    %7 = vector.shape_cast %6 : vector<1x64x1xf32> to vector<64x1xf32>
    %8 = vector.broadcast %7 : vector<64x1xf32> to vector<64x32xf32>
    %9 = arith.mulf %5, %8 : vector<64x32xf32>
    %c3 = arith.constant 3 : index
    %c0_9 = arith.constant 0 : index
    %c0_10 = arith.constant 0 : index
    %10 = vector.load %arg2[%c3, %c0_9, %c0_10] : memref<10x64x32xf32, #tpu.memory_space<vmem>>, vector<1x64x32xf32>
    %11 = vector.shape_cast %10 : vector<1x64x32xf32> to vector<64x32xf32>
    %12 = arith.addf %9, %11 : vector<64x32xf32>
    %13 = math.sin %12 : vector<64x32xf32>
    %14 = arith.mulf %3, %13 : vector<64x32xf32>
    %c4 = arith.constant 4 : index
    %c0_11 = arith.constant 0 : index
    %c0_12 = arith.constant 0 : index
    %15 = vector.load %arg2[%c4, %c0_11, %c0_12] : memref<10x64x32xf32, #tpu.memory_space<vmem>>, vector<1x64x32xf32>
    %16 = vector.shape_cast %15 : vector<1x64x32xf32> to vector<64x32xf32>
    %c5 = arith.constant 5 : index
    %c0_13 = arith.constant 0 : index
    %c0_14 = arith.constant 0 : index
    %17 = vector.load %arg2[%c5, %c0_13, %c0_14] : memref<10x64x32xf32, #tpu.memory_space<vmem>>, vector<1x64x32xf32>
    %18 = vector.shape_cast %17 : vector<1x64x32xf32> to vector<64x32xf32>
    %c1_15 = arith.constant 1 : index
    %c0_16 = arith.constant 0 : index
    %c0_17 = arith.constant 0 : index
    %19 = vector.load %arg3[%c1_15, %c0_16, %c0_17] : memref<3x64x1xf32, #tpu.memory_space<vmem>>, vector<1x64x1xf32>
    %20 = vector.shape_cast %19 : vector<1x64x1xf32> to vector<64x1xf32>
    %21 = vector.broadcast %20 : vector<64x1xf32> to vector<64x32xf32>
    %22 = arith.mulf %18, %21 : vector<64x32xf32>
    %c6 = arith.constant 6 : index
    %c0_18 = arith.constant 0 : index
    %c0_19 = arith.constant 0 : index
    %23 = vector.load %arg2[%c6, %c0_18, %c0_19] : memref<10x64x32xf32, #tpu.memory_space<vmem>>, vector<1x64x32xf32>
    %24 = vector.shape_cast %23 : vector<1x64x32xf32> to vector<64x32xf32>
    %25 = arith.addf %22, %24 : vector<64x32xf32>
    %26 = math.sin %25 : vector<64x32xf32>
    %27 = arith.mulf %16, %26 : vector<64x32xf32>
    %c7 = arith.constant 7 : index
    %c0_20 = arith.constant 0 : index
    %c0_21 = arith.constant 0 : index
    %28 = vector.load %arg2[%c7, %c0_20, %c0_21] : memref<10x64x32xf32, #tpu.memory_space<vmem>>, vector<1x64x32xf32>
    %29 = vector.shape_cast %28 : vector<1x64x32xf32> to vector<64x32xf32>
    %c8 = arith.constant 8 : index
    %c0_22 = arith.constant 0 : index
    %c0_23 = arith.constant 0 : index
    %30 = vector.load %arg2[%c8, %c0_22, %c0_23] : memref<10x64x32xf32, #tpu.memory_space<vmem>>, vector<1x64x32xf32>
    %31 = vector.shape_cast %30 : vector<1x64x32xf32> to vector<64x32xf32>
    %c2_24 = arith.constant 2 : index
    %c0_25 = arith.constant 0 : index
    %c0_26 = arith.constant 0 : index
    %32 = vector.load %arg3[%c2_24, %c0_25, %c0_26] : memref<3x64x1xf32, #tpu.memory_space<vmem>>, vector<1x64x1xf32>
    %33 = vector.shape_cast %32 : vector<1x64x1xf32> to vector<64x1xf32>
    %34 = vector.broadcast %33 : vector<64x1xf32> to vector<64x32xf32>
    %35 = arith.mulf %31, %34 : vector<64x32xf32>
    %c9 = arith.constant 9 : index
    %c0_27 = arith.constant 0 : index
    %c0_28 = arith.constant 0 : index
    %36 = vector.load %arg2[%c9, %c0_27, %c0_28] : memref<10x64x32xf32, #tpu.memory_space<vmem>>, vector<1x64x32xf32>
    %37 = vector.shape_cast %36 : vector<1x64x32xf32> to vector<64x32xf32>
    %38 = arith.addf %35, %37 : vector<64x32xf32>
    %39 = math.sin %38 : vector<64x32xf32>
    %40 = arith.mulf %29, %39 : vector<64x32xf32>
    %41 = arith.addf %1, %14 : vector<64x32xf32>
    %42 = arith.addf %41, %27 : vector<64x32xf32>
    %43 = arith.addf %42, %40 : vector<64x32xf32>
    %44 = arith.truncf %43 : vector<64x32xf32> to vector<64x32xbf16>
    %c8_i32 = arith.constant 8 : i32
    %45 = arith.muli %arg0, %c8_i32 : i32
    %c0_i32 = arith.constant 0 : i32
    %46 = arith.addi %45, %c0_i32 : i32
    %47 = arith.index_cast %46 : i32 to index
    %48 = memref.load %arg1[%47] : memref<8xi32, #tpu.memory_space<smem>>
    %49 = vector.extract_strided_slice %44 {offsets = [0, 0], sizes = [8, 32], strides = [1, 1]} : vector<64x32xbf16> to vector<8x32xbf16>
    %c0_29 = arith.constant 0 : index
    %c0_30 = arith.constant 0 : index
    %c0_31 = arith.constant 0 : index
    %50 = vector.load %arg4[%c0_29, %c0_30, %c0_31] : memref<8x32x32xbf16, #tpu.memory_space<vmem>>, vector<1x32x32xbf16>
    %51 = vector.shape_cast %50 : vector<1x32x32xbf16> to vector<32x32xbf16>
    %c0_32 = arith.constant 0 : index
    %c0_33 = arith.constant 0 : index
    %c0_34 = arith.constant 0 : index
    %52 = vector.load %arg5[%c0_32, %c0_33, %c0_34] : memref<8x8x32xf32, #tpu.memory_space<vmem>>, vector<1x8x32xf32>
    %53 = vector.shape_cast %52 : vector<1x8x32xf32> to vector<8x32xf32>
    %54 = vector.extract_strided_slice %53 {offsets = [0, 0], sizes = [1, 32], strides = [1, 1]} : vector<8x32xf32> to vector<1x32xf32>
    %55 = vector.extract_strided_slice %53 {offsets = [1, 0], sizes = [1, 32], strides = [1, 1]} : vector<8x32xf32> to vector<1x32xf32>
    %56 = vector.extract_strided_slice %53 {offsets = [2, 0], sizes = [1, 32], strides = [1, 1]} : vector<8x32xf32> to vector<1x32xf32>
    %cst = arith.constant dense<0.000000e+00> : vector<8x32xf32>
    %57 = tpu.matmul %49, %51, %cst {dimension_numbers = #tpu.dot_dimension_numbers<[1], [0], [0], [1], [0, 0, 1, 1], [], []>} : vector<8x32xbf16>, vector<32x32xbf16>, vector<8x32xf32> -> vector<8x32xf32>
    %58 = vector.broadcast %54 : vector<1x32xf32> to vector<8x32xf32>
    %59 = arith.addf %57, %58 : vector<8x32xf32>
    %60 = tpu.iota {dimensions = array<i32: 0>} : vector<8x32xi32>
    %61 = vector.broadcast %48 : i32 to vector<8x32xi32>
    %62 = arith.cmpi slt, %60, %61 : vector<8x32xi32>
    %63 = arith.extui %62 : vector<8x32xi1> to vector<8x32xi32>
    %64 = arith.sitofp %63 : vector<8x32xi32> to vector<8x32xf32>
    %c1_i32 = arith.constant 1 : i32
    %65 = arith.maxsi %48, %c1_i32 : i32
    %66 = arith.sitofp %65 : i32 to f32
    %cst_35 = arith.constant 1.000000e+00 : f32
    %67 = arith.divf %cst_35, %66 : f32
    %68 = arith.mulf %59, %64 : vector<8x32xf32>
    %cst_36 = arith.constant dense<0.000000e+00> : vector<32xf32>
    %69 = vector.multi_reduction <add>, %68, %cst_36 [0] : vector<8x32xf32> to vector<32xf32>
    %70 = vector.shape_cast %69 : vector<32xf32> to vector<1x32xf32>
    %71 = vector.broadcast %67 : f32 to vector<1x32xf32>
    %72 = arith.mulf %70, %71 : vector<1x32xf32>
    %73 = vector.broadcast %72 : vector<1x32xf32> to vector<8x32xf32>
    %74 = arith.subf %59, %73 : vector<8x32xf32>
    %75 = arith.mulf %74, %64 : vector<8x32xf32>
    %76 = arith.mulf %75, %75 : vector<8x32xf32>
    %cst_37 = arith.constant dense<0.000000e+00> : vector<32xf32>
    %77 = vector.multi_reduction <add>, %76, %cst_37 [0] : vector<8x32xf32> to vector<32xf32>
    %78 = vector.shape_cast %77 : vector<32xf32> to vector<1x32xf32>
    %79 = vector.broadcast %67 : f32 to vector<1x32xf32>
    %80 = arith.mulf %78, %79 : vector<1x32xf32>
    %81 = vector.broadcast %72 : vector<1x32xf32> to vector<8x32xf32>
    %82 = arith.subf %59, %81 : vector<8x32xf32>
    %cst_38 = arith.constant 9.99999974E-6 : f32
    %83 = vector.broadcast %cst_38 : f32 to vector<1x32xf32>
    %84 = arith.addf %80, %83 : vector<1x32xf32>
    %85 = math.rsqrt %84 : vector<1x32xf32>
    %86 = vector.broadcast %85 : vector<1x32xf32> to vector<8x32xf32>
    %87 = arith.mulf %82, %86 : vector<8x32xf32>
    %88 = vector.broadcast %55 : vector<1x32xf32> to vector<8x32xf32>
    %89 = arith.mulf %87, %88 : vector<8x32xf32>
    %90 = vector.broadcast %56 : vector<1x32xf32> to vector<8x32xf32>
    %91 = arith.addf %89, %90 : vector<8x32xf32>
    %c1_i32_39 = arith.constant 1 : i32
    %92 = arith.cmpi sgt, %48, %c1_i32_39 : i32
    %93 = arith.extui %92 : i1 to i32
    %94 = arith.sitofp %93 : i32 to f32
    %95 = vector.broadcast %94 : f32 to vector<8x32xf32>
    %96 = arith.mulf %95, %91 : vector<8x32xf32>
    %cst_40 = arith.constant 1.000000e+00 : f32
    %97 = arith.subf %cst_40, %94 : f32
    %98 = vector.broadcast %97 : f32 to vector<8x32xf32>
    %99 = arith.mulf %98, %59 : vector<8x32xf32>
    %100 = arith.addf %96, %99 : vector<8x32xf32>
    %cst_41 = arith.constant 0.000000e+00 : f32
    %101 = vector.broadcast %cst_41 : f32 to vector<8x32xf32>
    %102 = arith.maximumf %100, %101 : vector<8x32xf32>
    %103 = arith.mulf %102, %64 : vector<8x32xf32>
    %c0_42 = arith.constant 0 : index
    %c0_43 = arith.constant 0 : index
    %104 = vector.load %arg6[%c0_42, %c0_43] : memref<64x32xf32, #tpu.memory_space<vmem>>, vector<8x32xf32>
    tpu.vector_store %arg6[%c0_42, %c0_43], %103 {strides = array<i32>} : memref<64x32xf32, #tpu.memory_space<vmem>>, vector<8x32xf32>,
    %c8_i32_44 = arith.constant 8 : i32
    %105 = arith.muli %arg0, %c8_i32_44 : i32
    %c1_i32_45 = arith.constant 1 : i32
    %106 = arith.addi %105, %c1_i32_45 : i32
    %107 = arith.index_cast %106 : i32 to index
    %108 = memref.load %arg1[%107] : memref<8xi32, #tpu.memory_space<smem>>
    %109 = vector.extract_strided_slice %44 {offsets = [8, 0], sizes = [8, 32], strides = [1, 1]} : vector<64x32xbf16> to vector<8x32xbf16>
    %c1_46 = arith.constant 1 : index
    %c0_47 = arith.constant 0 : index
    %c0_48 = arith.constant 0 : index
    %110 = vector.load %arg4[%c1_46, %c0_47, %c0_48] : memref<8x32x32xbf16, #tpu.memory_space<vmem>>, vector<1x32x32xbf16>
    %111 = vector.shape_cast %110 : vector<1x32x32xbf16> to vector<32x32xbf16>
    %c1_49 = arith.constant 1 : index
    %c0_50 = arith.constant 0 : index
    %c0_51 = arith.constant 0 : index
    %112 = vector.load %arg5[%c1_49, %c0_50, %c0_51] : memref<8x8x32xf32, #tpu.memory_space<vmem>>, vector<1x8x32xf32>
    %113 = vector.shape_cast %112 : vector<1x8x32xf32> to vector<8x32xf32>
    %114 = vector.extract_strided_slice %113 {offsets = [0, 0], sizes = [1, 32], strides = [1, 1]} : vector<8x32xf32> to vector<1x32xf32>
    %115 = vector.extract_strided_slice %113 {offsets = [1, 0], sizes = [1, 32], strides = [1, 1]} : vector<8x32xf32> to vector<1x32xf32>
    %116 = vector.extract_strided_slice %113 {offsets = [2, 0], sizes = [1, 32], strides = [1, 1]} : vector<8x32xf32> to vector<1x32xf32>
    %cst_52 = arith.constant dense<0.000000e+00> : vector<8x32xf32>
    %117 = tpu.matmul %109, %111, %cst_52 {dimension_numbers = #tpu.dot_dimension_numbers<[1], [0], [0], [1], [0, 0, 1, 1], [], []>} : vector<8x32xbf16>, vector<32x32xbf16>, vector<8x32xf32> -> vector<8x32xf32>
    %118 = vector.broadcast %114 : vector<1x32xf32> to vector<8x32xf32>
    %119 = arith.addf %117, %118 : vector<8x32xf32>
    %120 = tpu.iota {dimensions = array<i32: 0>} : vector<8x32xi32>
    %121 = vector.broadcast %108 : i32 to vector<8x32xi32>
    %122 = arith.cmpi slt, %120, %121 : vector<8x32xi32>
    %123 = arith.extui %122 : vector<8x32xi1> to vector<8x32xi32>
    %124 = arith.sitofp %123 : vector<8x32xi32> to vector<8x32xf32>
    %c1_i32_53 = arith.constant 1 : i32
    %125 = arith.maxsi %108, %c1_i32_53 : i32
    %126 = arith.sitofp %125 : i32 to f32
    %cst_54 = arith.constant 1.000000e+00 : f32
    %127 = arith.divf %cst_54, %126 : f32
    %128 = arith.mulf %119, %124 : vector<8x32xf32>
    %cst_55 = arith.constant dense<0.000000e+00> : vector<32xf32>
    %129 = vector.multi_reduction <add>, %128, %cst_55 [0] : vector<8x32xf32> to vector<32xf32>
    %130 = vector.shape_cast %129 : vector<32xf32> to vector<1x32xf32>
    %131 = vector.broadcast %127 : f32 to vector<1x32xf32>
    %132 = arith.mulf %130, %131 : vector<1x32xf32>
    %133 = vector.broadcast %132 : vector<1x32xf32> to vector<8x32xf32>
    %134 = arith.subf %119, %133 : vector<8x32xf32>
    %135 = arith.mulf %134, %124 : vector<8x32xf32>
    %136 = arith.mulf %135, %135 : vector<8x32xf32>
    %cst_56 = arith.constant dense<0.000000e+00> : vector<32xf32>
    %137 = vector.multi_reduction <add>, %136, %cst_56 [0] : vector<8x32xf32> to vector<32xf32>
    %138 = vector.shape_cast %137 : vector<32xf32> to vector<1x32xf32>
    %139 = vector.broadcast %127 : f32 to vector<1x32xf32>
    %140 = arith.mulf %138, %139 : vector<1x32xf32>
    %141 = vector.broadcast %132 : vector<1x32xf32> to vector<8x32xf32>
    %142 = arith.subf %119, %141 : vector<8x32xf32>
    %cst_57 = arith.constant 9.99999974E-6 : f32
    %143 = vector.broadcast %cst_57 : f32 to vector<1x32xf32>
    %144 = arith.addf %140, %143 : vector<1x32xf32>
    %145 = math.rsqrt %144 : vector<1x32xf32>
    %146 = vector.broadcast %145 : vector<1x32xf32> to vector<8x32xf32>
    %147 = arith.mulf %142, %146 : vector<8x32xf32>
    %148 = vector.broadcast %115 : vector<1x32xf32> to vector<8x32xf32>
    %149 = arith.mulf %147, %148 : vector<8x32xf32>
    %150 = vector.broadcast %116 : vector<1x32xf32> to vector<8x32xf32>
    %151 = arith.addf %149, %150 : vector<8x32xf32>
    %c1_i32_58 = arith.constant 1 : i32
    %152 = arith.cmpi sgt, %108, %c1_i32_58 : i32
    %153 = arith.extui %152 : i1 to i32
    %154 = arith.sitofp %153 : i32 to f32
    %155 = vector.broadcast %154 : f32 to vector<8x32xf32>
    %156 = arith.mulf %155, %151 : vector<8x32xf32>
    %cst_59 = arith.constant 1.000000e+00 : f32
    %157 = arith.subf %cst_59, %154 : f32
    %158 = vector.broadcast %157 : f32 to vector<8x32xf32>
    %159 = arith.mulf %158, %119 : vector<8x32xf32>
    %160 = arith.addf %156, %159 : vector<8x32xf32>
    %cst_60 = arith.constant 0.000000e+00 : f32
    %161 = vector.broadcast %cst_60 : f32 to vector<8x32xf32>
    %162 = arith.maximumf %160, %161 : vector<8x32xf32>
    %163 = arith.mulf %162, %124 : vector<8x32xf32>
    %c8_61 = arith.constant 8 : index
    %c0_62 = arith.constant 0 : index
    %164 = vector.load %arg6[%c8_61, %c0_62] : memref<64x32xf32, #tpu.memory_space<vmem>>, vector<8x32xf32>
    tpu.vector_store %arg6[%c8_61, %c0_62], %163 {strides = array<i32>} : memref<64x32xf32, #tpu.memory_space<vmem>>, vector<8x32xf32>,
    %c8_i32_63 = arith.constant 8 : i32
    %165 = arith.muli %arg0, %c8_i32_63 : i32
    %c2_i32 = arith.constant 2 : i32
    %166 = arith.addi %165, %c2_i32 : i32
    %167 = arith.index_cast %166 : i32 to index
    %168 = memref.load %arg1[%167] : memref<8xi32, #tpu.memory_space<smem>>
    %169 = vector.extract_strided_slice %44 {offsets = [16, 0], sizes = [8, 32], strides = [1, 1]} : vector<64x32xbf16> to vector<8x32xbf16>
    %c2_64 = arith.constant 2 : index
    %c0_65 = arith.constant 0 : index
    %c0_66 = arith.constant 0 : index
    %170 = vector.load %arg4[%c2_64, %c0_65, %c0_66] : memref<8x32x32xbf16, #tpu.memory_space<vmem>>, vector<1x32x32xbf16>
    %171 = vector.shape_cast %170 : vector<1x32x32xbf16> to vector<32x32xbf16>
    %c2_67 = arith.constant 2 : index
    %c0_68 = arith.constant 0 : index
    %c0_69 = arith.constant 0 : index
    %172 = vector.load %arg5[%c2_67, %c0_68, %c0_69] : memref<8x8x32xf32, #tpu.memory_space<vmem>>, vector<1x8x32xf32>
    %173 = vector.shape_cast %172 : vector<1x8x32xf32> to vector<8x32xf32>
    %174 = vector.extract_strided_slice %173 {offsets = [0, 0], sizes = [1, 32], strides = [1, 1]} : vector<8x32xf32> to vector<1x32xf32>
    %175 = vector.extract_strided_slice %173 {offsets = [1, 0], sizes = [1, 32], strides = [1, 1]} : vector<8x32xf32> to vector<1x32xf32>
    %176 = vector.extract_strided_slice %173 {offsets = [2, 0], sizes = [1, 32], strides = [1, 1]} : vector<8x32xf32> to vector<1x32xf32>
    %cst_70 = arith.constant dense<0.000000e+00> : vector<8x32xf32>
    %177 = tpu.matmul %169, %171, %cst_70 {dimension_numbers = #tpu.dot_dimension_numbers<[1], [0], [0], [1], [0, 0, 1, 1], [], []>} : vector<8x32xbf16>, vector<32x32xbf16>, vector<8x32xf32> -> vector<8x32xf32>
    %178 = vector.broadcast %174 : vector<1x32xf32> to vector<8x32xf32>
    %179 = arith.addf %177, %178 : vector<8x32xf32>
    %180 = tpu.iota {dimensions = array<i32: 0>} : vector<8x32xi32>
    %181 = vector.broadcast %168 : i32 to vector<8x32xi32>
    %182 = arith.cmpi slt, %180, %181 : vector<8x32xi32>
    %183 = arith.extui %182 : vector<8x32xi1> to vector<8x32xi32>
    %184 = arith.sitofp %183 : vector<8x32xi32> to vector<8x32xf32>
    %c1_i32_71 = arith.constant 1 : i32
    %185 = arith.maxsi %168, %c1_i32_71 : i32
    %186 = arith.sitofp %185 : i32 to f32
    %cst_72 = arith.constant 1.000000e+00 : f32
    %187 = arith.divf %cst_72, %186 : f32
    %188 = arith.mulf %179, %184 : vector<8x32xf32>
    %cst_73 = arith.constant dense<0.000000e+00> : vector<32xf32>
    %189 = vector.multi_reduction <add>, %188, %cst_73 [0] : vector<8x32xf32> to vector<32xf32>
    %190 = vector.shape_cast %189 : vector<32xf32> to vector<1x32xf32>
    %191 = vector.broadcast %187 : f32 to vector<1x32xf32>
    %192 = arith.mulf %190, %191 : vector<1x32xf32>
    %193 = vector.broadcast %192 : vector<1x32xf32> to vector<8x32xf32>
    %194 = arith.subf %179, %193 : vector<8x32xf32>
    %195 = arith.mulf %194, %184 : vector<8x32xf32>
    %196 = arith.mulf %195, %195 : vector<8x32xf32>
    %cst_74 = arith.constant dense<0.000000e+00> : vector<32xf32>
    %197 = vector.multi_reduction <add>, %196, %cst_74 [0] : vector<8x32xf32> to vector<32xf32>
    %198 = vector.shape_cast %197 : vector<32xf32> to vector<1x32xf32>
    %199 = vector.broadcast %187 : f32 to vector<1x32xf32>
    %200 = arith.mulf %198, %199 : vector<1x32xf32>
    %201 = vector.broadcast %192 : vector<1x32xf32> to vector<8x32xf32>
    %202 = arith.subf %179, %201 : vector<8x32xf32>
    %cst_75 = arith.constant 9.99999974E-6 : f32
    %203 = vector.broadcast %cst_75 : f32 to vector<1x32xf32>
    %204 = arith.addf %200, %203 : vector<1x32xf32>
    %205 = math.rsqrt %204 : vector<1x32xf32>
    %206 = vector.broadcast %205 : vector<1x32xf32> to vector<8x32xf32>
    %207 = arith.mulf %202, %206 : vector<8x32xf32>
    %208 = vector.broadcast %175 : vector<1x32xf32> to vector<8x32xf32>
    %209 = arith.mulf %207, %208 : vector<8x32xf32>
    %210 = vector.broadcast %176 : vector<1x32xf32> to vector<8x32xf32>
    %211 = arith.addf %209, %210 : vector<8x32xf32>
    %c1_i32_76 = arith.constant 1 : i32
    %212 = arith.cmpi sgt, %168, %c1_i32_76 : i32
    %213 = arith.extui %212 : i1 to i32
    %214 = arith.sitofp %213 : i32 to f32
    %215 = vector.broadcast %214 : f32 to vector<8x32xf32>
    %216 = arith.mulf %215, %211 : vector<8x32xf32>
    %cst_77 = arith.constant 1.000000e+00 : f32
    %217 = arith.subf %cst_77, %214 : f32
    %218 = vector.broadcast %217 : f32 to vector<8x32xf32>
    %219 = arith.mulf %218, %179 : vector<8x32xf32>
    %220 = arith.addf %216, %219 : vector<8x32xf32>
    %cst_78 = arith.constant 0.000000e+00 : f32
    %221 = vector.broadcast %cst_78 : f32 to vector<8x32xf32>
    %222 = arith.maximumf %220, %221 : vector<8x32xf32>
    %223 = arith.mulf %222, %184 : vector<8x32xf32>
    %c16 = arith.constant 16 : index
    %c0_79 = arith.constant 0 : index
    %224 = vector.load %arg6[%c16, %c0_79] : memref<64x32xf32, #tpu.memory_space<vmem>>, vector<8x32xf32>
    tpu.vector_store %arg6[%c16, %c0_79], %223 {strides = array<i32>} : memref<64x32xf32, #tpu.memory_space<vmem>>, vector<8x32xf32>,
    %c8_i32_80 = arith.constant 8 : i32
    %225 = arith.muli %arg0, %c8_i32_80 : i32
    %c3_i32 = arith.constant 3 : i32
    %226 = arith.addi %225, %c3_i32 : i32
    %227 = arith.index_cast %226 : i32 to index
    %228 = memref.load %arg1[%227] : memref<8xi32, #tpu.memory_space<smem>>
    %229 = vector.extract_strided_slice %44 {offsets = [24, 0], sizes = [8, 32], strides = [1, 1]} : vector<64x32xbf16> to vector<8x32xbf16>
    %c3_81 = arith.constant 3 : index
    %c0_82 = arith.constant 0 : index
    %c0_83 = arith.constant 0 : index
    %230 = vector.load %arg4[%c3_81, %c0_82, %c0_83] : memref<8x32x32xbf16, #tpu.memory_space<vmem>>, vector<1x32x32xbf16>
    %231 = vector.shape_cast %230 : vector<1x32x32xbf16> to vector<32x32xbf16>
    %c3_84 = arith.constant 3 : index
    %c0_85 = arith.constant 0 : index
    %c0_86 = arith.constant 0 : index
    %232 = vector.load %arg5[%c3_84, %c0_85, %c0_86] : memref<8x8x32xf32, #tpu.memory_space<vmem>>, vector<1x8x32xf32>
    %233 = vector.shape_cast %232 : vector<1x8x32xf32> to vector<8x32xf32>
    %234 = vector.extract_strided_slice %233 {offsets = [0, 0], sizes = [1, 32], strides = [1, 1]} : vector<8x32xf32> to vector<1x32xf32>
    %235 = vector.extract_strided_slice %233 {offsets = [1, 0], sizes = [1, 32], strides = [1, 1]} : vector<8x32xf32> to vector<1x32xf32>
    %236 = vector.extract_strided_slice %233 {offsets = [2, 0], sizes = [1, 32], strides = [1, 1]} : vector<8x32xf32> to vector<1x32xf32>
    %cst_87 = arith.constant dense<0.000000e+00> : vector<8x32xf32>
    %237 = tpu.matmul %229, %231, %cst_87 {dimension_numbers = #tpu.dot_dimension_numbers<[1], [0], [0], [1], [0, 0, 1, 1], [], []>} : vector<8x32xbf16>, vector<32x32xbf16>, vector<8x32xf32> -> vector<8x32xf32>
    %238 = vector.broadcast %234 : vector<1x32xf32> to vector<8x32xf32>
    %239 = arith.addf %237, %238 : vector<8x32xf32>
    %240 = tpu.iota {dimensions = array<i32: 0>} : vector<8x32xi32>
    %241 = vector.broadcast %228 : i32 to vector<8x32xi32>
    %242 = arith.cmpi slt, %240, %241 : vector<8x32xi32>
    %243 = arith.extui %242 : vector<8x32xi1> to vector<8x32xi32>
    %244 = arith.sitofp %243 : vector<8x32xi32> to vector<8x32xf32>
    %c1_i32_88 = arith.constant 1 : i32
    %245 = arith.maxsi %228, %c1_i32_88 : i32
    %246 = arith.sitofp %245 : i32 to f32
    %cst_89 = arith.constant 1.000000e+00 : f32
    %247 = arith.divf %cst_89, %246 : f32
    %248 = arith.mulf %239, %244 : vector<8x32xf32>
    %cst_90 = arith.constant dense<0.000000e+00> : vector<32xf32>
    %249 = vector.multi_reduction <add>, %248, %cst_90 [0] : vector<8x32xf32> to vector<32xf32>
    %250 = vector.shape_cast %249 : vector<32xf32> to vector<1x32xf32>
    %251 = vector.broadcast %247 : f32 to vector<1x32xf32>
    %252 = arith.mulf %250, %251 : vector<1x32xf32>
    %253 = vector.broadcast %252 : vector<1x32xf32> to vector<8x32xf32>
    %254 = arith.subf %239, %253 : vector<8x32xf32>
    %255 = arith.mulf %254, %244 : vector<8x32xf32>
    %256 = arith.mulf %255, %255 : vector<8x32xf32>
    %cst_91 = arith.constant dense<0.000000e+00> : vector<32xf32>
    %257 = vector.multi_reduction <add>, %256, %cst_91 [0] : vector<8x32xf32> to vector<32xf32>
    %258 = vector.shape_cast %257 : vector<32xf32> to vector<1x32xf32>
    %259 = vector.broadcast %247 : f32 to vector<1x32xf32>
    %260 = arith.mulf %258, %259 : vector<1x32xf32>
    %261 = vector.broadcast %252 : vector<1x32xf32> to vector<8x32xf32>
    %262 = arith.subf %239, %261 : vector<8x32xf32>
    %cst_92 = arith.constant 9.99999974E-6 : f32
    %263 = vector.broadcast %cst_92 : f32 to vector<1x32xf32>
    %264 = arith.addf %260, %263 : vector<1x32xf32>
    %265 = math.rsqrt %264 : vector<1x32xf32>
    %266 = vector.broadcast %265 : vector<1x32xf32> to vector<8x32xf32>
    %267 = arith.mulf %262, %266 : vector<8x32xf32>
    %268 = vector.broadcast %235 : vector<1x32xf32> to vector<8x32xf32>
    %269 = arith.mulf %267, %268 : vector<8x32xf32>
    %270 = vector.broadcast %236 : vector<1x32xf32> to vector<8x32xf32>
    %271 = arith.addf %269, %270 : vector<8x32xf32>
    %c1_i32_93 = arith.constant 1 : i32
    %272 = arith.cmpi sgt, %228, %c1_i32_93 : i32
    %273 = arith.extui %272 : i1 to i32
    %274 = arith.sitofp %273 : i32 to f32
    %275 = vector.broadcast %274 : f32 to vector<8x32xf32>
    %276 = arith.mulf %275, %271 : vector<8x32xf32>
    %cst_94 = arith.constant 1.000000e+00 : f32
    %277 = arith.subf %cst_94, %274 : f32
    %278 = vector.broadcast %277 : f32 to vector<8x32xf32>
    %279 = arith.mulf %278, %239 : vector<8x32xf32>
    %280 = arith.addf %276, %279 : vector<8x32xf32>
    %cst_95 = arith.constant 0.000000e+00 : f32
    %281 = vector.broadcast %cst_95 : f32 to vector<8x32xf32>
    %282 = arith.maximumf %280, %281 : vector<8x32xf32>
    %283 = arith.mulf %282, %244 : vector<8x32xf32>
    %c24 = arith.constant 24 : index
    %c0_96 = arith.constant 0 : index
    %284 = vector.load %arg6[%c24, %c0_96] : memref<64x32xf32, #tpu.memory_space<vmem>>, vector<8x32xf32>
    tpu.vector_store %arg6[%c24, %c0_96], %283 {strides = array<i32>} : memref<64x32xf32, #tpu.memory_space<vmem>>, vector<8x32xf32>,
    %c8_i32_97 = arith.constant 8 : i32
    %285 = arith.muli %arg0, %c8_i32_97 : i32
    %c4_i32 = arith.constant 4 : i32
    %286 = arith.addi %285, %c4_i32 : i32
    %287 = arith.index_cast %286 : i32 to index
    %288 = memref.load %arg1[%287] : memref<8xi32, #tpu.memory_space<smem>>
    %289 = vector.extract_strided_slice %44 {offsets = [32, 0], sizes = [8, 32], strides = [1, 1]} : vector<64x32xbf16> to vector<8x32xbf16>
    %c4_98 = arith.constant 4 : index
    %c0_99 = arith.constant 0 : index
    %c0_100 = arith.constant 0 : index
    %290 = vector.load %arg4[%c4_98, %c0_99, %c0_100] : memref<8x32x32xbf16, #tpu.memory_space<vmem>>, vector<1x32x32xbf16>
    %291 = vector.shape_cast %290 : vector<1x32x32xbf16> to vector<32x32xbf16>
    %c4_101 = arith.constant 4 : index
    %c0_102 = arith.constant 0 : index
    %c0_103 = arith.constant 0 : index
    %292 = vector.load %arg5[%c4_101, %c0_102, %c0_103] : memref<8x8x32xf32, #tpu.memory_space<vmem>>, vector<1x8x32xf32>
    %293 = vector.shape_cast %292 : vector<1x8x32xf32> to vector<8x32xf32>
    %294 = vector.extract_strided_slice %293 {offsets = [0, 0], sizes = [1, 32], strides = [1, 1]} : vector<8x32xf32> to vector<1x32xf32>
    %295 = vector.extract_strided_slice %293 {offsets = [1, 0], sizes = [1, 32], strides = [1, 1]} : vector<8x32xf32> to vector<1x32xf32>
    %296 = vector.extract_strided_slice %293 {offsets = [2, 0], sizes = [1, 32], strides = [1, 1]} : vector<8x32xf32> to vector<1x32xf32>
    %cst_104 = arith.constant dense<0.000000e+00> : vector<8x32xf32>
    %297 = tpu.matmul %289, %291, %cst_104 {dimension_numbers = #tpu.dot_dimension_numbers<[1], [0], [0], [1], [0, 0, 1, 1], [], []>} : vector<8x32xbf16>, vector<32x32xbf16>, vector<8x32xf32> -> vector<8x32xf32>
    %298 = vector.broadcast %294 : vector<1x32xf32> to vector<8x32xf32>
    %299 = arith.addf %297, %298 : vector<8x32xf32>
    %300 = tpu.iota {dimensions = array<i32: 0>} : vector<8x32xi32>
    %301 = vector.broadcast %288 : i32 to vector<8x32xi32>
    %302 = arith.cmpi slt, %300, %301 : vector<8x32xi32>
    %303 = arith.extui %302 : vector<8x32xi1> to vector<8x32xi32>
    %304 = arith.sitofp %303 : vector<8x32xi32> to vector<8x32xf32>
    %c1_i32_105 = arith.constant 1 : i32
    %305 = arith.maxsi %288, %c1_i32_105 : i32
    %306 = arith.sitofp %305 : i32 to f32
    %cst_106 = arith.constant 1.000000e+00 : f32
    %307 = arith.divf %cst_106, %306 : f32
    %308 = arith.mulf %299, %304 : vector<8x32xf32>
    %cst_107 = arith.constant dense<0.000000e+00> : vector<32xf32>
    %309 = vector.multi_reduction <add>, %308, %cst_107 [0] : vector<8x32xf32> to vector<32xf32>
    %310 = vector.shape_cast %309 : vector<32xf32> to vector<1x32xf32>
    %311 = vector.broadcast %307 : f32 to vector<1x32xf32>
    %312 = arith.mulf %310, %311 : vector<1x32xf32>
    %313 = vector.broadcast %312 : vector<1x32xf32> to vector<8x32xf32>
    %314 = arith.subf %299, %313 : vector<8x32xf32>
    %315 = arith.mulf %314, %304 : vector<8x32xf32>
    %316 = arith.mulf %315, %315 : vector<8x32xf32>
    %cst_108 = arith.constant dense<0.000000e+00> : vector<32xf32>
    %317 = vector.multi_reduction <add>, %316, %cst_108 [0] : vector<8x32xf32> to vector<32xf32>
    %318 = vector.shape_cast %317 : vector<32xf32> to vector<1x32xf32>
    %319 = vector.broadcast %307 : f32 to vector<1x32xf32>
    %320 = arith.mulf %318, %319 : vector<1x32xf32>
    %321 = vector.broadcast %312 : vector<1x32xf32> to vector<8x32xf32>
    %322 = arith.subf %299, %321 : vector<8x32xf32>
    %cst_109 = arith.constant 9.99999974E-6 : f32
    %323 = vector.broadcast %cst_109 : f32 to vector<1x32xf32>
    %324 = arith.addf %320, %323 : vector<1x32xf32>
    %325 = math.rsqrt %324 : vector<1x32xf32>
    %326 = vector.broadcast %325 : vector<1x32xf32> to vector<8x32xf32>
    %327 = arith.mulf %322, %326 : vector<8x32xf32>
    %328 = vector.broadcast %295 : vector<1x32xf32> to vector<8x32xf32>
    %329 = arith.mulf %327, %328 : vector<8x32xf32>
    %330 = vector.broadcast %296 : vector<1x32xf32> to vector<8x32xf32>
    %331 = arith.addf %329, %330 : vector<8x32xf32>
    %c1_i32_110 = arith.constant 1 : i32
    %332 = arith.cmpi sgt, %288, %c1_i32_110 : i32
    %333 = arith.extui %332 : i1 to i32
    %334 = arith.sitofp %333 : i32 to f32
    %335 = vector.broadcast %334 : f32 to vector<8x32xf32>
    %336 = arith.mulf %335, %331 : vector<8x32xf32>
    %cst_111 = arith.constant 1.000000e+00 : f32
    %337 = arith.subf %cst_111, %334 : f32
    %338 = vector.broadcast %337 : f32 to vector<8x32xf32>
    %339 = arith.mulf %338, %299 : vector<8x32xf32>
    %340 = arith.addf %336, %339 : vector<8x32xf32>
    %cst_112 = arith.constant 0.000000e+00 : f32
    %341 = vector.broadcast %cst_112 : f32 to vector<8x32xf32>
    %342 = arith.maximumf %340, %341 : vector<8x32xf32>
    %343 = arith.mulf %342, %304 : vector<8x32xf32>
    %c32 = arith.constant 32 : index
    %c0_113 = arith.constant 0 : index
    %344 = vector.load %arg6[%c32, %c0_113] : memref<64x32xf32, #tpu.memory_space<vmem>>, vector<8x32xf32>
    tpu.vector_store %arg6[%c32, %c0_113], %343 {strides = array<i32>} : memref<64x32xf32, #tpu.memory_space<vmem>>, vector<8x32xf32>,
    %c8_i32_114 = arith.constant 8 : i32
    %345 = arith.muli %arg0, %c8_i32_114 : i32
    %c5_i32 = arith.constant 5 : i32
    %346 = arith.addi %345, %c5_i32 : i32
    %347 = arith.index_cast %346 : i32 to index
    %348 = memref.load %arg1[%347] : memref<8xi32, #tpu.memory_space<smem>>
    %349 = vector.extract_strided_slice %44 {offsets = [40, 0], sizes = [8, 32], strides = [1, 1]} : vector<64x32xbf16> to vector<8x32xbf16>
    %c5_115 = arith.constant 5 : index
    %c0_116 = arith.constant 0 : index
    %c0_117 = arith.constant 0 : index
    %350 = vector.load %arg4[%c5_115, %c0_116, %c0_117] : memref<8x32x32xbf16, #tpu.memory_space<vmem>>, vector<1x32x32xbf16>
    %351 = vector.shape_cast %350 : vector<1x32x32xbf16> to vector<32x32xbf16>
    %c5_118 = arith.constant 5 : index
    %c0_119 = arith.constant 0 : index
    %c0_120 = arith.constant 0 : index
    %352 = vector.load %arg5[%c5_118, %c0_119, %c0_120] : memref<8x8x32xf32, #tpu.memory_space<vmem>>, vector<1x8x32xf32>
    %353 = vector.shape_cast %352 : vector<1x8x32xf32> to vector<8x32xf32>
    %354 = vector.extract_strided_slice %353 {offsets = [0, 0], sizes = [1, 32], strides = [1, 1]} : vector<8x32xf32> to vector<1x32xf32>
    %355 = vector.extract_strided_slice %353 {offsets = [1, 0], sizes = [1, 32], strides = [1, 1]} : vector<8x32xf32> to vector<1x32xf32>
    %356 = vector.extract_strided_slice %353 {offsets = [2, 0], sizes = [1, 32], strides = [1, 1]} : vector<8x32xf32> to vector<1x32xf32>
    %cst_121 = arith.constant dense<0.000000e+00> : vector<8x32xf32>
    %357 = tpu.matmul %349, %351, %cst_121 {dimension_numbers = #tpu.dot_dimension_numbers<[1], [0], [0], [1], [0, 0, 1, 1], [], []>} : vector<8x32xbf16>, vector<32x32xbf16>, vector<8x32xf32> -> vector<8x32xf32>
    %358 = vector.broadcast %354 : vector<1x32xf32> to vector<8x32xf32>
    %359 = arith.addf %357, %358 : vector<8x32xf32>
    %360 = tpu.iota {dimensions = array<i32: 0>} : vector<8x32xi32>
    %361 = vector.broadcast %348 : i32 to vector<8x32xi32>
    %362 = arith.cmpi slt, %360, %361 : vector<8x32xi32>
    %363 = arith.extui %362 : vector<8x32xi1> to vector<8x32xi32>
    %364 = arith.sitofp %363 : vector<8x32xi32> to vector<8x32xf32>
    %c1_i32_122 = arith.constant 1 : i32
    %365 = arith.maxsi %348, %c1_i32_122 : i32
    %366 = arith.sitofp %365 : i32 to f32
    %cst_123 = arith.constant 1.000000e+00 : f32
    %367 = arith.divf %cst_123, %366 : f32
    %368 = arith.mulf %359, %364 : vector<8x32xf32>
    %cst_124 = arith.constant dense<0.000000e+00> : vector<32xf32>
    %369 = vector.multi_reduction <add>, %368, %cst_124 [0] : vector<8x32xf32> to vector<32xf32>
    %370 = vector.shape_cast %369 : vector<32xf32> to vector<1x32xf32>
    %371 = vector.broadcast %367 : f32 to vector<1x32xf32>
    %372 = arith.mulf %370, %371 : vector<1x32xf32>
    %373 = vector.broadcast %372 : vector<1x32xf32> to vector<8x32xf32>
    %374 = arith.subf %359, %373 : vector<8x32xf32>
    %375 = arith.mulf %374, %364 : vector<8x32xf32>
    %376 = arith.mulf %375, %375 : vector<8x32xf32>
    %cst_125 = arith.constant dense<0.000000e+00> : vector<32xf32>
    %377 = vector.multi_reduction <add>, %376, %cst_125 [0] : vector<8x32xf32> to vector<32xf32>
    %378 = vector.shape_cast %377 : vector<32xf32> to vector<1x32xf32>
    %379 = vector.broadcast %367 : f32 to vector<1x32xf32>
    %380 = arith.mulf %378, %379 : vector<1x32xf32>
    %381 = vector.broadcast %372 : vector<1x32xf32> to vector<8x32xf32>
    %382 = arith.subf %359, %381 : vector<8x32xf32>
    %cst_126 = arith.constant 9.99999974E-6 : f32
    %383 = vector.broadcast %cst_126 : f32 to vector<1x32xf32>
    %384 = arith.addf %380, %383 : vector<1x32xf32>
    %385 = math.rsqrt %384 : vector<1x32xf32>
    %386 = vector.broadcast %385 : vector<1x32xf32> to vector<8x32xf32>
    %387 = arith.mulf %382, %386 : vector<8x32xf32>
    %388 = vector.broadcast %355 : vector<1x32xf32> to vector<8x32xf32>
    %389 = arith.mulf %387, %388 : vector<8x32xf32>
    %390 = vector.broadcast %356 : vector<1x32xf32> to vector<8x32xf32>
    %391 = arith.addf %389, %390 : vector<8x32xf32>
    %c1_i32_127 = arith.constant 1 : i32
    %392 = arith.cmpi sgt, %348, %c1_i32_127 : i32
    %393 = arith.extui %392 : i1 to i32
    %394 = arith.sitofp %393 : i32 to f32
    %395 = vector.broadcast %394 : f32 to vector<8x32xf32>
    %396 = arith.mulf %395, %391 : vector<8x32xf32>
    %cst_128 = arith.constant 1.000000e+00 : f32
    %397 = arith.subf %cst_128, %394 : f32
    %398 = vector.broadcast %397 : f32 to vector<8x32xf32>
    %399 = arith.mulf %398, %359 : vector<8x32xf32>
    %400 = arith.addf %396, %399 : vector<8x32xf32>
    %cst_129 = arith.constant 0.000000e+00 : f32
    %401 = vector.broadcast %cst_129 : f32 to vector<8x32xf32>
    %402 = arith.maximumf %400, %401 : vector<8x32xf32>
    %403 = arith.mulf %402, %364 : vector<8x32xf32>
    %c40 = arith.constant 40 : index
    %c0_130 = arith.constant 0 : index
    %404 = vector.load %arg6[%c40, %c0_130] : memref<64x32xf32, #tpu.memory_space<vmem>>, vector<8x32xf32>
    tpu.vector_store %arg6[%c40, %c0_130], %403 {strides = array<i32>} : memref<64x32xf32, #tpu.memory_space<vmem>>, vector<8x32xf32>,
    %c8_i32_131 = arith.constant 8 : i32
    %405 = arith.muli %arg0, %c8_i32_131 : i32
    %c6_i32 = arith.constant 6 : i32
    %406 = arith.addi %405, %c6_i32 : i32
    %407 = arith.index_cast %406 : i32 to index
    %408 = memref.load %arg1[%407] : memref<8xi32, #tpu.memory_space<smem>>
    %409 = vector.extract_strided_slice %44 {offsets = [48, 0], sizes = [8, 32], strides = [1, 1]} : vector<64x32xbf16> to vector<8x32xbf16>
    %c6_132 = arith.constant 6 : index
    %c0_133 = arith.constant 0 : index
    %c0_134 = arith.constant 0 : index
    %410 = vector.load %arg4[%c6_132, %c0_133, %c0_134] : memref<8x32x32xbf16, #tpu.memory_space<vmem>>, vector<1x32x32xbf16>
    %411 = vector.shape_cast %410 : vector<1x32x32xbf16> to vector<32x32xbf16>
    %c6_135 = arith.constant 6 : index
    %c0_136 = arith.constant 0 : index
    %c0_137 = arith.constant 0 : index
    %412 = vector.load %arg5[%c6_135, %c0_136, %c0_137] : memref<8x8x32xf32, #tpu.memory_space<vmem>>, vector<1x8x32xf32>
    %413 = vector.shape_cast %412 : vector<1x8x32xf32> to vector<8x32xf32>
    %414 = vector.extract_strided_slice %413 {offsets = [0, 0], sizes = [1, 32], strides = [1, 1]} : vector<8x32xf32> to vector<1x32xf32>
    %415 = vector.extract_strided_slice %413 {offsets = [1, 0], sizes = [1, 32], strides = [1, 1]} : vector<8x32xf32> to vector<1x32xf32>
    %416 = vector.extract_strided_slice %413 {offsets = [2, 0], sizes = [1, 32], strides = [1, 1]} : vector<8x32xf32> to vector<1x32xf32>
    %cst_138 = arith.constant dense<0.000000e+00> : vector<8x32xf32>
    %417 = tpu.matmul %409, %411, %cst_138 {dimension_numbers = #tpu.dot_dimension_numbers<[1], [0], [0], [1], [0, 0, 1, 1], [], []>} : vector<8x32xbf16>, vector<32x32xbf16>, vector<8x32xf32> -> vector<8x32xf32>
    %418 = vector.broadcast %414 : vector<1x32xf32> to vector<8x32xf32>
    %419 = arith.addf %417, %418 : vector<8x32xf32>
    %420 = tpu.iota {dimensions = array<i32: 0>} : vector<8x32xi32>
    %421 = vector.broadcast %408 : i32 to vector<8x32xi32>
    %422 = arith.cmpi slt, %420, %421 : vector<8x32xi32>
    %423 = arith.extui %422 : vector<8x32xi1> to vector<8x32xi32>
    %424 = arith.sitofp %423 : vector<8x32xi32> to vector<8x32xf32>
    %c1_i32_139 = arith.constant 1 : i32
    %425 = arith.maxsi %408, %c1_i32_139 : i32
    %426 = arith.sitofp %425 : i32 to f32
    %cst_140 = arith.constant 1.000000e+00 : f32
    %427 = arith.divf %cst_140, %426 : f32
    %428 = arith.mulf %419, %424 : vector<8x32xf32>
    %cst_141 = arith.constant dense<0.000000e+00> : vector<32xf32>
    %429 = vector.multi_reduction <add>, %428, %cst_141 [0] : vector<8x32xf32> to vector<32xf32>
    %430 = vector.shape_cast %429 : vector<32xf32> to vector<1x32xf32>
    %431 = vector.broadcast %427 : f32 to vector<1x32xf32>
    %432 = arith.mulf %430, %431 : vector<1x32xf32>
    %433 = vector.broadcast %432 : vector<1x32xf32> to vector<8x32xf32>
    %434 = arith.subf %419, %433 : vector<8x32xf32>
    %435 = arith.mulf %434, %424 : vector<8x32xf32>
    %436 = arith.mulf %435, %435 : vector<8x32xf32>
    %cst_142 = arith.constant dense<0.000000e+00> : vector<32xf32>
    %437 = vector.multi_reduction <add>, %436, %cst_142 [0] : vector<8x32xf32> to vector<32xf32>
    %438 = vector.shape_cast %437 : vector<32xf32> to vector<1x32xf32>
    %439 = vector.broadcast %427 : f32 to vector<1x32xf32>
    %440 = arith.mulf %438, %439 : vector<1x32xf32>
    %441 = vector.broadcast %432 : vector<1x32xf32> to vector<8x32xf32>
    %442 = arith.subf %419, %441 : vector<8x32xf32>
    %cst_143 = arith.constant 9.99999974E-6 : f32
    %443 = vector.broadcast %cst_143 : f32 to vector<1x32xf32>
    %444 = arith.addf %440, %443 : vector<1x32xf32>
    %445 = math.rsqrt %444 : vector<1x32xf32>
    %446 = vector.broadcast %445 : vector<1x32xf32> to vector<8x32xf32>
    %447 = arith.mulf %442, %446 : vector<8x32xf32>
    %448 = vector.broadcast %415 : vector<1x32xf32> to vector<8x32xf32>
    %449 = arith.mulf %447, %448 : vector<8x32xf32>
    %450 = vector.broadcast %416 : vector<1x32xf32> to vector<8x32xf32>
    %451 = arith.addf %449, %450 : vector<8x32xf32>
    %c1_i32_144 = arith.constant 1 : i32
    %452 = arith.cmpi sgt, %408, %c1_i32_144 : i32
    %453 = arith.extui %452 : i1 to i32
    %454 = arith.sitofp %453 : i32 to f32
    %455 = vector.broadcast %454 : f32 to vector<8x32xf32>
    %456 = arith.mulf %455, %451 : vector<8x32xf32>
    %cst_145 = arith.constant 1.000000e+00 : f32
    %457 = arith.subf %cst_145, %454 : f32
    %458 = vector.broadcast %457 : f32 to vector<8x32xf32>
    %459 = arith.mulf %458, %419 : vector<8x32xf32>
    %460 = arith.addf %456, %459 : vector<8x32xf32>
    %cst_146 = arith.constant 0.000000e+00 : f32
    %461 = vector.broadcast %cst_146 : f32 to vector<8x32xf32>
    %462 = arith.maximumf %460, %461 : vector<8x32xf32>
    %463 = arith.mulf %462, %424 : vector<8x32xf32>
    %c48 = arith.constant 48 : index
    %c0_147 = arith.constant 0 : index
    %464 = vector.load %arg6[%c48, %c0_147] : memref<64x32xf32, #tpu.memory_space<vmem>>, vector<8x32xf32>
    tpu.vector_store %arg6[%c48, %c0_147], %463 {strides = array<i32>} : memref<64x32xf32, #tpu.memory_space<vmem>>, vector<8x32xf32>,
    %c8_i32_148 = arith.constant 8 : i32
    %465 = arith.muli %arg0, %c8_i32_148 : i32
    %c7_i32 = arith.constant 7 : i32
    %466 = arith.addi %465, %c7_i32 : i32
    %467 = arith.index_cast %466 : i32 to index
    %468 = memref.load %arg1[%467] : memref<8xi32, #tpu.memory_space<smem>>
    %469 = vector.extract_strided_slice %44 {offsets = [56, 0], sizes = [8, 32], strides = [1, 1]} : vector<64x32xbf16> to vector<8x32xbf16>
    %c7_149 = arith.constant 7 : index
    %c0_150 = arith.constant 0 : index
    %c0_151 = arith.constant 0 : index
    %470 = vector.load %arg4[%c7_149, %c0_150, %c0_151] : memref<8x32x32xbf16, #tpu.memory_space<vmem>>, vector<1x32x32xbf16>
    %471 = vector.shape_cast %470 : vector<1x32x32xbf16> to vector<32x32xbf16>
    %c7_152 = arith.constant 7 : index
    %c0_153 = arith.constant 0 : index
    %c0_154 = arith.constant 0 : index
    %472 = vector.load %arg5[%c7_152, %c0_153, %c0_154] : memref<8x8x32xf32, #tpu.memory_space<vmem>>, vector<1x8x32xf32>
    %473 = vector.shape_cast %472 : vector<1x8x32xf32> to vector<8x32xf32>
    %474 = vector.extract_strided_slice %473 {offsets = [0, 0], sizes = [1, 32], strides = [1, 1]} : vector<8x32xf32> to vector<1x32xf32>
    %475 = vector.extract_strided_slice %473 {offsets = [1, 0], sizes = [1, 32], strides = [1, 1]} : vector<8x32xf32> to vector<1x32xf32>
    %476 = vector.extract_strided_slice %473 {offsets = [2, 0], sizes = [1, 32], strides = [1, 1]} : vector<8x32xf32> to vector<1x32xf32>
    %cst_155 = arith.constant dense<0.000000e+00> : vector<8x32xf32>
    %477 = tpu.matmul %469, %471, %cst_155 {dimension_numbers = #tpu.dot_dimension_numbers<[1], [0], [0], [1], [0, 0, 1, 1], [], []>} : vector<8x32xbf16>, vector<32x32xbf16>, vector<8x32xf32> -> vector<8x32xf32>
    %478 = vector.broadcast %474 : vector<1x32xf32> to vector<8x32xf32>
    %479 = arith.addf %477, %478 : vector<8x32xf32>
    %480 = tpu.iota {dimensions = array<i32: 0>} : vector<8x32xi32>
    %481 = vector.broadcast %468 : i32 to vector<8x32xi32>
    %482 = arith.cmpi slt, %480, %481 : vector<8x32xi32>
    %483 = arith.extui %482 : vector<8x32xi1> to vector<8x32xi32>
    %484 = arith.sitofp %483 : vector<8x32xi32> to vector<8x32xf32>
    %c1_i32_156 = arith.constant 1 : i32
    %485 = arith.maxsi %468, %c1_i32_156 : i32
    %486 = arith.sitofp %485 : i32 to f32
    %cst_157 = arith.constant 1.000000e+00 : f32
    %487 = arith.divf %cst_157, %486 : f32
    %488 = arith.mulf %479, %484 : vector<8x32xf32>
    %cst_158 = arith.constant dense<0.000000e+00> : vector<32xf32>
    %489 = vector.multi_reduction <add>, %488, %cst_158 [0] : vector<8x32xf32> to vector<32xf32>
    %490 = vector.shape_cast %489 : vector<32xf32> to vector<1x32xf32>
    %491 = vector.broadcast %487 : f32 to vector<1x32xf32>
    %492 = arith.mulf %490, %491 : vector<1x32xf32>
    %493 = vector.broadcast %492 : vector<1x32xf32> to vector<8x32xf32>
    %494 = arith.subf %479, %493 : vector<8x32xf32>
    %495 = arith.mulf %494, %484 : vector<8x32xf32>
    %496 = arith.mulf %495, %495 : vector<8x32xf32>
    %cst_159 = arith.constant dense<0.000000e+00> : vector<32xf32>
    %497 = vector.multi_reduction <add>, %496, %cst_159 [0] : vector<8x32xf32> to vector<32xf32>
    %498 = vector.shape_cast %497 : vector<32xf32> to vector<1x32xf32>
    %499 = vector.broadcast %487 : f32 to vector<1x32xf32>
    %500 = arith.mulf %498, %499 : vector<1x32xf32>
    %501 = vector.broadcast %492 : vector<1x32xf32> to vector<8x32xf32>
    %502 = arith.subf %479, %501 : vector<8x32xf32>
    %cst_160 = arith.constant 9.99999974E-6 : f32
    %503 = vector.broadcast %cst_160 : f32 to vector<1x32xf32>
    %504 = arith.addf %500, %503 : vector<1x32xf32>
    %505 = math.rsqrt %504 : vector<1x32xf32>
    %506 = vector.broadcast %505 : vector<1x32xf32> to vector<8x32xf32>
    %507 = arith.mulf %502, %506 : vector<8x32xf32>
    %508 = vector.broadcast %475 : vector<1x32xf32> to vector<8x32xf32>
    %509 = arith.mulf %507, %508 : vector<8x32xf32>
    %510 = vector.broadcast %476 : vector<1x32xf32> to vector<8x32xf32>
    %511 = arith.addf %509, %510 : vector<8x32xf32>
    %c1_i32_161 = arith.constant 1 : i32
    %512 = arith.cmpi sgt, %468, %c1_i32_161 : i32
    %513 = arith.extui %512 : i1 to i32
    %514 = arith.sitofp %513 : i32 to f32
    %515 = vector.broadcast %514 : f32 to vector<8x32xf32>
    %516 = arith.mulf %515, %511 : vector<8x32xf32>
    %cst_162 = arith.constant 1.000000e+00 : f32
    %517 = arith.subf %cst_162, %514 : f32
    %518 = vector.broadcast %517 : f32 to vector<8x32xf32>
    %519 = arith.mulf %518, %479 : vector<8x32xf32>
    %520 = arith.addf %516, %519 : vector<8x32xf32>
    %cst_163 = arith.constant 0.000000e+00 : f32
    %521 = vector.broadcast %cst_163 : f32 to vector<8x32xf32>
    %522 = arith.maximumf %520, %521 : vector<8x32xf32>
    %523 = arith.mulf %522, %484 : vector<8x32xf32>
    %c56 = arith.constant 56 : index
    %c0_164 = arith.constant 0 : index
    %524 = vector.load %arg6[%c56, %c0_164] : memref<64x32xf32, #tpu.memory_space<vmem>>, vector<8x32xf32>
    tpu.vector_store %arg6[%c56, %c0_164], %523 {strides = array<i32>} : memref<64x32xf32, #tpu.memory_space<vmem>>, vector<8x32xf32>,
    return
  }
  func.func @transform_0(%arg0: i32, %arg1: memref<8xi32, #tpu.memory_space<smem>>) -> (i32, i32, i32) {
    %c0_i32 = arith.constant 0 : i32
    %c0_i32_0 = arith.constant 0 : i32
    %c0_i32_1 = arith.constant 0 : i32
    return %c0_i32, %arg0, %c0_i32_0 : i32, i32, i32
  }
  func.func @transform_1(%arg0: i32, %arg1: memref<8xi32, #tpu.memory_space<smem>>) -> (i32, i32, i32) {
    %c0_i32 = arith.constant 0 : i32
    %c0_i32_0 = arith.constant 0 : i32
    %c0_i32_1 = arith.constant 0 : i32
    return %c0_i32, %arg0, %c0_i32_0 : i32, i32, i32
  }
  func.func @transform_2(%arg0: i32, %arg1: memref<8xi32, #tpu.memory_space<smem>>) -> (i32, i32, i32) {
    %c0_i32 = arith.constant 0 : i32
    %c0_i32_0 = arith.constant 0 : i32
    %c0_i32_1 = arith.constant 0 : i32
    return %arg0, %c0_i32, %c0_i32_0 : i32, i32, i32
  }
  func.func @transform_3(%arg0: i32, %arg1: memref<8xi32, #tpu.memory_space<smem>>) -> (i32, i32, i32) {
    %c0_i32 = arith.constant 0 : i32
    %c0_i32_0 = arith.constant 0 : i32
    %c0_i32_1 = arith.constant 0 : i32
    return %arg0, %c0_i32, %c0_i32_0 : i32, i32, i32
  }
  func.func @transform_4(%arg0: i32, %arg1: memref<8xi32, #tpu.memory_space<smem>>) -> (i32, i32) {
    %c0_i32 = arith.constant 0 : i32
    %c0_i32_0 = arith.constant 0 : i32
    return %arg0, %c0_i32 : i32, i32
  }
}

</mosaic_0001>

<llo_original>
// kernel: tpu_custom_call.1
$region0: #{tpu_custom_call.1}
  #allocation0 [shape = 'u32[]', space=smem, size = 0x4, offset = 0x4, fixed_abs, tag = 'smem constant byte address 0x4 - core index']
  #allocation1 [shape = 'u32[72,128]{1,0:T(1,128)}', space=vmem, size = 0x9000, scoped, tag = 'internal scratch']
  #allocation2 [shape = 's32[1]{0}', space=sflag, size = 0x4, scoped, tag = 'scoped memory for tpu_custom_call.1']
  #allocation3 [shape = 'u8[512]{0}', space=smem, size = 0x200, scoped, tag = 'prefetched SMEM operand 0']
  %s0 = inlined_call_operand.vmem [shape: s32[8], index: 0, kind: input, shape index: {}]
  %s1 = inlined_call_operand.vmem [shape: f32[10,64,32], index: 1, kind: input, shape index: {}]
  %s2 = inlined_call_operand.vmem [shape: f32[3,64,1], index: 2, kind: input, shape index: {}]
  %s3 = inlined_call_operand.vmem [shape: bf16[8,32,32], index: 3, kind: input, shape index: {}]
  %s4 = inlined_call_operand.vmem [shape: f32[8,8,32], index: 4, kind: input, shape index: {}]
  %s5 = inlined_call_operand.vmem [shape: f32[64,32], index: 5, kind: output, shape index: {}]
  %s6 = sld [smem:[#allocation0]]
  $region26: #{tpu_custom_call.1} parent=0
    _
  %s8 = ssub.s32 1, %s6
  %s9 = scalar_select 0, %s8, %s6
  %s11 = sshll.u32 %s0, 4
  %s12 = int_to_ptr.vmem [resolvable:$true] %s11
  %14 = dma.vmem_to_smem %s12, 16, [#allocation3], [#allocation2]
  %16 = dma.done [#allocation2], 16
  %17 = sfence
  // Predicated region
  $region2: #{tpu_custom_call.1} parent=0 // pred_check
    _
  $region3: #{tpu_custom_call.1} parent=0 // pred_check_branch
    %19 = sbr.rel (0) target = $region5
  $region4: #{tpu_custom_call.1} parent=0 // pred_region
    _
  $region5: #{tpu_custom_call.1} parent=0 // pred_fallthru
    _
  // Predicated region
  $region6: #{tpu_custom_call.1} parent=0 // pred_check
    _
  $region7: #{tpu_custom_call.1} parent=0 // pred_check_branch
    %21 = sbr.rel (0) target = $region9
  $region8: #{tpu_custom_call.1} parent=0 // pred_region
    _
  $region9: #{tpu_custom_call.1} parent=0 // pred_fallthru
    _
  // Predicated region
  $region10: #{tpu_custom_call.1} parent=0 // pred_check
    _
  $region11: #{tpu_custom_call.1} parent=0 // pred_check_branch
    %23 = sbr.rel (0) target = $region13
  $region12: #{tpu_custom_call.1} parent=0 // pred_region
    _
  $region13: #{tpu_custom_call.1} parent=0 // pred_fallthru
    _
  // Predicated region
  $region14: #{tpu_custom_call.1} parent=0 // pred_check
    _
  $region15: #{tpu_custom_call.1} parent=0 // pred_check_branch
    %25 = sbr.rel (0) target = $region17
  $region16: #{tpu_custom_call.1} parent=0 // pred_region
    _
  $region17: #{tpu_custom_call.1} parent=0 // pred_fallthru
    _
  %v27 = vld [vmem:[%s1] sm:$0xff]
  %v28 = vld [vmem:[%s1 + $0x8] sm:$0xff]
  %v29 = vld [vmem:[%s1 + $0x10] sm:$0xff]
  %v30 = vld [vmem:[%s1 + $0x18] sm:$0xff]
  %v31 = vld [vmem:[%s1 + $0x20] sm:$0xff]
  %v32 = vld [vmem:[%s1 + $0x28] sm:$0xff]
  %v33 = vld [vmem:[%s1 + $0x30] sm:$0xff]
  %v34 = vld [vmem:[%s1 + $0x38] sm:$0xff]
  %s35 = scalar_lea.vmem %s1, 64
  %v36 = vld [vmem:[%s35] sm:$0xff]
  %v37 = vld [vmem:[%s35 + $0x8] sm:$0xff]
  %v38 = vld [vmem:[%s35 + $0x10] sm:$0xff]
  %v39 = vld [vmem:[%s35 + $0x18] sm:$0xff]
  %v40 = vld [vmem:[%s35 + $0x20] sm:$0xff]
  %v41 = vld [vmem:[%s35 + $0x28] sm:$0xff]
  %v42 = vld [vmem:[%s35 + $0x30] sm:$0xff]
  %v43 = vld [vmem:[%s35 + $0x38] sm:$0xff]
  %s44 = scalar_lea.vmem %s1, 128
  %v45 = vld [vmem:[%s44] sm:$0xff]
  %v46 = vld [vmem:[%s44 + $0x8] sm:$0xff]
  %v47 = vld [vmem:[%s44 + $0x10] sm:$0xff]
  %v48 = vld [vmem:[%s44 + $0x18] sm:$0xff]
  %v49 = vld [vmem:[%s44 + $0x20] sm:$0xff]
  %v50 = vld [vmem:[%s44 + $0x28] sm:$0xff]
  %v51 = vld [vmem:[%s44 + $0x30] sm:$0xff]
  %v52 = vld [vmem:[%s44 + $0x38] sm:$0xff]
  %v53 = vld [vmem:[%s2] sm:$0xff]
  %v54 = vld [vmem:[%s2 + $0x8] sm:$0xff]
  %v55 = vld [vmem:[%s2 + $0x10] sm:$0xff]
  %v56 = vld [vmem:[%s2 + $0x18] sm:$0xff]
  %v57 = vld [vmem:[%s2 + $0x20] sm:$0xff]
  %v58 = vld [vmem:[%s2 + $0x28] sm:$0xff]
  %v59 = vld [vmem:[%s2 + $0x30] sm:$0xff]
  %v60 = vld [vmem:[%s2 + $0x38] sm:$0xff]
  %62 = vset.pattern.permute.xlu0 0
  %63 = vperm.xlu0 %62, %v53
  %v64 = vpop.permute.xlu0 %63
  %67 = vset.pattern.permute.xlu0 0
  %68 = vperm.xlu0 %67, %v54
  %v69 = vpop.permute.xlu0 %68
  %72 = vset.pattern.permute.xlu0 0
  %73 = vperm.xlu0 %72, %v55
  %v74 = vpop.permute.xlu0 %73
  %77 = vset.pattern.permute.xlu0 0
  %78 = vperm.xlu0 %77, %v56
  %v79 = vpop.permute.xlu0 %78
  %82 = vset.pattern.permute.xlu0 0
  %83 = vperm.xlu0 %82, %v57
  %v84 = vpop.permute.xlu0 %83
  %87 = vset.pattern.permute.xlu0 0
  %88 = vperm.xlu0 %87, %v58
  %v89 = vpop.permute.xlu0 %88
  %92 = vset.pattern.permute.xlu0 0
  %93 = vperm.xlu0 %92, %v59
  %v94 = vpop.permute.xlu0 %93
  %97 = vset.pattern.permute.xlu0 0
  %98 = vperm.xlu0 %97, %v60
  %v99 = vpop.permute.xlu0 %98
  %v101 = vmul.f32 %v45, %v64
  %v102 = vmul.f32 %v46, %v69
  %v103 = vmul.f32 %v47, %v74
  %v104 = vmul.f32 %v48, %v79
  %v105 = vmul.f32 %v49, %v84
  %v106 = vmul.f32 %v50, %v89
  %v107 = vmul.f32 %v51, %v94
  %v108 = vmul.f32 %v52, %v99
  %s109 = scalar_lea.vmem %s1, 192
  %v110 = vld [vmem:[%s109] sm:$0xff]
  %v111 = vld [vmem:[%s109 + $0x8] sm:$0xff]
  %v112 = vld [vmem:[%s109 + $0x10] sm:$0xff]
  %v113 = vld [vmem:[%s109 + $0x18] sm:$0xff]
  %v114 = vld [vmem:[%s109 + $0x20] sm:$0xff]
  %v115 = vld [vmem:[%s109 + $0x28] sm:$0xff]
  %v116 = vld [vmem:[%s109 + $0x30] sm:$0xff]
  %v117 = vld [vmem:[%s109 + $0x38] sm:$0xff]
  %v118 = vadd.f32 %v101, %v110
  %v119 = vadd.f32 %v102, %v111
  %v120 = vadd.f32 %v103, %v112
  %v121 = vadd.f32 %v104, %v113
  %v122 = vadd.f32 %v105, %v114
  %v123 = vadd.f32 %v106, %v115
  %v124 = vadd.f32 %v107, %v116
  %v125 = vadd.f32 %v108, %v117
  %v126 = vand.u32 2147483647, %v118
  %vm127 = vcmp.le.f32.partialorder %v126, 0.7853982
  %vm128 = vcmp.lt.s32.totalorder %v118, 0
  %v129 = vand.u32 %v118, 2139095040
  %v130 = vshrl.u32 %v129, 23
  %v131 = vsub.s32 %v130, 127
  %v132 = vand.u32 2147483647, %v118
  %v133 = vand.u32 %v132, 8388607
  %v134 = vor.u32 %v133, 8388608
  %v135 = vsub.s32 0, %v134
  %v136 = vadd.s32 %v131, 1
  %vm137 = vcmp.gt.s32.totalorder %v136, 0
  %v138 = vsel %vm137, %v136, 0
  %v139 = vshrl.u32 %v138, 5
  %v140 = vand.u32 %v138, 31
  %v141 = vsub.s32 32, %v140
  %v142 = vshrl.u32 683565275, %v141
  %v143 = vshll.u32 683565275, %v140
  %v144 = vshrl.u32 2475754826, %v141
  %v145 = vor.u32 %v143, %v144
  %v146 = vshll.u32 2475754826, %v140
  %v147 = vshrl.u32 2131351028, %v141
  %v148 = vor.u32 %v146, %v147
  %v149 = vshll.u32 2131351028, %v140
  %v150 = vshrl.u32 2102212464, %v141
  %v151 = vor.u32 %v149, %v150
  %v152 = vshll.u32 2102212464, %v140
  %v153 = vshrl.u32 920167782, %v141
  %v154 = vor.u32 %v152, %v153
  %v155 = vshll.u32 920167782, %v140
  %v156 = vshrl.u32 1326507024, %v141
  %v157 = vor.u32 %v155, %v156
  %vm158 = vcmp.lt.s32.totalorder %v139, 1
  %vm159 = vcmp.lt.s32.totalorder %v139, 2
  %vm160 = vcmp.lt.s32.totalorder %v139, 3
  %vm161 = vcmp.lt.s32.totalorder %v139, 4
  %v162 = vsel %vm158, %v142, %v145
  %v163 = vsel %vm161, %v151, 2102212464
  %v164 = vsel %vm160, %v148, %v163
  %v165 = vsel %vm159, %v162, %v164
  %v166 = vsel %vm158, %v145, %v148
  %v167 = vsel %vm161, %v154, 920167782
  %v168 = vsel %vm160, %v151, %v167
  %v169 = vsel %vm159, %v166, %v168
  %v170 = vsel %vm158, %v148, %v151
  %v171 = vsel %vm161, %v157, 1326507024
  %v172 = vsel %vm160, %v154, %v171
  %v173 = vsel %vm159, %v170, %v172
  %v174 = vshll.u32 %v134, 8
  %v175 = vand.u32 %v174, 65535
  %v176 = vshrl.u32 %v174, 16
  %v177 = vand.u32 %v173, 65535
  %v178 = vshrl.u32 %v173, 16
  %v179 = vmul.u32 %v175, %v177
  %v180 = vmul.u32 %v175, %v178
  %v181 = vmul.u32 %v176, %v177
  %v182 = vmul.u32 %v176, %v178
  %v183 = vshll.u32 %v180, 16
  %v184 = vshrl.u32 %v180, 16
  %v185 = vshll.u32 %v181, 16
  %v186 = vshrl.u32 %v181, 16
  %vm187 = vc.u32 %v179, %v183
  %v188 = vsel %vm187, 1, 0
  %v189 = vadd.s32 %v179, %v183
  %v190 = vadd.s32 %v182, %v188
  %vm191 = vc.u32 %v189, %v185
  %v192 = vsel %vm191, 1, 0
  %v193 = vadd.s32 %v189, %v185
  %v194 = vadd.s32 %v190, %v192
  %v195 = vadd.s32 %v194, %v184
  %v196 = vadd.s32 %v195, %v186
  %v197 = vand.u32 %v174, 65535
  %v198 = vshrl.u32 %v174, 16
  %v199 = vand.u32 %v169, 65535
  %v200 = vshrl.u32 %v169, 16
  %v201 = vmul.u32 %v197, %v199
  %v202 = vmul.u32 %v197, %v200
  %v203 = vmul.u32 %v198, %v199
  %v204 = vmul.u32 %v198, %v200
  %v205 = vshll.u32 %v202, 16
  %v206 = vshrl.u32 %v202, 16
  %v207 = vshll.u32 %v203, 16
  %v208 = vshrl.u32 %v203, 16
  %vm209 = vc.u32 %v201, %v205
  %v210 = vsel %vm209, 1, 0
  %v211 = vadd.s32 %v201, %v205
  %v212 = vadd.s32 %v204, %v210
  %vm213 = vc.u32 %v211, %v207
  %v214 = vsel %vm213, 1, 0
  %v215 = vadd.s32 %v211, %v207
  %v216 = vadd.s32 %v212, %v214
  %v217 = vadd.s32 %v216, %v206
  %v218 = vadd.s32 %v217, %v208
  %v219 = vmul.u32 %v174, %v165
  %v220 = vadd.s32 %v196, %v215
  %vm221 = vc.u32 %v196, %v215
  %v222 = vadd.s32 %v218, 1
  %v223 = vsel %vm221, %v222, %v218
  %v224 = vadd.s32 %v219, %v223
  %v225 = vadd.s32 %v224, 536870912
  %v226 = vshrl.u32 %v225, 30
  %v227 = vshll.u32 %v226, 30
  %v228 = vsub.s32 %v224, %v227
  %vm229 = vcmp.lt.s32.totalorder %v228, 0
  %v230 = vsub.s32 0, %v228
  %v231 = vsel %vm229, %v230, %v228
  %v232 = vclz %v231
  %v233 = vsub.s32 %v232, 2
  %vm234 = vcmp.gt.s32.totalorder 0, %v233
  %v235 = vsel %vm234, 0, %v233
  %v236 = vsub.s32 32, %v235
  %v237 = vshll.u32 %v228, %v235
  %v238 = vshrl.u32 %v220, %v236
  %v239 = vor.u32 %v237, %v238
  %v240 = vsub.s32 4294967266, %v235
  %v241 = vadd.s32 %v240, 127
  %v242 = vshll.u32 %v241, 23
  %v243 = vor.u32 4788187, %v242
  %v244 = vand.u32 2147483647, %v243
  %v246 = vcvt.s32.f32 %v239
  %v247 = vmul.f32 %v246, %v244
  %v248 = vxor.u32 %v247, 2147483648
  %v249 = vsel %vm128, %v248, %v247
  %v250 = vsub.s32 4, %v226
  %v251 = vsel %vm128, %v250, %v226
  %v252 = vsel %vm127, %v118, %v249
  %v253 = vsel %vm127, 0, %v251
  %v254 = vmul.f32 %v252, %v252
  %v255 = vmul.f32 %v254, -0.001358992
  %v256 = vadd.f32 %v255, 0.041655596
  %v257 = vmul.f32 %v254, %v256
  %v258 = vadd.f32 %v257, -0.4999988
  %v259 = vmul.f32 %v254, %v258
  %v260 = vadd.f32 1.0, %v259
  %v261 = vmul.f32 %v252, %v252
  %v262 = vmul.f32 %v261, -0.00019511016
  %v263 = vadd.f32 %v262, 0.008332121
  %v264 = vmul.f32 %v261, %v263
  %v265 = vadd.f32 %v264, -0.16666654
  %v266 = vmul.f32 %v261, %v265
  %v267 = vadd.f32 %v266, 1.0
  %v268 = vmul.f32 %v267, %v252
  %vm269 = vweird.f32 %v118
  %v270 = vadd.s32 %v253, 3
  %v271 = vand.u32 %v270, 3
  %vm272 = vcmp.lt.s32.totalorder %v271, 2
  %vm273 = vcmp.eq.s32.totalorder %v271, 0
  %v274 = vxor.u32 %v268, 2147483648
  %v275 = vsel %vm273, %v260, %v274
  %vm276 = vcmp.eq.s32.totalorder %v271, 2
  %v277 = vxor.u32 %v260, 2147483648
  %v278 = vsel %vm276, %v277, %v268
  %v279 = vsel %vm272, %v275, %v278
  %v280 = vsel %vm269, nan, %v279
  %v281 = vand.u32 2147483647, %v119
  %vm282 = vcmp.le.f32.partialorder %v281, 0.7853982
  %vm283 = vcmp.lt.s32.totalorder %v119, 0
  %v284 = vand.u32 %v119, 2139095040
  %v285 = vshrl.u32 %v284, 23
  %v286 = vsub.s32 %v285, 127
  %v287 = vand.u32 2147483647, %v119
  %v288 = vand.u32 %v287, 8388607
  %v289 = vor.u32 %v288, 8388608
  %v290 = vsub.s32 0, %v289
  %v291 = vadd.s32 %v286, 1
  %vm292 = vcmp.gt.s32.totalorder %v291, 0
  %v293 = vsel %vm292, %v291, 0
  %v294 = vshrl.u32 %v293, 5
  %v295 = vand.u32 %v293, 31
  %v296 = vsub.s32 32, %v295
  %v297 = vshrl.u32 683565275, %v296
  %v298 = vshll.u32 683565275, %v295
  %v299 = vshrl.u32 2475754826, %v296
  %v300 = vor.u32 %v298, %v299
  %v301 = vshll.u32 2475754826, %v295
  %v302 = vshrl.u32 2131351028, %v296
  %v303 = vor.u32 %v301, %v302
  %v304 = vshll.u32 2131351028, %v295
  %v305 = vshrl.u32 2102212464, %v296
  %v306 = vor.u32 %v304, %v305
  %v307 = vshll.u32 2102212464, %v295
  %v308 = vshrl.u32 920167782, %v296
  %v309 = vor.u32 %v307, %v308
  %v310 = vshll.u32 920167782, %v295
  %v311 = vshrl.u32 1326507024, %v296
  %v312 = vor.u32 %v310, %v311
  %vm313 = vcmp.lt.s32.totalorder %v294, 1
  %vm314 = vcmp.lt.s32.totalorder %v294, 2
  %vm315 = vcmp.lt.s32.totalorder %v294, 3
  %vm316 = vcmp.lt.s32.totalorder %v294, 4
  %v317 = vsel %vm313, %v297, %v300
  %v318 = vsel %vm316, %v306, 2102212464
  %v319 = vsel %vm315, %v303, %v318
  %v320 = vsel %vm314, %v317, %v319
  %v321 = vsel %vm313, %v300, %v303
  %v322 = vsel %vm316, %v309, 920167782
  %v323 = vsel %vm315, %v306, %v322
  %v324 = vsel %vm314, %v321, %v323
  %v325 = vsel %vm313, %v303, %v306
  %v326 = vsel %vm316, %v312, 1326507024
  %v327 = vsel %vm315, %v309, %v326
  %v328 = vsel %vm314, %v325, %v327
  %v329 = vshll.u32 %v289, 8
  %v330 = vand.u32 %v329, 65535
  %v331 = vshrl.u32 %v329, 16
  %v332 = vand.u32 %v328, 65535
  %v333 = vshrl.u32 %v328, 16
  %v334 = vmul.u32 %v330, %v332
  %v335 = vmul.u32 %v330, %v333
  %v336 = vmul.u32 %v331, %v332
  %v337 = vmul.u32 %v331, %v333
  %v338 = vshll.u32 %v335, 16
  %v339 = vshrl.u32 %v335, 16
  %v340 = vshll.u32 %v336, 16
  %v341 = vshrl.u32 %v336, 16
  %vm342 = vc.u32 %v334, %v338
  %v343 = vsel %vm342, 1, 0
  %v344 = vadd.s32 %v334, %v338
  %v345 = vadd.s32 %v337, %v343
  %vm346 = vc.u32 %v344, %v340
  %v347 = vsel %vm346, 1, 0
  %v348 = vadd.s32 %v344, %v340
  %v349 = vadd.s32 %v345, %v347
  %v350 = vadd.s32 %v349, %v339
  %v351 = vadd.s32 %v350, %v341
  %v352 = vand.u32 %v329, 65535
  %v353 = vshrl.u32 %v329, 16
  %v354 = vand.u32 %v324, 65535
  %v355 = vshrl.u32 %v324, 16
  %v356 = vmul.u32 %v352, %v354
  %v357 = vmul.u32 %v352, %v355
  %v358 = vmul.u32 %v353, %v354
  %v359 = vmul.u32 %v353, %v355
  %v360 = vshll.u32 %v357, 16
  %v361 = vshrl.u32 %v357, 16
  %v362 = vshll.u32 %v358, 16
  %v363 = vshrl.u32 %v358, 16
  %vm364 = vc.u32 %v356, %v360
  %v365 = vsel %vm364, 1, 0
  %v366 = vadd.s32 %v356, %v360
  %v367 = vadd.s32 %v359, %v365
  %vm368 = vc.u32 %v366, %v362
  %v369 = vsel %vm368, 1, 0
  %v370 = vadd.s32 %v366, %v362
  %v371 = vadd.s32 %v367, %v369
  %v372 = vadd.s32 %v371, %v361
  %v373 = vadd.s32 %v372, %v363
  %v374 = vmul.u32 %v329, %v320
  %v375 = vadd.s32 %v351, %v370
  %vm376 = vc.u32 %v351, %v370
  %v377 = vadd.s32 %v373, 1
  %v378 = vsel %vm376, %v377, %v373
  %v379 = vadd.s32 %v374, %v378
  %v380 = vadd.s32 %v379, 536870912
  %v381 = vshrl.u32 %v380, 30
  %v382 = vshll.u32 %v381, 30
  %v383 = vsub.s32 %v379, %v382
  %vm384 = vcmp.lt.s32.totalorder %v383, 0
  %v385 = vsub.s32 0, %v383
  %v386 = vsel %vm384, %v385, %v383
  %v387 = vclz %v386
  %v388 = vsub.s32 %v387, 2
  %vm389 = vcmp.gt.s32.totalorder 0, %v388
  %v390 = vsel %vm389, 0, %v388
  %v391 = vsub.s32 32, %v390
  %v392 = vshll.u32 %v383, %v390
  %v393 = vshrl.u32 %v375, %v391
  %v394 = vor.u32 %v392, %v393
  %v395 = vsub.s32 4294967266, %v390
  %v396 = vadd.s32 %v395, 127
  %v397 = vshll.u32 %v396, 23
  %v398 = vor.u32 4788187, %v397
  %v399 = vand.u32 2147483647, %v398
  %v401 = vcvt.s32.f32 %v394
  %v402 = vmul.f32 %v401, %v399
  %v403 = vxor.u32 %v402, 2147483648
  %v404 = vsel %vm283, %v403, %v402
  %v405 = vsub.s32 4, %v381
  %v406 = vsel %vm283, %v405, %v381
  %v407 = vsel %vm282, %v119, %v404
  %v408 = vsel %vm282, 0, %v406
  %v409 = vmul.f32 %v407, %v407
  %v410 = vmul.f32 %v409, -0.001358992
  %v411 = vadd.f32 %v410, 0.041655596
  %v412 = vmul.f32 %v409, %v411
  %v413 = vadd.f32 %v412, -0.4999988
  %v414 = vmul.f32 %v409, %v413
  %v415 = vadd.f32 1.0, %v414
  %v416 = vmul.f32 %v407, %v407
  %v417 = vmul.f32 %v416, -0.00019511016
  %v418 = vadd.f32 %v417, 0.008332121
  %v419 = vmul.f32 %v416, %v418
  %v420 = vadd.f32 %v419, -0.16666654
  %v421 = vmul.f32 %v416, %v420
  %v422 = vadd.f32 %v421, 1.0
  %v423 = vmul.f32 %v422, %v407
  %vm424 = vweird.f32 %v119
  %v425 = vadd.s32 %v408, 3
  %v426 = vand.u32 %v425, 3
  %vm427 = vcmp.lt.s32.totalorder %v426, 2
  %vm428 = vcmp.eq.s32.totalorder %v426, 0
  %v429 = vxor.u32 %v423, 2147483648
  %v430 = vsel %vm428, %v415, %v429
  %vm431 = vcmp.eq.s32.totalorder %v426, 2
  %v432 = vxor.u32 %v415, 2147483648
  %v433 = vsel %vm431, %v432, %v423
  %v434 = vsel %vm427, %v430, %v433
  %v435 = vsel %vm424, nan, %v434
  %v436 = vand.u32 2147483647, %v120
  %vm437 = vcmp.le.f32.partialorder %v436, 0.7853982
  %vm438 = vcmp.lt.s32.totalorder %v120, 0
  %v439 = vand.u32 %v120, 2139095040
  %v440 = vshrl.u32 %v439, 23
  %v441 = vsub.s32 %v440, 127
  %v442 = vand.u32 2147483647, %v120
  %v443 = vand.u32 %v442, 8388607
  %v444 = vor.u32 %v443, 8388608
  %v445 = vsub.s32 0, %v444
  %v446 = vadd.s32 %v441, 1
  %vm447 = vcmp.gt.s32.totalorder %v446, 0
  %v448 = vsel %vm447, %v446, 0
  %v449 = vshrl.u32 %v448, 5
  %v450 = vand.u32 %v448, 31
  %v451 = vsub.s32 32, %v450
  %v452 = vshrl.u32 683565275, %v451
  %v453 = vshll.u32 683565275, %v450
  %v454 = vshrl.u32 2475754826, %v451
  %v455 = vor.u32 %v453, %v454
  %v456 = vshll.u32 2475754826, %v450
  %v457 = vshrl.u32 2131351028, %v451
  %v458 = vor.u32 %v456, %v457
  %v459 = vshll.u32 2131351028, %v450
  %v460 = vshrl.u32 2102212464, %v451
  %v461 = vor.u32 %v459, %v460
  %v462 = vshll.u32 2102212464, %v450
  %v463 = vshrl.u32 920167782, %v451
  %v464 = vor.u32 %v462, %v463
  %v465 = vshll.u32 920167782, %v450
  %v466 = vshrl.u32 1326507024, %v451
  %v467 = vor.u32 %v465, %v466
  %vm468 = vcmp.lt.s32.totalorder %v449, 1
  %vm469 = vcmp.lt.s32.totalorder %v449, 2
  %vm470 = vcmp.lt.s32.totalorder %v449, 3
  %vm471 = vcmp.lt.s32.totalorder %v449, 4
  %v472 = vsel %vm468, %v452, %v455
  %v473 = vsel %vm471, %v461, 2102212464
  %v474 = vsel %vm470, %v458, %v473
  %v475 = vsel %vm469, %v472, %v474
  %v476 = vsel %vm468, %v455, %v458
  %v477 = vsel %vm471, %v464, 920167782
  %v478 = vsel %vm470, %v461, %v477
  %v479 = vsel %vm469, %v476, %v478
  %v480 = vsel %vm468, %v458, %v461
  %v481 = vsel %vm471, %v467, 1326507024
  %v482 = vsel %vm470, %v464, %v481
  %v483 = vsel %vm469, %v480, %v482
  %v484 = vshll.u32 %v444, 8
  %v485 = vand.u32 %v484, 65535
  %v486 = vshrl.u32 %v484, 16
  %v487 = vand.u32 %v483, 65535
  %v488 = vshrl.u32 %v483, 16
  %v489 = vmul.u32 %v485, %v487
  %v490 = vmul.u32 %v485, %v488
  %v491 = vmul.u32 %v486, %v487
  %v492 = vmul.u32 %v486, %v488
  %v493 = vshll.u32 %v490, 16
  %v494 = vshrl.u32 %v490, 16
  %v495 = vshll.u32 %v491, 16
  %v496 = vshrl.u32 %v491, 16
  %vm497 = vc.u32 %v489, %v493
  %v498 = vsel %vm497, 1, 0
  %v499 = vadd.s32 %v489, %v493
  %v500 = vadd.s32 %v492, %v498
  %vm501 = vc.u32 %v499, %v495
  %v502 = vsel %vm501, 1, 0
  %v503 = vadd.s32 %v499, %v495
  %v504 = vadd.s32 %v500, %v502
  %v505 = vadd.s32 %v504, %v494
  %v506 = vadd.s32 %v505, %v496
  %v507 = vand.u32 %v484, 65535
  %v508 = vshrl.u32 %v484, 16
  %v509 = vand.u32 %v479, 65535
  %v510 = vshrl.u32 %v479, 16
  %v511 = vmul.u32 %v507, %v509
  %v512 = vmul.u32 %v507, %v510
  %v513 = vmul.u32 %v508, %v509
  %v514 = vmul.u32 %v508, %v510
  %v515 = vshll.u32 %v512, 16
  %v516 = vshrl.u32 %v512, 16
  %v517 = vshll.u32 %v513, 16
  %v518 = vshrl.u32 %v513, 16
  %vm519 = vc.u32 %v511, %v515
  %v520 = vsel %vm519, 1, 0
  %v521 = vadd.s32 %v511, %v515
  %v522 = vadd.s32 %v514, %v520
  %vm523 = vc.u32 %v521, %v517
  %v524 = vsel %vm523, 1, 0
  %v525 = vadd.s32 %v521, %v517
  %v526 = vadd.s32 %v522, %v524
  %v527 = vadd.s32 %v526, %v516
  %v528 = vadd.s32 %v527, %v518
  %v529 = vmul.u32 %v484, %v475
  %v530 = vadd.s32 %v506, %v525
  %vm531 = vc.u32 %v506, %v525
  %v532 = vadd.s32 %v528, 1
  %v533 = vsel %vm531, %v532, %v528
  %v534 = vadd.s32 %v529, %v533
  %v535 = vadd.s32 %v534, 536870912
  %v536 = vshrl.u32 %v535, 30
  %v537 = vshll.u32 %v536, 30
  %v538 = vsub.s32 %v534, %v537
  %vm539 = vcmp.lt.s32.totalorder %v538, 0
  %v540 = vsub.s32 0, %v538
  %v541 = vsel %vm539, %v540, %v538
  %v542 = vclz %v541
  %v543 = vsub.s32 %v542, 2
  %vm544 = vcmp.gt.s32.totalorder 0, %v543
  %v545 = vsel %vm544, 0, %v543
  %v546 = vsub.s32 32, %v545
  %v547 = vshll.u32 %v538, %v545
  %v548 = vshrl.u32 %v530, %v546
  %v549 = vor.u32 %v547, %v548
  %v550 = vsub.s32 4294967266, %v545
  %v551 = vadd.s32 %v550, 127
  %v552 = vshll.u32 %v551, 23
  %v553 = vor.u32 4788187, %v552
  %v554 = vand.u32 2147483647, %v553
  %v556 = vcvt.s32.f32 %v549
  %v557 = vmul.f32 %v556, %v554
  %v558 = vxor.u32 %v557, 2147483648
  %v559 = vsel %vm438, %v558, %v557
  %v560 = vsub.s32 4, %v536
  %v561 = vsel %vm438, %v560, %v536
  %v562 = vsel %vm437, %v120, %v559
  %v563 = vsel %vm437, 0, %v561
  %v564 = vmul.f32 %v562, %v562
  %v565 = vmul.f32 %v564, -0.001358992
  %v566 = vadd.f32 %v565, 0.041655596
  %v567 = vmul.f32 %v564, %v566
  %v568 = vadd.f32 %v567, -0.4999988
  %v569 = vmul.f32 %v564, %v568
  %v570 = vadd.f32 1.0, %v569
  %v571 = vmul.f32 %v562, %v562
  %v572 = vmul.f32 %v571, -0.00019511016
  %v573 = vadd.f32 %v572, 0.008332121
  %v574 = vmul.f32 %v571, %v573
  %v575 = vadd.f32 %v574, -0.16666654
  %v576 = vmul.f32 %v571, %v575
  %v577 = vadd.f32 %v576, 1.0
  %v578 = vmul.f32 %v577, %v562
  %vm579 = vweird.f32 %v120
  %v580 = vadd.s32 %v563, 3
  %v581 = vand.u32 %v580, 3
  %vm582 = vcmp.lt.s32.totalorder %v581, 2
  %vm583 = vcmp.eq.s32.totalorder %v581, 0
  %v584 = vxor.u32 %v578, 2147483648
  %v585 = vsel %vm583, %v570, %v584
  %vm586 = vcmp.eq.s32.totalorder %v581, 2
  %v587 = vxor.u32 %v570, 2147483648
  %v588 = vsel %vm586, %v587, %v578
  %v589 = vsel %vm582, %v585, %v588
  %v590 = vsel %vm579, nan, %v589
  %v591 = vand.u32 2147483647, %v121
  %vm592 = vcmp.le.f32.partialorder %v591, 0.7853982
  %vm593 = vcmp.lt.s32.totalorder %v121, 0
  %v594 = vand.u32 %v121, 2139095040
  %v595 = vshrl.u32 %v594, 23
  %v596 = vsub.s32 %v595, 127
  %v597 = vand.u32 2147483647, %v121
  %v598 = vand.u32 %v597, 8388607
  %v599 = vor.u32 %v598, 8388608
  %v600 = vsub.s32 0, %v599
  %v601 = vadd.s32 %v596, 1
  %vm602 = vcmp.gt.s32.totalorder %v601, 0
  %v603 = vsel %vm602, %v601, 0
  %v604 = vshrl.u32 %v603, 5
  %v605 = vand.u32 %v603, 31
  %v606 = vsub.s32 32, %v605
  %v607 = vshrl.u32 683565275, %v606
  %v608 = vshll.u32 683565275, %v605
  %v609 = vshrl.u32 2475754826, %v606
  %v610 = vor.u32 %v608, %v609
  %v611 = vshll.u32 2475754826, %v605
  %v612 = vshrl.u32 2131351028, %v606
  %v613 = vor.u32 %v611, %v612
  %v614 = vshll.u32 2131351028, %v605
  %v615 = vshrl.u32 2102212464, %v606
  %v616 = vor.u32 %v614, %v615
  %v617 = vshll.u32 2102212464, %v605
  %v618 = vshrl.u32 920167782, %v606
  %v619 = vor.u32 %v617, %v618
  %v620 = vshll.u32 920167782, %v605
  %v621 = vshrl.u32 1326507024, %v606
  %v622 = vor.u32 %v620, %v621
  %vm623 = vcmp.lt.s32.totalorder %v604, 1
  %vm624 = vcmp.lt.s32.totalorder %v604, 2
  %vm625 = vcmp.lt.s32.totalorder %v604, 3
  %vm626 = vcmp.lt.s32.totalorder %v604, 4
  %v627 = vsel %vm623, %v607, %v610
  %v628 = vsel %vm626, %v616, 2102212464
  %v629 = vsel %vm625, %v613, %v628
  %v630 = vsel %vm624, %v627, %v629
  %v631 = vsel %vm623, %v610, %v613
  %v632 = vsel %vm626, %v619, 920167782
  %v633 = vsel %vm625, %v616, %v632
  %v634 = vsel %vm624, %v631, %v633
  %v635 = vsel %vm623, %v613, %v616
  %v636 = vsel %vm626, %v622, 1326507024
  %v637 = vsel %vm625, %v619, %v636
  %v638 = vsel %vm624, %v635, %v637
  %v639 = vshll.u32 %v599, 8
  %v640 = vand.u32 %v639, 65535
  %v641 = vshrl.u32 %v639, 16
  %v642 = vand.u32 %v638, 65535
  %v643 = vshrl.u32 %v638, 16
  %v644 = vmul.u32 %v640, %v642
  %v645 = vmul.u32 %v640, %v643
  %v646 = vmul.u32 %v641, %v642
  %v647 = vmul.u32 %v641, %v643
  %v648 = vshll.u32 %v645, 16
  %v649 = vshrl.u32 %v645, 16
  %v650 = vshll.u32 %v646, 16
  %v651 = vshrl.u32 %v646, 16
  %vm652 = vc.u32 %v644, %v648
  %v653 = vsel %vm652, 1, 0
  %v654 = vadd.s32 %v644, %v648
  %v655 = vadd.s32 %v647, %v653
  %vm656 = vc.u32 %v654, %v650
  %v657 = vsel %vm656, 1, 0
  %v658 = vadd.s32 %v654, %v650
  %v659 = vadd.s32 %v655, %v657
  %v660 = vadd.s32 %v659, %v649
  %v661 = vadd.s32 %v660, %v651
  %v662 = vand.u32 %v639, 65535
  %v663 = vshrl.u32 %v639, 16
  %v664 = vand.u32 %v634, 65535
  %v665 = vshrl.u32 %v634, 16
  %v666 = vmul.u32 %v662, %v664
  %v667 = vmul.u32 %v662, %v665
  %v668 = vmul.u32 %v663, %v664
  %v669 = vmul.u32 %v663, %v665
  %v670 = vshll.u32 %v667, 16
  %v671 = vshrl.u32 %v667, 16
  %v672 = vshll.u32 %v668, 16
  %v673 = vshrl.u32 %v668, 16
  %vm674 = vc.u32 %v666, %v670
  %v675 = vsel %vm674, 1, 0
  %v676 = vadd.s32 %v666, %v670
  %v677 = vadd.s32 %v669, %v675
  %vm678 = vc.u32 %v676, %v672
  %v679 = vsel %vm678, 1, 0
  %v680 = vadd.s32 %v676, %v672
  %v681 = vadd.s32 %v677, %v679
  %v682 = vadd.s32 %v681, %v671
  %v683 = vadd.s32 %v682, %v673
  %v684 = vmul.u32 %v639, %v630
  %v685 = vadd.s32 %v661, %v680
  %vm686 = vc.u32 %v661, %v680
  %v687 = vadd.s32 %v683, 1
  %v688 = vsel %vm686, %v687, %v683
  %v689 = vadd.s32 %v684, %v688
  %v690 = vadd.s32 %v689, 536870912
  %v691 = vshrl.u32 %v690, 30
  %v692 = vshll.u32 %v691, 30
  %v693 = vsub.s32 %v689, %v692
  %vm694 = vcmp.lt.s32.totalorder %v693, 0
  %v695 = vsub.s32 0, %v693
  %v696 = vsel %vm694, %v695, %v693
  %v697 = vclz %v696
  %v698 = vsub.s32 %v697, 2
  %vm699 = vcmp.gt.s32.totalorder 0, %v698
  %v700 = vsel %vm699, 0, %v698
  %v701 = vsub.s32 32, %v700
  %v702 = vshll.u32 %v693, %v700
  %v703 = vshrl.u32 %v685, %v701
  %v704 = vor.u32 %v702, %v703
  %v705 = vsub.s32 4294967266, %v700
  %v706 = vadd.s32 %v705, 127
  %v707 = vshll.u32 %v706, 23
  %v708 = vor.u32 4788187, %v707
  %v709 = vand.u32 2147483647, %v708
  %v711 = vcvt.s32.f32 %v704
  %v712 = vmul.f32 %v711, %v709
  %v713 = vxor.u32 %v712, 2147483648
  %v714 = vsel %vm593, %v713, %v712
  %v715 = vsub.s32 4, %v691
  %v716 = vsel %vm593, %v715, %v691
  %v717 = vsel %vm592, %v121, %v714
  %v718 = vsel %vm592, 0, %v716
  %v719 = vmul.f32 %v717, %v717
  %v720 = vmul.f32 %v719, -0.001358992
  %v721 = vadd.f32 %v720, 0.041655596
  %v722 = vmul.f32 %v719, %v721
  %v723 = vadd.f32 %v722, -0.4999988
  %v724 = vmul.f32 %v719, %v723
  %v725 = vadd.f32 1.0, %v724
  %v726 = vmul.f32 %v717, %v717
  %v727 = vmul.f32 %v726, -0.00019511016
  %v728 = vadd.f32 %v727, 0.008332121
  %v729 = vmul.f32 %v726, %v728
  %v730 = vadd.f32 %v729, -0.16666654
  %v731 = vmul.f32 %v726, %v730
  %v732 = vadd.f32 %v731, 1.0
  %v733 = vmul.f32 %v732, %v717
  %vm734 = vweird.f32 %v121
  %v735 = vadd.s32 %v718, 3
  %v736 = vand.u32 %v735, 3
  %vm737 = vcmp.lt.s32.totalorder %v736, 2
  %vm738 = vcmp.eq.s32.totalorder %v736, 0
  %v739 = vxor.u32 %v733, 2147483648
  %v740 = vsel %vm738, %v725, %v739
  %vm741 = vcmp.eq.s32.totalorder %v736, 2
  %v742 = vxor.u32 %v725, 2147483648
  %v743 = vsel %vm741, %v742, %v733
  %v744 = vsel %vm737, %v740, %v743
  %v745 = vsel %vm734, nan, %v744
  %v746 = vand.u32 2147483647, %v122
  %vm747 = vcmp.le.f32.partialorder %v746, 0.7853982
  %vm748 = vcmp.lt.s32.totalorder %v122, 0
  %v749 = vand.u32 %v122, 2139095040
  %v750 = vshrl.u32 %v749, 23
  %v751 = vsub.s32 %v750, 127
  %v752 = vand.u32 2147483647, %v122
  %v753 = vand.u32 %v752, 8388607
  %v754 = vor.u32 %v753, 8388608
  %v755 = vsub.s32 0, %v754
  %v756 = vadd.s32 %v751, 1
  %vm757 = vcmp.gt.s32.totalorder %v756, 0
  %v758 = vsel %vm757, %v756, 0
  %v759 = vshrl.u32 %v758, 5
  %v760 = vand.u32 %v758, 31
  %v761 = vsub.s32 32, %v760
  %v762 = vshrl.u32 683565275, %v761
  %v763 = vshll.u32 683565275, %v760
  %v764 = vshrl.u32 2475754826, %v761
  %v765 = vor.u32 %v763, %v764
  %v766 = vshll.u32 2475754826, %v760
  %v767 = vshrl.u32 2131351028, %v761
  %v768 = vor.u32 %v766, %v767
  %v769 = vshll.u32 2131351028, %v760
  %v770 = vshrl.u32 2102212464, %v761
  %v771 = vor.u32 %v769, %v770
  %v772 = vshll.u32 2102212464, %v760
  %v773 = vshrl.u32 920167782, %v761
  %v774 = vor.u32 %v772, %v773
  %v775 = vshll.u32 920167782, %v760
  %v776 = vshrl.u32 1326507024, %v761
  %v777 = vor.u32 %v775, %v776
  %vm778 = vcmp.lt.s32.totalorder %v759, 1
  %vm779 = vcmp.lt.s32.totalorder %v759, 2
  %vm780 = vcmp.lt.s32.totalorder %v759, 3
  %vm781 = vcmp.lt.s32.totalorder %v759, 4
  %v782 = vsel %vm778, %v762, %v765
  %v783 = vsel %vm781, %v771, 2102212464
  %v784 = vsel %vm780, %v768, %v783
  %v785 = vsel %vm779, %v782, %v784
  %v786 = vsel %vm778, %v765, %v768
  %v787 = vsel %vm781, %v774, 920167782
  %v788 = vsel %vm780, %v771, %v787
  %v789 = vsel %vm779, %v786, %v788
  %v790 = vsel %vm778, %v768, %v771
  %v791 = vsel %vm781, %v777, 1326507024
  %v792 = vsel %vm780, %v774, %v791
  %v793 = vsel %vm779, %v790, %v792
  %v794 = vshll.u32 %v754, 8
  %v795 = vand.u32 %v794, 65535
  %v796 = vshrl.u32 %v794, 16
  %v797 = vand.u32 %v793, 65535
  %v798 = vshrl.u32 %v793, 16
  %v799 = vmul.u32 %v795, %v797
  %v800 = vmul.u32 %v795, %v798
  %v801 = vmul.u32 %v796, %v797
  %v802 = vmul.u32 %v796, %v798
  %v803 = vshll.u32 %v800, 16
  %v804 = vshrl.u32 %v800, 16
  %v805 = vshll.u32 %v801, 16
  %v806 = vshrl.u32 %v801, 16
  %vm807 = vc.u32 %v799, %v803
  %v808 = vsel %vm807, 1, 0
  %v809 = vadd.s32 %v799, %v803
  %v810 = vadd.s32 %v802, %v808
  %vm811 = vc.u32 %v809, %v805
  %v812 = vsel %vm811, 1, 0
  %v813 = vadd.s32 %v809, %v805
  %v814 = vadd.s32 %v810, %v812
  %v815 = vadd.s32 %v814, %v804
  %v816 = vadd.s32 %v815, %v806
  %v817 = vand.u32 %v794, 65535
  %v818 = vshrl.u32 %v794, 16
  %v819 = vand.u32 %v789, 65535
  %v820 = vshrl.u32 %v789, 16
  %v821 = vmul.u32 %v817, %v819
  %v822 = vmul.u32 %v817, %v820
  %v823 = vmul.u32 %v818, %v819
  %v824 = vmul.u32 %v818, %v820
  %v825 = vshll.u32 %v822, 16
  %v826 = vshrl.u32 %v822, 16
  %v827 = vshll.u32 %v823, 16
  %v828 = vshrl.u32 %v823, 16
  %vm829 = vc.u32 %v821, %v825
  %v830 = vsel %vm829, 1, 0
  %v831 = vadd.s32 %v821, %v825
  %v832 = vadd.s32 %v824, %v830
  %vm833 = vc.u32 %v831, %v827
  %v834 = vsel %vm833, 1, 0
  %v835 = vadd.s32 %v831, %v827
  %v836 = vadd.s32 %v832, %v834
  %v837 = vadd.s32 %v836, %v826
  %v838 = vadd.s32 %v837, %v828
  %v839 = vmul.u32 %v794, %v785
  %v840 = vadd.s32 %v816, %v835
  %vm841 = vc.u32 %v816, %v835
  %v842 = vadd.s32 %v838, 1
  %v843 = vsel %vm841, %v842, %v838
  %v844 = vadd.s32 %v839, %v843
  %v845 = vadd.s32 %v844, 536870912
  %v846 = vshrl.u32 %v845, 30
  %v847 = vshll.u32 %v846, 30
  %v848 = vsub.s32 %v844, %v847
  %vm849 = vcmp.lt.s32.totalorder %v848, 0
  %v850 = vsub.s32 0, %v848
  %v851 = vsel %vm849, %v850, %v848
  %v852 = vclz %v851
  %v853 = vsub.s32 %v852, 2
  %vm854 = vcmp.gt.s32.totalorder 0, %v853
  %v855 = vsel %vm854, 0, %v853
  %v856 = vsub.s32 32, %v855
  %v857 = vshll.u32 %v848, %v855
  %v858 = vshrl.u32 %v840, %v856
  %v859 = vor.u32 %v857, %v858
  %v860 = vsub.s32 4294967266, %v855
  %v861 = vadd.s32 %v860, 127
  %v862 = vshll.u32 %v861, 23
  %v863 = vor.u32 4788187, %v862
  %v864 = vand.u32 2147483647, %v863
  %v866 = vcvt.s32.f32 %v859
  %v867 = vmul.f32 %v866, %v864
  %v868 = vxor.u32 %v867, 2147483648
  %v869 = vsel %vm748, %v868, %v867
  %v870 = vsub.s32 4, %v846
  %v871 = vsel %vm748, %v870, %v846
  %v872 = vsel %vm747, %v122, %v869
  %v873 = vsel %vm747, 0, %v871
  %v874 = vmul.f32 %v872, %v872
  %v875 = vmul.f32 %v874, -0.001358992
  %v876 = vadd.f32 %v875, 0.041655596
  %v877 = vmul.f32 %v874, %v876
  %v878 = vadd.f32 %v877, -0.4999988
  %v879 = vmul.f32 %v874, %v878
  %v880 = vadd.f32 1.0, %v879
  %v881 = vmul.f32 %v872, %v872
  %v882 = vmul.f32 %v881, -0.00019511016
  %v883 = vadd.f32 %v882, 0.008332121
  %v884 = vmul.f32 %v881, %v883
  %v885 = vadd.f32 %v884, -0.16666654
  %v886 = vmul.f32 %v881, %v885
  %v887 = vadd.f32 %v886, 1.0
  %v888 = vmul.f32 %v887, %v872
  %vm889 = vweird.f32 %v122
  %v890 = vadd.s32 %v873, 3
  %v891 = vand.u32 %v890, 3
  %vm892 = vcmp.lt.s32.totalorder %v891, 2
  %vm893 = vcmp.eq.s32.totalorder %v891, 0
  %v894 = vxor.u32 %v888, 2147483648
  %v895 = vsel %vm893, %v880, %v894
  %vm896 = vcmp.eq.s32.totalorder %v891, 2
  %v897 = vxor.u32 %v880, 2147483648
  %v898 = vsel %vm896, %v897, %v888
  %v899 = vsel %vm892, %v895, %v898
  %v900 = vsel %vm889, nan, %v899
  %v901 = vand.u32 2147483647, %v123
  %vm902 = vcmp.le.f32.partialorder %v901, 0.7853982
  %vm903 = vcmp.lt.s32.totalorder %v123, 0
  %v904 = vand.u32 %v123, 2139095040
  %v905 = vshrl.u32 %v904, 23
  %v906 = vsub.s32 %v905, 127
  %v907 = vand.u32 2147483647, %v123
  %v908 = vand.u32 %v907, 8388607
  %v909 = vor.u32 %v908, 8388608
  %v910 = vsub.s32 0, %v909
  %v911 = vadd.s32 %v906, 1
  %vm912 = vcmp.gt.s32.totalorder %v911, 0
  %v913 = vsel %vm912, %v911, 0
  %v914 = vshrl.u32 %v913, 5
  %v915 = vand.u32 %v913, 31
  %v916 = vsub.s32 32, %v915
  %v917 = vshrl.u32 683565275, %v916
  %v918 = vshll.u32 683565275, %v915
  %v919 = vshrl.u32 2475754826, %v916
  %v920 = vor.u32 %v918, %v919
  %v921 = vshll.u32 2475754826, %v915
  %v922 = vshrl.u32 2131351028, %v916
  %v923 = vor.u32 %v921, %v922
  %v924 = vshll.u32 2131351028, %v915
  %v925 = vshrl.u32 2102212464, %v916
  %v926 = vor.u32 %v924, %v925
  %v927 = vshll.u32 2102212464, %v915
  %v928 = vshrl.u32 920167782, %v916
  %v929 = vor.u32 %v927, %v928
  %v930 = vshll.u32 920167782, %v915
  %v931 = vshrl.u32 1326507024, %v916
  %v932 = vor.u32 %v930, %v931
  %vm933 = vcmp.lt.s32.totalorder %v914, 1
  %vm934 = vcmp.lt.s32.totalorder %v914, 2
  %vm935 = vcmp.lt.s32.totalorder %v914, 3
  %vm936 = vcmp.lt.s32.totalorder %v914, 4
  %v937 = vsel %vm933, %v917, %v920
  %v938 = vsel %vm936, %v926, 2102212464
  %v939 = vsel %vm935, %v923, %v938
  %v940 = vsel %vm934, %v937, %v939
  %v941 = vsel %vm933, %v920, %v923
  %v942 = vsel %vm936, %v929, 920167782
  %v943 = vsel %vm935, %v926, %v942
  %v944 = vsel %vm934, %v941, %v943
  %v945 = vsel %vm933, %v923, %v926
  %v946 = vsel %vm936, %v932, 1326507024
  %v947 = vsel %vm935, %v929, %v946
  %v948 = vsel %vm934, %v945, %v947
  %v949 = vshll.u32 %v909, 8
  %v950 = vand.u32 %v949, 65535
  %v951 = vshrl.u32 %v949, 16
  %v952 = vand.u32 %v948, 65535
  %v953 = vshrl.u32 %v948, 16
  %v954 = vmul.u32 %v950, %v952
  %v955 = vmul.u32 %v950, %v953
  %v956 = vmul.u32 %v951, %v952
  %v957 = vmul.u32 %v951, %v953
  %v958 = vshll.u32 %v955, 16
  %v959 = vshrl.u32 %v955, 16
  %v960 = vshll.u32 %v956, 16
  %v961 = vshrl.u32 %v956, 16
  %vm962 = vc.u32 %v954, %v958
  %v963 = vsel %vm962, 1, 0
  %v964 = vadd.s32 %v954, %v958
  %v965 = vadd.s32 %v957, %v963
  %vm966 = vc.u32 %v964, %v960
  %v967 = vsel %vm966, 1, 0
  %v968 = vadd.s32 %v964, %v960
  %v969 = vadd.s32 %v965, %v967
  %v970 = vadd.s32 %v969, %v959
  %v971 = vadd.s32 %v970, %v961
  %v972 = vand.u32 %v949, 65535
  %v973 = vshrl.u32 %v949, 16
  %v974 = vand.u32 %v944, 65535
  %v975 = vshrl.u32 %v944, 16
  %v976 = vmul.u32 %v972, %v974
  %v977 = vmul.u32 %v972, %v975
  %v978 = vmul.u32 %v973, %v974
  %v979 = vmul.u32 %v973, %v975
  %v980 = vshll.u32 %v977, 16
  %v981 = vshrl.u32 %v977, 16
  %v982 = vshll.u32 %v978, 16
  %v983 = vshrl.u32 %v978, 16
  %vm984 = vc.u32 %v976, %v980
  %v985 = vsel %vm984, 1, 0
  %v986 = vadd.s32 %v976, %v980
  %v987 = vadd.s32 %v979, %v985
  %vm988 = vc.u32 %v986, %v982
  %v989 = vsel %vm988, 1, 0
  %v990 = vadd.s32 %v986, %v982
  %v991 = vadd.s32 %v987, %v989
  %v992 = vadd.s32 %v991, %v981
  %v993 = vadd.s32 %v992, %v983
  %v994 = vmul.u32 %v949, %v940
  %v995 = vadd.s32 %v971, %v990
  %vm996 = vc.u32 %v971, %v990
  %v997 = vadd.s32 %v993, 1
  %v998 = vsel %vm996, %v997, %v993
  %v999 = vadd.s32 %v994, %v998
  %v1000 = vadd.s32 %v999, 536870912
  %v1001 = vshrl.u32 %v1000, 30
  %v1002 = vshll.u32 %v1001, 30
  %v1003 = vsub.s32 %v999, %v1002
  %vm1004 = vcmp.lt.s32.totalorder %v1003, 0
  %v1005 = vsub.s32 0, %v1003
  %v1006 = vsel %vm1004, %v1005, %v1003
  %v1007 = vclz %v1006
  %v1008 = vsub.s32 %v1007, 2
  %vm1009 = vcmp.gt.s32.totalorder 0, %v1008
  %v1010 = vsel %vm1009, 0, %v1008
  %v1011 = vsub.s32 32, %v1010
  %v1012 = vshll.u32 %v1003, %v1010
  %v1013 = vshrl.u32 %v995, %v1011
  %v1014 = vor.u32 %v1012, %v1013
  %v1015 = vsub.s32 4294967266, %v1010
  %v1016 = vadd.s32 %v1015, 127
  %v1017 = vshll.u32 %v1016, 23
  %v1018 = vor.u32 4788187, %v1017
  %v1019 = vand.u32 2147483647, %v1018
  %v1021 = vcvt.s32.f32 %v1014
  %v1022 = vmul.f32 %v1021, %v1019
  %v1023 = vxor.u32 %v1022, 2147483648
  %v1024 = vsel %vm903, %v1023, %v1022
  %v1025 = vsub.s32 4, %v1001
  %v1026 = vsel %vm903, %v1025, %v1001
  %v1027 = vsel %vm902, %v123, %v1024
  %v1028 = vsel %vm902, 0, %v1026
  %v1029 = vmul.f32 %v1027, %v1027
  %v1030 = vmul.f32 %v1029, -0.001358992
  %v1031 = vadd.f32 %v1030, 0.041655596
  %v1032 = vmul.f32 %v1029, %v1031
  %v1033 = vadd.f32 %v1032, -0.4999988
  %v1034 = vmul.f32 %v1029, %v1033
  %v1035 = vadd.f32 1.0, %v1034
  %v1036 = vmul.f32 %v1027, %v1027
  %v1037 = vmul.f32 %v1036, -0.00019511016
  %v1038 = vadd.f32 %v1037, 0.008332121
  %v1039 = vmul.f32 %v1036, %v1038
  %v1040 = vadd.f32 %v1039, -0.16666654
  %v1041 = vmul.f32 %v1036, %v1040
  %v1042 = vadd.f32 %v1041, 1.0
  %v1043 = vmul.f32 %v1042, %v1027
  %vm1044 = vweird.f32 %v123
  %v1045 = vadd.s32 %v1028, 3
  %v1046 = vand.u32 %v1045, 3
  %vm1047 = vcmp.lt.s32.totalorder %v1046, 2
  %vm1048 = vcmp.eq.s32.totalorder %v1046, 0
  %v1049 = vxor.u32 %v1043, 2147483648
  %v1050 = vsel %vm1048, %v1035, %v1049
  %vm1051 = vcmp.eq.s32.totalorder %v1046, 2
  %v1052 = vxor.u32 %v1035, 2147483648
  %v1053 = vsel %vm1051, %v1052, %v1043
  %v1054 = vsel %vm1047, %v1050, %v1053
  %v1055 = vsel %vm1044, nan, %v1054
  %v1056 = vand.u32 2147483647, %v124
  %vm1057 = vcmp.le.f32.partialorder %v1056, 0.7853982
  %vm1058 = vcmp.lt.s32.totalorder %v124, 0
  %v1059 = vand.u32 %v124, 2139095040
  %v1060 = vshrl.u32 %v1059, 23
  %v1061 = vsub.s32 %v1060, 127
  %v1062 = vand.u32 2147483647, %v124
  %v1063 = vand.u32 %v1062, 8388607
  %v1064 = vor.u32 %v1063, 8388608
  %v1065 = vsub.s32 0, %v1064
  %v1066 = vadd.s32 %v1061, 1
  %vm1067 = vcmp.gt.s32.totalorder %v1066, 0
  %v1068 = vsel %vm1067, %v1066, 0
  %v1069 = vshrl.u32 %v1068, 5
  %v1070 = vand.u32 %v1068, 31
  %v1071 = vsub.s32 32, %v1070
  %v1072 = vshrl.u32 683565275, %v1071
  %v1073 = vshll.u32 683565275, %v1070
  %v1074 = vshrl.u32 2475754826, %v1071
  %v1075 = vor.u32 %v1073, %v1074
  %v1076 = vshll.u32 2475754826, %v1070
  %v1077 = vshrl.u32 2131351028, %v1071
  %v1078 = vor.u32 %v1076, %v1077
  %v1079 = vshll.u32 2131351028, %v1070
  %v1080 = vshrl.u32 2102212464, %v1071
  %v1081 = vor.u32 %v1079, %v1080
  %v1082 = vshll.u32 2102212464, %v1070
  %v1083 = vshrl.u32 920167782, %v1071
  %v1084 = vor.u32 %v1082, %v1083
  %v1085 = vshll.u32 920167782, %v1070
  %v1086 = vshrl.u32 1326507024, %v1071
  %v1087 = vor.u32 %v1085, %v1086
  %vm1088 = vcmp.lt.s32.totalorder %v1069, 1
  %vm1089 = vcmp.lt.s32.totalorder %v1069, 2
  %vm1090 = vcmp.lt.s32.totalorder %v1069, 3
  %vm1091 = vcmp.lt.s32.totalorder %v1069, 4
  %v1092 = vsel %vm1088, %v1072, %v1075
  %v1093 = vsel %vm1091, %v1081, 2102212464
  %v1094 = vsel %vm1090, %v1078, %v1093
  %v1095 = vsel %vm1089, %v1092, %v1094
  %v1096 = vsel %vm1088, %v1075, %v1078
  %v1097 = vsel %vm1091, %v1084, 920167782
  %v1098 = vsel %vm1090, %v1081, %v1097
  %v1099 = vsel %vm1089, %v1096, %v1098
  %v1100 = vsel %vm1088, %v1078, %v1081
  %v1101 = vsel %vm1091, %v1087, 1326507024
  %v1102 = vsel %vm1090, %v1084, %v1101
  %v1103 = vsel %vm1089, %v1100, %v1102
  %v1104 = vshll.u32 %v1064, 8
  %v1105 = vand.u32 %v1104, 65535
  %v1106 = vshrl.u32 %v1104, 16
  %v1107 = vand.u32 %v1103, 65535
  %v1108 = vshrl.u32 %v1103, 16
  %v1109 = vmul.u32 %v1105, %v1107
  %v1110 = vmul.u32 %v1105, %v1108
  %v1111 = vmul.u32 %v1106, %v1107
  %v1112 = vmul.u32 %v1106, %v1108
  %v1113 = vshll.u32 %v1110, 16
  %v1114 = vshrl.u32 %v1110, 16
  %v1115 = vshll.u32 %v1111, 16
  %v1116 = vshrl.u32 %v1111, 16
  %vm1117 = vc.u32 %v1109, %v1113
  %v1118 = vsel %vm1117, 1, 0
  %v1119 = vadd.s32 %v1109, %v1113
  %v1120 = vadd.s32 %v1112, %v1118
  %vm1121 = vc.u32 %v1119, %v1115
  %v1122 = vsel %vm1121, 1, 0
  %v1123 = vadd.s32 %v1119, %v1115
  %v1124 = vadd.s32 %v1120, %v1122
  %v1125 = vadd.s32 %v1124, %v1114
  %v1126 = vadd.s32 %v1125, %v1116
  %v1127 = vand.u32 %v1104, 65535
  %v1128 = vshrl.u32 %v1104, 16
  %v1129 = vand.u32 %v1099, 65535
  %v1130 = vshrl.u32 %v1099, 16
  %v1131 = vmul.u32 %v1127, %v1129
  %v1132 = vmul.u32 %v1127, %v1130
  %v1133 = vmul.u32 %v1128, %v1129
  %v1134 = vmul.u32 %v1128, %v1130
  %v1135 = vshll.u32 %v1132, 16
  %v1136 = vshrl.u32 %v1132, 16
  %v1137 = vshll.u32 %v1133, 16
  %v1138 = vshrl.u32 %v1133, 16
  %vm1139 = vc.u32 %v1131, %v1135
  %v1140 = vsel %vm1139, 1, 0
  %v1141 = vadd.s32 %v1131, %v1135
  %v1142 = vadd.s32 %v1134, %v1140
  %vm1143 = vc.u32 %v1141, %v1137
  %v1144 = vsel %vm1143, 1, 0
  %v1145 = vadd.s32 %v1141, %v1137
  %v1146 = vadd.s32 %v1142, %v1144
  %v1147 = vadd.s32 %v1146, %v1136
  %v1148 = vadd.s32 %v1147, %v1138
  %v1149 = vmul.u32 %v1104, %v1095
  %v1150 = vadd.s32 %v1126, %v1145
  %vm1151 = vc.u32 %v1126, %v1145
  %v1152 = vadd.s32 %v1148, 1
  %v1153 = vsel %vm1151, %v1152, %v1148
  %v1154 = vadd.s32 %v1149, %v1153
  %v1155 = vadd.s32 %v1154, 536870912
  %v1156 = vshrl.u32 %v1155, 30
  %v1157 = vshll.u32 %v1156, 30
  %v1158 = vsub.s32 %v1154, %v1157
  %vm1159 = vcmp.lt.s32.totalorder %v1158, 0
  %v1160 = vsub.s32 0, %v1158
  %v1161 = vsel %vm1159, %v1160, %v1158
  %v1162 = vclz %v1161
  %v1163 = vsub.s32 %v1162, 2
  %vm1164 = vcmp.gt.s32.totalorder 0, %v1163
  %v1165 = vsel %vm1164, 0, %v1163
  %v1166 = vsub.s32 32, %v1165
  %v1167 = vshll.u32 %v1158, %v1165
  %v1168 = vshrl.u32 %v1150, %v1166
  %v1169 = vor.u32 %v1167, %v1168
  %v1170 = vsub.s32 4294967266, %v1165
  %v1171 = vadd.s32 %v1170, 127
  %v1172 = vshll.u32 %v1171, 23
  %v1173 = vor.u32 4788187, %v1172
  %v1174 = vand.u32 2147483647, %v1173
  %v1176 = vcvt.s32.f32 %v1169
  %v1177 = vmul.f32 %v1176, %v1174
  %v1178 = vxor.u32 %v1177, 2147483648
  %v1179 = vsel %vm1058, %v1178, %v1177
  %v1180 = vsub.s32 4, %v1156
  %v1181 = vsel %vm1058, %v1180, %v1156
  %v1182 = vsel %vm1057, %v124, %v1179
  %v1183 = vsel %vm1057, 0, %v1181
  %v1184 = vmul.f32 %v1182, %v1182
  %v1185 = vmul.f32 %v1184, -0.001358992
  %v1186 = vadd.f32 %v1185, 0.041655596
  %v1187 = vmul.f32 %v1184, %v1186
  %v1188 = vadd.f32 %v1187, -0.4999988
  %v1189 = vmul.f32 %v1184, %v1188
  %v1190 = vadd.f32 1.0, %v1189
  %v1191 = vmul.f32 %v1182, %v1182
  %v1192 = vmul.f32 %v1191, -0.00019511016
  %v1193 = vadd.f32 %v1192, 0.008332121
  %v1194 = vmul.f32 %v1191, %v1193
  %v1195 = vadd.f32 %v1194, -0.16666654
  %v1196 = vmul.f32 %v1191, %v1195
  %v1197 = vadd.f32 %v1196, 1.0
  %v1198 = vmul.f32 %v1197, %v1182
  %vm1199 = vweird.f32 %v124
  %v1200 = vadd.s32 %v1183, 3
  %v1201 = vand.u32 %v1200, 3
  %vm1202 = vcmp.lt.s32.totalorder %v1201, 2
  %vm1203 = vcmp.eq.s32.totalorder %v1201, 0
  %v1204 = vxor.u32 %v1198, 2147483648
  %v1205 = vsel %vm1203, %v1190, %v1204
  %vm1206 = vcmp.eq.s32.totalorder %v1201, 2
  %v1207 = vxor.u32 %v1190, 2147483648
  %v1208 = vsel %vm1206, %v1207, %v1198
  %v1209 = vsel %vm1202, %v1205, %v1208
  %v1210 = vsel %vm1199, nan, %v1209
  %v1211 = vand.u32 2147483647, %v125
  %vm1212 = vcmp.le.f32.partialorder %v1211, 0.7853982
  %vm1213 = vcmp.lt.s32.totalorder %v125, 0
  %v1214 = vand.u32 %v125, 2139095040
  %v1215 = vshrl.u32 %v1214, 23
  %v1216 = vsub.s32 %v1215, 127
  %v1217 = vand.u32 2147483647, %v125
  %v1218 = vand.u32 %v1217, 8388607
  %v1219 = vor.u32 %v1218, 8388608
  %v1220 = vsub.s32 0, %v1219
  %v1221 = vadd.s32 %v1216, 1
  %vm1222 = vcmp.gt.s32.totalorder %v1221, 0
  %v1223 = vsel %vm1222, %v1221, 0
  %v1224 = vshrl.u32 %v1223, 5
  %v1225 = vand.u32 %v1223, 31
  %v1226 = vsub.s32 32, %v1225
  %v1227 = vshrl.u32 683565275, %v1226
  %v1228 = vshll.u32 683565275, %v1225
  %v1229 = vshrl.u32 2475754826, %v1226
  %v1230 = vor.u32 %v1228, %v1229
  %v1231 = vshll.u32 2475754826, %v1225
  %v1232 = vshrl.u32 2131351028, %v1226
  %v1233 = vor.u32 %v1231, %v1232
  %v1234 = vshll.u32 2131351028, %v1225
  %v1235 = vshrl.u32 2102212464, %v1226
  %v1236 = vor.u32 %v1234, %v1235
  %v1237 = vshll.u32 2102212464, %v1225
  %v1238 = vshrl.u32 920167782, %v1226
  %v1239 = vor.u32 %v1237, %v1238
  %v1240 = vshll.u32 920167782, %v1225
  %v1241 = vshrl.u32 1326507024, %v1226
  %v1242 = vor.u32 %v1240, %v1241
  %vm1243 = vcmp.lt.s32.totalorder %v1224, 1
  %vm1244 = vcmp.lt.s32.totalorder %v1224, 2
  %vm1245 = vcmp.lt.s32.totalorder %v1224, 3
  %vm1246 = vcmp.lt.s32.totalorder %v1224, 4
  %v1247 = vsel %vm1243, %v1227, %v1230
  %v1248 = vsel %vm1246, %v1236, 2102212464
  %v1249 = vsel %vm1245, %v1233, %v1248
  %v1250 = vsel %vm1244, %v1247, %v1249
  %v1251 = vsel %vm1243, %v1230, %v1233
  %v1252 = vsel %vm1246, %v1239, 920167782
  %v1253 = vsel %vm1245, %v1236, %v1252
  %v1254 = vsel %vm1244, %v1251, %v1253
  %v1255 = vsel %vm1243, %v1233, %v1236
  %v1256 = vsel %vm1246, %v1242, 1326507024
  %v1257 = vsel %vm1245, %v1239, %v1256
  %v1258 = vsel %vm1244, %v1255, %v1257
  %v1259 = vshll.u32 %v1219, 8
  %v1260 = vand.u32 %v1259, 65535
  %v1261 = vshrl.u32 %v1259, 16
  %v1262 = vand.u32 %v1258, 65535
  %v1263 = vshrl.u32 %v1258, 16
  %v1264 = vmul.u32 %v1260, %v1262
  %v1265 = vmul.u32 %v1260, %v1263
  %v1266 = vmul.u32 %v1261, %v1262
  %v1267 = vmul.u32 %v1261, %v1263
  %v1268 = vshll.u32 %v1265, 16
  %v1269 = vshrl.u32 %v1265, 16
  %v1270 = vshll.u32 %v1266, 16
  %v1271 = vshrl.u32 %v1266, 16
  %vm1272 = vc.u32 %v1264, %v1268
  %v1273 = vsel %vm1272, 1, 0
  %v1274 = vadd.s32 %v1264, %v1268
  %v1275 = vadd.s32 %v1267, %v1273
  %vm1276 = vc.u32 %v1274, %v1270
  %v1277 = vsel %vm1276, 1, 0
  %v1278 = vadd.s32 %v1274, %v1270
  %v1279 = vadd.s32 %v1275, %v1277
  %v1280 = vadd.s32 %v1279, %v1269
  %v1281 = vadd.s32 %v1280, %v1271
  %v1282 = vand.u32 %v1259, 65535
  %v1283 = vshrl.u32 %v1259, 16
  %v1284 = vand.u32 %v1254, 65535
  %v1285 = vshrl.u32 %v1254, 16
  %v1286 = vmul.u32 %v1282, %v1284
  %v1287 = vmul.u32 %v1282, %v1285
  %v1288 = vmul.u32 %v1283, %v1284
  %v1289 = vmul.u32 %v1283, %v1285
  %v1290 = vshll.u32 %v1287, 16
  %v1291 = vshrl.u32 %v1287, 16
  %v1292 = vshll.u32 %v1288, 16
  %v1293 = vshrl.u32 %v1288, 16
  %vm1294 = vc.u32 %v1286, %v1290
  %v1295 = vsel %vm1294, 1, 0
  %v1296 = vadd.s32 %v1286, %v1290
  %v1297 = vadd.s32 %v1289, %v1295
  %vm1298 = vc.u32 %v1296, %v1292
  %v1299 = vsel %vm1298, 1, 0
  %v1300 = vadd.s32 %v1296, %v1292
  %v1301 = vadd.s32 %v1297, %v1299
  %v1302 = vadd.s32 %v1301, %v1291
  %v1303 = vadd.s32 %v1302, %v1293
  %v1304 = vmul.u32 %v1259, %v1250
  %v1305 = vadd.s32 %v1281, %v1300
  %vm1306 = vc.u32 %v1281, %v1300
  %v1307 = vadd.s32 %v1303, 1
  %v1308 = vsel %vm1306, %v1307, %v1303
  %v1309 = vadd.s32 %v1304, %v1308
  %v1310 = vadd.s32 %v1309, 536870912
  %v1311 = vshrl.u32 %v1310, 30
  %v1312 = vshll.u32 %v1311, 30
  %v1313 = vsub.s32 %v1309, %v1312
  %vm1314 = vcmp.lt.s32.totalorder %v1313, 0
  %v1315 = vsub.s32 0, %v1313
  %v1316 = vsel %vm1314, %v1315, %v1313
  %v1317 = vclz %v1316
  %v1318 = vsub.s32 %v1317, 2
  %vm1319 = vcmp.gt.s32.totalorder 0, %v1318
  %v1320 = vsel %vm1319, 0, %v1318
  %v1321 = vsub.s32 32, %v1320
  %v1322 = vshll.u32 %v1313, %v1320
  %v1323 = vshrl.u32 %v1305, %v1321
  %v1324 = vor.u32 %v1322, %v1323
  %v1325 = vsub.s32 4294967266, %v1320
  %v1326 = vadd.s32 %v1325, 127
  %v1327 = vshll.u32 %v1326, 23
  %v1328 = vor.u32 4788187, %v1327
  %v1329 = vand.u32 2147483647, %v1328
  %v1331 = vcvt.s32.f32 %v1324
  %v1332 = vmul.f32 %v1331, %v1329
  %v1333 = vxor.u32 %v1332, 2147483648
  %v1334 = vsel %vm1213, %v1333, %v1332
  %v1335 = vsub.s32 4, %v1311
  %v1336 = vsel %vm1213, %v1335, %v1311
  %v1337 = vsel %vm1212, %v125, %v1334
  %v1338 = vsel %vm1212, 0, %v1336
  %v1339 = vmul.f32 %v1337, %v1337
  %v1340 = vmul.f32 %v1339, -0.001358992
  %v1341 = vadd.f32 %v1340, 0.041655596
  %v1342 = vmul.f32 %v1339, %v1341
  %v1343 = vadd.f32 %v1342, -0.4999988
  %v1344 = vmul.f32 %v1339, %v1343
  %v1345 = vadd.f32 1.0, %v1344
  %v1346 = vmul.f32 %v1337, %v1337
  %v1347 = vmul.f32 %v1346, -0.00019511016
  %v1348 = vadd.f32 %v1347, 0.008332121
  %v1349 = vmul.f32 %v1346, %v1348
  %v1350 = vadd.f32 %v1349, -0.16666654
  %v1351 = vmul.f32 %v1346, %v1350
  %v1352 = vadd.f32 %v1351, 1.0
  %v1353 = vmul.f32 %v1352, %v1337
  %vm1354 = vweird.f32 %v125
  %v1355 = vadd.s32 %v1338, 3
  %v1356 = vand.u32 %v1355, 3
  %vm1357 = vcmp.lt.s32.totalorder %v1356, 2
  %vm1358 = vcmp.eq.s32.totalorder %v1356, 0
  %v1359 = vxor.u32 %v1353, 2147483648
  %v1360 = vsel %vm1358, %v1345, %v1359
  %vm1361 = vcmp.eq.s32.totalorder %v1356, 2
  %v1362 = vxor.u32 %v1345, 2147483648
  %v1363 = vsel %vm1361, %v1362, %v1353
  %v1364 = vsel %vm1357, %v1360, %v1363
  %v1365 = vsel %vm1354, nan, %v1364
  %v1366 = vmul.f32 %v36, %v280
  %v1367 = vmul.f32 %v37, %v435
  %v1368 = vmul.f32 %v38, %v590
  %v1369 = vmul.f32 %v39, %v745
  %v1370 = vmul.f32 %v40, %v900
  %v1371 = vmul.f32 %v41, %v1055
  %v1372 = vmul.f32 %v42, %v1210
  %v1373 = vmul.f32 %v43, %v1365
  %s1374 = scalar_lea.vmem %s1, 256
  %v1375 = vld [vmem:[%s1374] sm:$0xff]
  %v1376 = vld [vmem:[%s1374 + $0x8] sm:$0xff]
  %v1377 = vld [vmem:[%s1374 + $0x10] sm:$0xff]
  %v1378 = vld [vmem:[%s1374 + $0x18] sm:$0xff]
  %v1379 = vld [vmem:[%s1374 + $0x20] sm:$0xff]
  %v1380 = vld [vmem:[%s1374 + $0x28] sm:$0xff]
  %v1381 = vld [vmem:[%s1374 + $0x30] sm:$0xff]
  %v1382 = vld [vmem:[%s1374 + $0x38] sm:$0xff]
  %s1383 = scalar_lea.vmem %s1, 320
  %v1384 = vld [vmem:[%s1383] sm:$0xff]
  %v1385 = vld [vmem:[%s1383 + $0x8] sm:$0xff]
  %v1386 = vld [vmem:[%s1383 + $0x10] sm:$0xff]
  %v1387 = vld [vmem:[%s1383 + $0x18] sm:$0xff]
  %v1388 = vld [vmem:[%s1383 + $0x20] sm:$0xff]
  %v1389 = vld [vmem:[%s1383 + $0x28] sm:$0xff]
  %v1390 = vld [vmem:[%s1383 + $0x30] sm:$0xff]
  %v1391 = vld [vmem:[%s1383 + $0x38] sm:$0xff]
  %s1392 = scalar_lea.vmem %s2, 64
  %v1393 = vld [vmem:[%s1392] sm:$0xff]
  %v1394 = vld [vmem:[%s1392 + $0x8] sm:$0xff]
  %v1395 = vld [vmem:[%s1392 + $0x10] sm:$0xff]
  %v1396 = vld [vmem:[%s1392 + $0x18] sm:$0xff]
  %v1397 = vld [vmem:[%s1392 + $0x20] sm:$0xff]
  %v1398 = vld [vmem:[%s1392 + $0x28] sm:$0xff]
  %v1399 = vld [vmem:[%s1392 + $0x30] sm:$0xff]
  %v1400 = vld [vmem:[%s1392 + $0x38] sm:$0xff]
  %1402 = vset.pattern.permute.xlu0 0
  %1403 = vperm.xlu0 %1402, %v1393
  %v1404 = vpop.permute.xlu0 %1403
  %1407 = vset.pattern.permute.xlu0 0
  %1408 = vperm.xlu0 %1407, %v1394
  %v1409 = vpop.permute.xlu0 %1408
  %1412 = vset.pattern.permute.xlu0 0
  %1413 = vperm.xlu0 %1412, %v1395
  %v1414 = vpop.permute.xlu0 %1413
  %1417 = vset.pattern.permute.xlu0 0
  %1418 = vperm.xlu0 %1417, %v1396
  %v1419 = vpop.permute.xlu0 %1418
  %1422 = vset.pattern.permute.xlu0 0
  %1423 = vperm.xlu0 %1422, %v1397
  %v1424 = vpop.permute.xlu0 %1423
  %1427 = vset.pattern.permute.xlu0 0
  %1428 = vperm.xlu0 %1427, %v1398
  %v1429 = vpop.permute.xlu0 %1428
  %1432 = vset.pattern.permute.xlu0 0
  %1433 = vperm.xlu0 %1432, %v1399
  %v1434 = vpop.permute.xlu0 %1433
  %1437 = vset.pattern.permute.xlu0 0
  %1438 = vperm.xlu0 %1437, %v1400
  %v1439 = vpop.permute.xlu0 %1438
  %v1441 = vmul.f32 %v1384, %v1404
  %v1442 = vmul.f32 %v1385, %v1409
  %v1443 = vmul.f32 %v1386, %v1414
  %v1444 = vmul.f32 %v1387, %v1419
  %v1445 = vmul.f32 %v1388, %v1424
  %v1446 = vmul.f32 %v1389, %v1429
  %v1447 = vmul.f32 %v1390, %v1434
  %v1448 = vmul.f32 %v1391, %v1439
  %s1449 = scalar_lea.vmem %s1, 384
  %v1450 = vld [vmem:[%s1449] sm:$0xff]
  %v1451 = vld [vmem:[%s1449 + $0x8] sm:$0xff]
  %v1452 = vld [vmem:[%s1449 + $0x10] sm:$0xff]
  %v1453 = vld [vmem:[%s1449 + $0x18] sm:$0xff]
  %v1454 = vld [vmem:[%s1449 + $0x20] sm:$0xff]
  %v1455 = vld [vmem:[%s1449 + $0x28] sm:$0xff]
  %v1456 = vld [vmem:[%s1449 + $0x30] sm:$0xff]
  %v1457 = vld [vmem:[%s1449 + $0x38] sm:$0xff]
  %v1458 = vadd.f32 %v1441, %v1450
  %v1459 = vadd.f32 %v1442, %v1451
  %v1460 = vadd.f32 %v1443, %v1452
  %v1461 = vadd.f32 %v1444, %v1453
  %v1462 = vadd.f32 %v1445, %v1454
  %v1463 = vadd.f32 %v1446, %v1455
  %v1464 = vadd.f32 %v1447, %v1456
  %v1465 = vadd.f32 %v1448, %v1457
  %v1466 = vand.u32 2147483647, %v1458
  %vm1467 = vcmp.le.f32.partialorder %v1466, 0.7853982
  %vm1468 = vcmp.lt.s32.totalorder %v1458, 0
  %v1469 = vand.u32 %v1458, 2139095040
  %v1470 = vshrl.u32 %v1469, 23
  %v1471 = vsub.s32 %v1470, 127
  %v1472 = vand.u32 2147483647, %v1458
  %v1473 = vand.u32 %v1472, 8388607
  %v1474 = vor.u32 %v1473, 8388608
  %v1475 = vsub.s32 0, %v1474
  %v1476 = vadd.s32 %v1471, 1
  %vm1477 = vcmp.gt.s32.totalorder %v1476, 0
  %v1478 = vsel %vm1477, %v1476, 0
  %v1479 = vshrl.u32 %v1478, 5
  %v1480 = vand.u32 %v1478, 31
  %v1481 = vsub.s32 32, %v1480
  %v1482 = vshrl.u32 683565275, %v1481
  %v1483 = vshll.u32 683565275, %v1480
  %v1484 = vshrl.u32 2475754826, %v1481
  %v1485 = vor.u32 %v1483, %v1484
  %v1486 = vshll.u32 2475754826, %v1480
  %v1487 = vshrl.u32 2131351028, %v1481
  %v1488 = vor.u32 %v1486, %v1487
  %v1489 = vshll.u32 2131351028, %v1480
  %v1490 = vshrl.u32 2102212464, %v1481
  %v1491 = vor.u32 %v1489, %v1490
  %v1492 = vshll.u32 2102212464, %v1480
  %v1493 = vshrl.u32 920167782, %v1481
  %v1494 = vor.u32 %v1492, %v1493
  %v1495 = vshll.u32 920167782, %v1480
  %v1496 = vshrl.u32 1326507024, %v1481
  %v1497 = vor.u32 %v1495, %v1496
  %vm1498 = vcmp.lt.s32.totalorder %v1479, 1
  %vm1499 = vcmp.lt.s32.totalorder %v1479, 2
  %vm1500 = vcmp.lt.s32.totalorder %v1479, 3
  %vm1501 = vcmp.lt.s32.totalorder %v1479, 4
  %v1502 = vsel %vm1498, %v1482, %v1485
  %v1503 = vsel %vm1501, %v1491, 2102212464
  %v1504 = vsel %vm1500, %v1488, %v1503
  %v1505 = vsel %vm1499, %v1502, %v1504
  %v1506 = vsel %vm1498, %v1485, %v1488
  %v1507 = vsel %vm1501, %v1494, 920167782
  %v1508 = vsel %vm1500, %v1491, %v1507
  %v1509 = vsel %vm1499, %v1506, %v1508
  %v1510 = vsel %vm1498, %v1488, %v1491
  %v1511 = vsel %vm1501, %v1497, 1326507024
  %v1512 = vsel %vm1500, %v1494, %v1511
  %v1513 = vsel %vm1499, %v1510, %v1512
  %v1514 = vshll.u32 %v1474, 8
  %v1515 = vand.u32 %v1514, 65535
  %v1516 = vshrl.u32 %v1514, 16
  %v1517 = vand.u32 %v1513, 65535
  %v1518 = vshrl.u32 %v1513, 16
  %v1519 = vmul.u32 %v1515, %v1517
  %v1520 = vmul.u32 %v1515, %v1518
  %v1521 = vmul.u32 %v1516, %v1517
  %v1522 = vmul.u32 %v1516, %v1518
  %v1523 = vshll.u32 %v1520, 16
  %v1524 = vshrl.u32 %v1520, 16
  %v1525 = vshll.u32 %v1521, 16
  %v1526 = vshrl.u32 %v1521, 16
  %vm1527 = vc.u32 %v1519, %v1523
  %v1528 = vsel %vm1527, 1, 0
  %v1529 = vadd.s32 %v1519, %v1523
  %v1530 = vadd.s32 %v1522, %v1528
  %vm1531 = vc.u32 %v1529, %v1525
  %v1532 = vsel %vm1531, 1, 0
  %v1533 = vadd.s32 %v1529, %v1525
  %v1534 = vadd.s32 %v1530, %v1532
  %v1535 = vadd.s32 %v1534, %v1524
  %v1536 = vadd.s32 %v1535, %v1526
  %v1537 = vand.u32 %v1514, 65535
  %v1538 = vshrl.u32 %v1514, 16
  %v1539 = vand.u32 %v1509, 65535
  %v1540 = vshrl.u32 %v1509, 16
  %v1541 = vmul.u32 %v1537, %v1539
  %v1542 = vmul.u32 %v1537, %v1540
  %v1543 = vmul.u32 %v1538, %v1539
  %v1544 = vmul.u32 %v1538, %v1540
  %v1545 = vshll.u32 %v1542, 16
  %v1546 = vshrl.u32 %v1542, 16
  %v1547 = vshll.u32 %v1543, 16
  %v1548 = vshrl.u32 %v1543, 16
  %vm1549 = vc.u32 %v1541, %v1545
  %v1550 = vsel %vm1549, 1, 0
  %v1551 = vadd.s32 %v1541, %v1545
  %v1552 = vadd.s32 %v1544, %v1550
  %vm1553 = vc.u32 %v1551, %v1547
  %v1554 = vsel %vm1553, 1, 0
  %v1555 = vadd.s32 %v1551, %v1547
  %v1556 = vadd.s32 %v1552, %v1554
  %v1557 = vadd.s32 %v1556, %v1546
  %v1558 = vadd.s32 %v1557, %v1548
  %v1559 = vmul.u32 %v1514, %v1505
  %v1560 = vadd.s32 %v1536, %v1555
  %vm1561 = vc.u32 %v1536, %v1555
  %v1562 = vadd.s32 %v1558, 1
  %v1563 = vsel %vm1561, %v1562, %v1558
  %v1564 = vadd.s32 %v1559, %v1563
  %v1565 = vadd.s32 %v1564, 536870912
  %v1566 = vshrl.u32 %v1565, 30
  %v1567 = vshll.u32 %v1566, 30
  %v1568 = vsub.s32 %v1564, %v1567
  %vm1569 = vcmp.lt.s32.totalorder %v1568, 0
  %v1570 = vsub.s32 0, %v1568
  %v1571 = vsel %vm1569, %v1570, %v1568
  %v1572 = vclz %v1571
  %v1573 = vsub.s32 %v1572, 2
  %vm1574 = vcmp.gt.s32.totalorder 0, %v1573
  %v1575 = vsel %vm1574, 0, %v1573
  %v1576 = vsub.s32 32, %v1575
  %v1577 = vshll.u32 %v1568, %v1575
  %v1578 = vshrl.u32 %v1560, %v1576
  %v1579 = vor.u32 %v1577, %v1578
  %v1580 = vsub.s32 4294967266, %v1575
  %v1581 = vadd.s32 %v1580, 127
  %v1582 = vshll.u32 %v1581, 23
  %v1583 = vor.u32 4788187, %v1582
  %v1584 = vand.u32 2147483647, %v1583
  %v1586 = vcvt.s32.f32 %v1579
  %v1587 = vmul.f32 %v1586, %v1584
  %v1588 = vxor.u32 %v1587, 2147483648
  %v1589 = vsel %vm1468, %v1588, %v1587
  %v1590 = vsub.s32 4, %v1566
  %v1591 = vsel %vm1468, %v1590, %v1566
  %v1592 = vsel %vm1467, %v1458, %v1589
  %v1593 = vsel %vm1467, 0, %v1591
  %v1594 = vmul.f32 %v1592, %v1592
  %v1595 = vmul.f32 %v1594, -0.001358992
  %v1596 = vadd.f32 %v1595, 0.041655596
  %v1597 = vmul.f32 %v1594, %v1596
  %v1598 = vadd.f32 %v1597, -0.4999988
  %v1599 = vmul.f32 %v1594, %v1598
  %v1600 = vadd.f32 1.0, %v1599
  %v1601 = vmul.f32 %v1592, %v1592
  %v1602 = vmul.f32 %v1601, -0.00019511016
  %v1603 = vadd.f32 %v1602, 0.008332121
  %v1604 = vmul.f32 %v1601, %v1603
  %v1605 = vadd.f32 %v1604, -0.16666654
  %v1606 = vmul.f32 %v1601, %v1605
  %v1607 = vadd.f32 %v1606, 1.0
  %v1608 = vmul.f32 %v1607, %v1592
  %vm1609 = vweird.f32 %v1458
  %v1610 = vadd.s32 %v1593, 3
  %v1611 = vand.u32 %v1610, 3
  %vm1612 = vcmp.lt.s32.totalorder %v1611, 2
  %vm1613 = vcmp.eq.s32.totalorder %v1611, 0
  %v1614 = vxor.u32 %v1608, 2147483648
  %v1615 = vsel %vm1613, %v1600, %v1614
  %vm1616 = vcmp.eq.s32.totalorder %v1611, 2
  %v1617 = vxor.u32 %v1600, 2147483648
  %v1618 = vsel %vm1616, %v1617, %v1608
  %v1619 = vsel %vm1612, %v1615, %v1618
  %v1620 = vsel %vm1609, nan, %v1619
  %v1621 = vand.u32 2147483647, %v1459
  %vm1622 = vcmp.le.f32.partialorder %v1621, 0.7853982
  %vm1623 = vcmp.lt.s32.totalorder %v1459, 0
  %v1624 = vand.u32 %v1459, 2139095040
  %v1625 = vshrl.u32 %v1624, 23
  %v1626 = vsub.s32 %v1625, 127
  %v1627 = vand.u32 2147483647, %v1459
  %v1628 = vand.u32 %v1627, 8388607
  %v1629 = vor.u32 %v1628, 8388608
  %v1630 = vsub.s32 0, %v1629
  %v1631 = vadd.s32 %v1626, 1
  %vm1632 = vcmp.gt.s32.totalorder %v1631, 0
  %v1633 = vsel %vm1632, %v1631, 0
  %v1634 = vshrl.u32 %v1633, 5
  %v1635 = vand.u32 %v1633, 31
  %v1636 = vsub.s32 32, %v1635
  %v1637 = vshrl.u32 683565275, %v1636
  %v1638 = vshll.u32 683565275, %v1635
  %v1639 = vshrl.u32 2475754826, %v1636
  %v1640 = vor.u32 %v1638, %v1639
  %v1641 = vshll.u32 2475754826, %v1635
  %v1642 = vshrl.u32 2131351028, %v1636
  %v1643 = vor.u32 %v1641, %v1642
  %v1644 = vshll.u32 2131351028, %v1635
  %v1645 = vshrl.u32 2102212464, %v1636
  %v1646 = vor.u32 %v1644, %v1645
  %v1647 = vshll.u32 2102212464, %v1635
  %v1648 = vshrl.u32 920167782, %v1636
  %v1649 = vor.u32 %v1647, %v1648
  %v1650 = vshll.u32 920167782, %v1635
  %v1651 = vshrl.u32 1326507024, %v1636
  %v1652 = vor.u32 %v1650, %v1651
  %vm1653 = vcmp.lt.s32.totalorder %v1634, 1
  %vm1654 = vcmp.lt.s32.totalorder %v1634, 2
  %vm1655 = vcmp.lt.s32.totalorder %v1634, 3
  %vm1656 = vcmp.lt.s32.totalorder %v1634, 4
  %v1657 = vsel %vm1653, %v1637, %v1640
  %v1658 = vsel %vm1656, %v1646, 2102212464
  %v1659 = vsel %vm1655, %v1643, %v1658
  %v1660 = vsel %vm1654, %v1657, %v1659
  %v1661 = vsel %vm1653, %v1640, %v1643
  %v1662 = vsel %vm1656, %v1649, 920167782
  %v1663 = vsel %vm1655, %v1646, %v1662
  %v1664 = vsel %vm1654, %v1661, %v1663
  %v1665 = vsel %vm1653, %v1643, %v1646
  %v1666 = vsel %vm1656, %v1652, 1326507024
  %v1667 = vsel %vm1655, %v1649, %v1666
  %v1668 = vsel %vm1654, %v1665, %v1667
  %v1669 = vshll.u32 %v1629, 8
  %v1670 = vand.u32 %v1669, 65535
  %v1671 = vshrl.u32 %v1669, 16
  %v1672 = vand.u32 %v1668, 65535
  %v1673 = vshrl.u32 %v1668, 16
  %v1674 = vmul.u32 %v1670, %v1672
  %v1675 = vmul.u32 %v1670, %v1673
  %v1676 = vmul.u32 %v1671, %v1672
  %v1677 = vmul.u32 %v1671, %v1673
  %v1678 = vshll.u32 %v1675, 16
  %v1679 = vshrl.u32 %v1675, 16
  %v1680 = vshll.u32 %v1676, 16
  %v1681 = vshrl.u32 %v1676, 16
  %vm1682 = vc.u32 %v1674, %v1678
  %v1683 = vsel %vm1682, 1, 0
  %v1684 = vadd.s32 %v1674, %v1678
  %v1685 = vadd.s32 %v1677, %v1683
  %vm1686 = vc.u32 %v1684, %v1680
  %v1687 = vsel %vm1686, 1, 0
  %v1688 = vadd.s32 %v1684, %v1680
  %v1689 = vadd.s32 %v1685, %v1687
  %v1690 = vadd.s32 %v1689, %v1679
  %v1691 = vadd.s32 %v1690, %v1681
  %v1692 = vand.u32 %v1669, 65535
  %v1693 = vshrl.u32 %v1669, 16
  %v1694 = vand.u32 %v1664, 65535
  %v1695 = vshrl.u32 %v1664, 16
  %v1696 = vmul.u32 %v1692, %v1694
  %v1697 = vmul.u32 %v1692, %v1695
  %v1698 = vmul.u32 %v1693, %v1694
  %v1699 = vmul.u32 %v1693, %v1695
  %v1700 = vshll.u32 %v1697, 16
  %v1701 = vshrl.u32 %v1697, 16
  %v1702 = vshll.u32 %v1698, 16
  %v1703 = vshrl.u32 %v1698, 16
  %vm1704 = vc.u32 %v1696, %v1700
  %v1705 = vsel %vm1704, 1, 0
  %v1706 = vadd.s32 %v1696, %v1700
  %v1707 = vadd.s32 %v1699, %v1705
  %vm1708 = vc.u32 %v1706, %v1702
  %v1709 = vsel %vm1708, 1, 0
  %v1710 = vadd.s32 %v1706, %v1702
  %v1711 = vadd.s32 %v1707, %v1709
  %v1712 = vadd.s32 %v1711, %v1701
  %v1713 = vadd.s32 %v1712, %v1703
  %v1714 = vmul.u32 %v1669, %v1660
  %v1715 = vadd.s32 %v1691, %v1710
  %vm1716 = vc.u32 %v1691, %v1710
  %v1717 = vadd.s32 %v1713, 1
  %v1718 = vsel %vm1716, %v1717, %v1713
  %v1719 = vadd.s32 %v1714, %v1718
  %v1720 = vadd.s32 %v1719, 536870912
  %v1721 = vshrl.u32 %v1720, 30
  %v1722 = vshll.u32 %v1721, 30
  %v1723 = vsub.s32 %v1719, %v1722
  %vm1724 = vcmp.lt.s32.totalorder %v1723, 0
  %v1725 = vsub.s32 0, %v1723
  %v1726 = vsel %vm1724, %v1725, %v1723
  %v1727 = vclz %v1726
  %v1728 = vsub.s32 %v1727, 2
  %vm1729 = vcmp.gt.s32.totalorder 0, %v1728
  %v1730 = vsel %vm1729, 0, %v1728
  %v1731 = vsub.s32 32, %v1730
  %v1732 = vshll.u32 %v1723, %v1730
  %v1733 = vshrl.u32 %v1715, %v1731
  %v1734 = vor.u32 %v1732, %v1733
  %v1735 = vsub.s32 4294967266, %v1730
  %v1736 = vadd.s32 %v1735, 127
  %v1737 = vshll.u32 %v1736, 23
  %v1738 = vor.u32 4788187, %v1737
  %v1739 = vand.u32 2147483647, %v1738
  %v1741 = vcvt.s32.f32 %v1734
  %v1742 = vmul.f32 %v1741, %v1739
  %v1743 = vxor.u32 %v1742, 2147483648
  %v1744 = vsel %vm1623, %v1743, %v1742
  %v1745 = vsub.s32 4, %v1721
  %v1746 = vsel %vm1623, %v1745, %v1721
  %v1747 = vsel %vm1622, %v1459, %v1744
  %v1748 = vsel %vm1622, 0, %v1746
  %v1749 = vmul.f32 %v1747, %v1747
  %v1750 = vmul.f32 %v1749, -0.001358992
  %v1751 = vadd.f32 %v1750, 0.041655596
  %v1752 = vmul.f32 %v1749, %v1751
  %v1753 = vadd.f32 %v1752, -0.4999988
  %v1754 = vmul.f32 %v1749, %v1753
  %v1755 = vadd.f32 1.0, %v1754
  %v1756 = vmul.f32 %v1747, %v1747
  %v1757 = vmul.f32 %v1756, -0.00019511016
  %v1758 = vadd.f32 %v1757, 0.008332121
  %v1759 = vmul.f32 %v1756, %v1758
  %v1760 = vadd.f32 %v1759, -0.16666654
  %v1761 = vmul.f32 %v1756, %v1760
  %v1762 = vadd.f32 %v1761, 1.0
  %v1763 = vmul.f32 %v1762, %v1747
  %vm1764 = vweird.f32 %v1459
  %v1765 = vadd.s32 %v1748, 3
  %v1766 = vand.u32 %v1765, 3
  %vm1767 = vcmp.lt.s32.totalorder %v1766, 2
  %vm1768 = vcmp.eq.s32.totalorder %v1766, 0
  %v1769 = vxor.u32 %v1763, 2147483648
  %v1770 = vsel %vm1768, %v1755, %v1769
  %vm1771 = vcmp.eq.s32.totalorder %v1766, 2
  %v1772 = vxor.u32 %v1755, 2147483648
  %v1773 = vsel %vm1771, %v1772, %v1763
  %v1774 = vsel %vm1767, %v1770, %v1773
  %v1775 = vsel %vm1764, nan, %v1774
  %v1776 = vand.u32 2147483647, %v1460
  %vm1777 = vcmp.le.f32.partialorder %v1776, 0.7853982
  %vm1778 = vcmp.lt.s32.totalorder %v1460, 0
  %v1779 = vand.u32 %v1460, 2139095040
  %v1780 = vshrl.u32 %v1779, 23
  %v1781 = vsub.s32 %v1780, 127
  %v1782 = vand.u32 2147483647, %v1460
  %v1783 = vand.u32 %v1782, 8388607
  %v1784 = vor.u32 %v1783, 8388608
  %v1785 = vsub.s32 0, %v1784
  %v1786 = vadd.s32 %v1781, 1
  %vm1787 = vcmp.gt.s32.totalorder %v1786, 0
  %v1788 = vsel %vm1787, %v1786, 0
  %v1789 = vshrl.u32 %v1788, 5
  %v1790 = vand.u32 %v1788, 31
  %v1791 = vsub.s32 32, %v1790
  %v1792 = vshrl.u32 683565275, %v1791
  %v1793 = vshll.u32 683565275, %v1790
  %v1794 = vshrl.u32 2475754826, %v1791
  %v1795 = vor.u32 %v1793, %v1794
  %v1796 = vshll.u32 2475754826, %v1790
  %v1797 = vshrl.u32 2131351028, %v1791
  %v1798 = vor.u32 %v1796, %v1797
  %v1799 = vshll.u32 2131351028, %v1790
  %v1800 = vshrl.u32 2102212464, %v1791
  %v1801 = vor.u32 %v1799, %v1800
  %v1802 = vshll.u32 2102212464, %v1790
  %v1803 = vshrl.u32 920167782, %v1791
  %v1804 = vor.u32 %v1802, %v1803
  %v1805 = vshll.u32 920167782, %v1790
  %v1806 = vshrl.u32 1326507024, %v1791
  %v1807 = vor.u32 %v1805, %v1806
  %vm1808 = vcmp.lt.s32.totalorder %v1789, 1
  %vm1809 = vcmp.lt.s32.totalorder %v1789, 2
  %vm1810 = vcmp.lt.s32.totalorder %v1789, 3
  %vm1811 = vcmp.lt.s32.totalorder %v1789, 4
  %v1812 = vsel %vm1808, %v1792, %v1795
  %v1813 = vsel %vm1811, %v1801, 2102212464
  %v1814 = vsel %vm1810, %v1798, %v1813
  %v1815 = vsel %vm1809, %v1812, %v1814
  %v1816 = vsel %vm1808, %v1795, %v1798
  %v1817 = vsel %vm1811, %v1804, 920167782
  %v1818 = vsel %vm1810, %v1801, %v1817
  %v1819 = vsel %vm1809, %v1816, %v1818
  %v1820 = vsel %vm1808, %v1798, %v1801
  %v1821 = vsel %vm1811, %v1807, 1326507024
  %v1822 = vsel %vm1810, %v1804, %v1821
  %v1823 = vsel %vm1809, %v1820, %v1822
  %v1824 = vshll.u32 %v1784, 8
  %v1825 = vand.u32 %v1824, 65535
  %v1826 = vshrl.u32 %v1824, 16
  %v1827 = vand.u32 %v1823, 65535
  %v1828 = vshrl.u32 %v1823, 16
  %v1829 = vmul.u32 %v1825, %v1827
  %v1830 = vmul.u32 %v1825, %v1828
  %v1831 = vmul.u32 %v1826, %v1827
  %v1832 = vmul.u32 %v1826, %v1828
  %v1833 = vshll.u32 %v1830, 16
  %v1834 = vshrl.u32 %v1830, 16
  %v1835 = vshll.u32 %v1831, 16
  %v1836 = vshrl.u32 %v1831, 16
  %vm1837 = vc.u32 %v1829, %v1833
  %v1838 = vsel %vm1837, 1, 0
  %v1839 = vadd.s32 %v1829, %v1833
  %v1840 = vadd.s32 %v1832, %v1838
  %vm1841 = vc.u32 %v1839, %v1835
  %v1842 = vsel %vm1841, 1, 0
  %v1843 = vadd.s32 %v1839, %v1835
  %v1844 = vadd.s32 %v1840, %v1842
  %v1845 = vadd.s32 %v1844, %v1834
  %v1846 = vadd.s32 %v1845, %v1836
  %v1847 = vand.u32 %v1824, 65535
  %v1848 = vshrl.u32 %v1824, 16
  %v1849 = vand.u32 %v1819, 65535
  %v1850 = vshrl.u32 %v1819, 16
  %v1851 = vmul.u32 %v1847, %v1849
  %v1852 = vmul.u32 %v1847, %v1850
  %v1853 = vmul.u32 %v1848, %v1849
  %v1854 = vmul.u32 %v1848, %v1850
  %v1855 = vshll.u32 %v1852, 16
  %v1856 = vshrl.u32 %v1852, 16
  %v1857 = vshll.u32 %v1853, 16
  %v1858 = vshrl.u32 %v1853, 16
  %vm1859 = vc.u32 %v1851, %v1855
  %v1860 = vsel %vm1859, 1, 0
  %v1861 = vadd.s32 %v1851, %v1855
  %v1862 = vadd.s32 %v1854, %v1860
  %vm1863 = vc.u32 %v1861, %v1857
  %v1864 = vsel %vm1863, 1, 0
  %v1865 = vadd.s32 %v1861, %v1857
  %v1866 = vadd.s32 %v1862, %v1864
  %v1867 = vadd.s32 %v1866, %v1856
  %v1868 = vadd.s32 %v1867, %v1858
  %v1869 = vmul.u32 %v1824, %v1815
  %v1870 = vadd.s32 %v1846, %v1865
  %vm1871 = vc.u32 %v1846, %v1865
  %v1872 = vadd.s32 %v1868, 1
  %v1873 = vsel %vm1871, %v1872, %v1868
  %v1874 = vadd.s32 %v1869, %v1873
  %v1875 = vadd.s32 %v1874, 536870912
  %v1876 = vshrl.u32 %v1875, 30
  %v1877 = vshll.u32 %v1876, 30
  %v1878 = vsub.s32 %v1874, %v1877
  %vm1879 = vcmp.lt.s32.totalorder %v1878, 0
  %v1880 = vsub.s32 0, %v1878
  %v1881 = vsel %vm1879, %v1880, %v1878
  %v1882 = vclz %v1881
  %v1883 = vsub.s32 %v1882, 2
  %vm1884 = vcmp.gt.s32.totalorder 0, %v1883
  %v1885 = vsel %vm1884, 0, %v1883
  %v1886 = vsub.s32 32, %v1885
  %v1887 = vshll.u32 %v1878, %v1885
  %v1888 = vshrl.u32 %v1870, %v1886
  %v1889 = vor.u32 %v1887, %v1888
  %v1890 = vsub.s32 4294967266, %v1885
  %v1891 = vadd.s32 %v1890, 127
  %v1892 = vshll.u32 %v1891, 23
  %v1893 = vor.u32 4788187, %v1892
  %v1894 = vand.u32 2147483647, %v1893
  %v1896 = vcvt.s32.f32 %v1889
  %v1897 = vmul.f32 %v1896, %v1894
  %v1898 = vxor.u32 %v1897, 2147483648
  %v1899 = vsel %vm1778, %v1898, %v1897
  %v1900 = vsub.s32 4, %v1876
  %v1901 = vsel %vm1778, %v1900, %v1876
  %v1902 = vsel %vm1777, %v1460, %v1899
  %v1903 = vsel %vm1777, 0, %v1901
  %v1904 = vmul.f32 %v1902, %v1902
  %v1905 = vmul.f32 %v1904, -0.001358992
  %v1906 = vadd.f32 %v1905, 0.041655596
  %v1907 = vmul.f32 %v1904, %v1906
  %v1908 = vadd.f32 %v1907, -0.4999988
  %v1909 = vmul.f32 %v1904, %v1908
  %v1910 = vadd.f32 1.0, %v1909
  %v1911 = vmul.f32 %v1902, %v1902
  %v1912 = vmul.f32 %v1911, -0.00019511016
  %v1913 = vadd.f32 %v1912, 0.008332121
  %v1914 = vmul.f32 %v1911, %v1913
  %v1915 = vadd.f32 %v1914, -0.16666654
  %v1916 = vmul.f32 %v1911, %v1915
  %v1917 = vadd.f32 %v1916, 1.0
  %v1918 = vmul.f32 %v1917, %v1902
  %vm1919 = vweird.f32 %v1460
  %v1920 = vadd.s32 %v1903, 3
  %v1921 = vand.u32 %v1920, 3
  %vm1922 = vcmp.lt.s32.totalorder %v1921, 2
  %vm1923 = vcmp.eq.s32.totalorder %v1921, 0
  %v1924 = vxor.u32 %v1918, 2147483648
  %v1925 = vsel %vm1923, %v1910, %v1924
  %vm1926 = vcmp.eq.s32.totalorder %v1921, 2
  %v1927 = vxor.u32 %v1910, 2147483648
  %v1928 = vsel %vm1926, %v1927, %v1918
  %v1929 = vsel %vm1922, %v1925, %v1928
  %v1930 = vsel %vm1919, nan, %v1929
  %v1931 = vand.u32 2147483647, %v1461
  %vm1932 = vcmp.le.f32.partialorder %v1931, 0.7853982
  %vm1933 = vcmp.lt.s32.totalorder %v1461, 0
  %v1934 = vand.u32 %v1461, 2139095040
  %v1935 = vshrl.u32 %v1934, 23
  %v1936 = vsub.s32 %v1935, 127
  %v1937 = vand.u32 2147483647, %v1461
  %v1938 = vand.u32 %v1937, 8388607
  %v1939 = vor.u32 %v1938, 8388608
  %v1940 = vsub.s32 0, %v1939
  %v1941 = vadd.s32 %v1936, 1
  %vm1942 = vcmp.gt.s32.totalorder %v1941, 0
  %v1943 = vsel %vm1942, %v1941, 0
  %v1944 = vshrl.u32 %v1943, 5
  %v1945 = vand.u32 %v1943, 31
  %v1946 = vsub.s32 32, %v1945
  %v1947 = vshrl.u32 683565275, %v1946
  %v1948 = vshll.u32 683565275, %v1945
  %v1949 = vshrl.u32 2475754826, %v1946
  %v1950 = vor.u32 %v1948, %v1949
  %v1951 = vshll.u32 2475754826, %v1945
  %v1952 = vshrl.u32 2131351028, %v1946
  %v1953 = vor.u32 %v1951, %v1952
  %v1954 = vshll.u32 2131351028, %v1945
  %v1955 = vshrl.u32 2102212464, %v1946
  %v1956 = vor.u32 %v1954, %v1955
  %v1957 = vshll.u32 2102212464, %v1945
  %v1958 = vshrl.u32 920167782, %v1946
  %v1959 = vor.u32 %v1957, %v1958
  %v1960 = vshll.u32 920167782, %v1945
  %v1961 = vshrl.u32 1326507024, %v1946
  %v1962 = vor.u32 %v1960, %v1961
  %vm1963 = vcmp.lt.s32.totalorder %v1944, 1
  %vm1964 = vcmp.lt.s32.totalorder %v1944, 2
  %vm1965 = vcmp.lt.s32.totalorder %v1944, 3
  %vm1966 = vcmp.lt.s32.totalorder %v1944, 4
  %v1967 = vsel %vm1963, %v1947, %v1950
  %v1968 = vsel %vm1966, %v1956, 2102212464
  %v1969 = vsel %vm1965, %v1953, %v1968
  %v1970 = vsel %vm1964, %v1967, %v1969
  %v1971 = vsel %vm1963, %v1950, %v1953
  %v1972 = vsel %vm1966, %v1959, 920167782
  %v1973 = vsel %vm1965, %v1956, %v1972
  %v1974 = vsel %vm1964, %v1971, %v1973
  %v1975 = vsel %vm1963, %v1953, %v1956
  %v1976 = vsel %vm1966, %v1962, 1326507024
  %v1977 = vsel %vm1965, %v1959, %v1976
  %v1978 = vsel %vm1964, %v1975, %v1977
  %v1979 = vshll.u32 %v1939, 8
  %v1980 = vand.u32 %v1979, 65535
  %v1981 = vshrl.u32 %v1979, 16
  %v1982 = vand.u32 %v1978, 65535
  %v1983 = vshrl.u32 %v1978, 16
  %v1984 = vmul.u32 %v1980, %v1982
  %v1985 = vmul.u32 %v1980, %v1983
  %v1986 = vmul.u32 %v1981, %v1982
  %v1987 = vmul.u32 %v1981, %v1983
  %v1988 = vshll.u32 %v1985, 16
  %v1989 = vshrl.u32 %v1985, 16
  %v1990 = vshll.u32 %v1986, 16
  %v1991 = vshrl.u32 %v1986, 16
  %vm1992 = vc.u32 %v1984, %v1988
  %v1993 = vsel %vm1992, 1, 0
  %v1994 = vadd.s32 %v1984, %v1988
  %v1995 = vadd.s32 %v1987, %v1993
  %vm1996 = vc.u32 %v1994, %v1990
  %v1997 = vsel %vm1996, 1, 0
  %v1998 = vadd.s32 %v1994, %v1990
  %v1999 = vadd.s32 %v1995, %v1997
  %v2000 = vadd.s32 %v1999, %v1989
  %v2001 = vadd.s32 %v2000, %v1991
  %v2002 = vand.u32 %v1979, 65535
  %v2003 = vshrl.u32 %v1979, 16
  %v2004 = vand.u32 %v1974, 65535
  %v2005 = vshrl.u32 %v1974, 16
  %v2006 = vmul.u32 %v2002, %v2004
  %v2007 = vmul.u32 %v2002, %v2005
  %v2008 = vmul.u32 %v2003, %v2004
  %v2009 = vmul.u32 %v2003, %v2005
  %v2010 = vshll.u32 %v2007, 16
  %v2011 = vshrl.u32 %v2007, 16
  %v2012 = vshll.u32 %v2008, 16
  %v2013 = vshrl.u32 %v2008, 16
  %vm2014 = vc.u32 %v2006, %v2010
  %v2015 = vsel %vm2014, 1, 0
  %v2016 = vadd.s32 %v2006, %v2010
  %v2017 = vadd.s32 %v2009, %v2015
  %vm2018 = vc.u32 %v2016, %v2012
  %v2019 = vsel %vm2018, 1, 0
  %v2020 = vadd.s32 %v2016, %v2012
  %v2021 = vadd.s32 %v2017, %v2019
  %v2022 = vadd.s32 %v2021, %v2011
  %v2023 = vadd.s32 %v2022, %v2013
  %v2024 = vmul.u32 %v1979, %v1970
  %v2025 = vadd.s32 %v2001, %v2020
  %vm2026 = vc.u32 %v2001, %v2020
  %v2027 = vadd.s32 %v2023, 1
  %v2028 = vsel %vm2026, %v2027, %v2023
  %v2029 = vadd.s32 %v2024, %v2028
  %v2030 = vadd.s32 %v2029, 536870912
  %v2031 = vshrl.u32 %v2030, 30
  %v2032 = vshll.u32 %v2031, 30
  %v2033 = vsub.s32 %v2029, %v2032
  %vm2034 = vcmp.lt.s32.totalorder %v2033, 0
  %v2035 = vsub.s32 0, %v2033
  %v2036 = vsel %vm2034, %v2035, %v2033
  %v2037 = vclz %v2036
  %v2038 = vsub.s32 %v2037, 2
  %vm2039 = vcmp.gt.s32.totalorder 0, %v2038
  %v2040 = vsel %vm2039, 0, %v2038
  %v2041 = vsub.s32 32, %v2040
  %v2042 = vshll.u32 %v2033, %v2040
  %v2043 = vshrl.u32 %v2025, %v2041
  %v2044 = vor.u32 %v2042, %v2043
  %v2045 = vsub.s32 4294967266, %v2040
  %v2046 = vadd.s32 %v2045, 127
  %v2047 = vshll.u32 %v2046, 23
  %v2048 = vor.u32 4788187, %v2047
  %v2049 = vand.u32 2147483647, %v2048
  %v2051 = vcvt.s32.f32 %v2044
  %v2052 = vmul.f32 %v2051, %v2049
  %v2053 = vxor.u32 %v2052, 2147483648
  %v2054 = vsel %vm1933, %v2053, %v2052
  %v2055 = vsub.s32 4, %v2031
  %v2056 = vsel %vm1933, %v2055, %v2031
  %v2057 = vsel %vm1932, %v1461, %v2054
  %v2058 = vsel %vm1932, 0, %v2056
  %v2059 = vmul.f32 %v2057, %v2057
  %v2060 = vmul.f32 %v2059, -0.001358992
  %v2061 = vadd.f32 %v2060, 0.041655596
  %v2062 = vmul.f32 %v2059, %v2061
  %v2063 = vadd.f32 %v2062, -0.4999988
  %v2064 = vmul.f32 %v2059, %v2063
  %v2065 = vadd.f32 1.0, %v2064
  %v2066 = vmul.f32 %v2057, %v2057
  %v2067 = vmul.f32 %v2066, -0.00019511016
  %v2068 = vadd.f32 %v2067, 0.008332121
  %v2069 = vmul.f32 %v2066, %v2068
  %v2070 = vadd.f32 %v2069, -0.16666654
  %v2071 = vmul.f32 %v2066, %v2070
  %v2072 = vadd.f32 %v2071, 1.0
  %v2073 = vmul.f32 %v2072, %v2057
  %vm2074 = vweird.f32 %v1461
  %v2075 = vadd.s32 %v2058, 3
  %v2076 = vand.u32 %v2075, 3
  %vm2077 = vcmp.lt.s32.totalorder %v2076, 2
  %vm2078 = vcmp.eq.s32.totalorder %v2076, 0
  %v2079 = vxor.u32 %v2073, 2147483648
  %v2080 = vsel %vm2078, %v2065, %v2079
  %vm2081 = vcmp.eq.s32.totalorder %v2076, 2
  %v2082 = vxor.u32 %v2065, 2147483648
  %v2083 = vsel %vm2081, %v2082, %v2073
  %v2084 = vsel %vm2077, %v2080, %v2083
  %v2085 = vsel %vm2074, nan, %v2084
  %v2086 = vand.u32 2147483647, %v1462
  %vm2087 = vcmp.le.f32.partialorder %v2086, 0.7853982
  %vm2088 = vcmp.lt.s32.totalorder %v1462, 0
  %v2089 = vand.u32 %v1462, 2139095040
  %v2090 = vshrl.u32 %v2089, 23
  %v2091 = vsub.s32 %v2090, 127
  %v2092 = vand.u32 2147483647, %v1462
  %v2093 = vand.u32 %v2092, 8388607
  %v2094 = vor.u32 %v2093, 8388608
  %v2095 = vsub.s32 0, %v2094
  %v2096 = vadd.s32 %v2091, 1
  %vm2097 = vcmp.gt.s32.totalorder %v2096, 0
  %v2098 = vsel %vm2097, %v2096, 0
  %v2099 = vshrl.u32 %v2098, 5
  %v2100 = vand.u32 %v2098, 31
  %v2101 = vsub.s32 32, %v2100
  %v2102 = vshrl.u32 683565275, %v2101
  %v2103 = vshll.u32 683565275, %v2100
  %v2104 = vshrl.u32 2475754826, %v2101
  %v2105 = vor.u32 %v2103, %v2104
  %v2106 = vshll.u32 2475754826, %v2100
  %v2107 = vshrl.u32 2131351028, %v2101
  %v2108 = vor.u32 %v2106, %v2107
  %v2109 = vshll.u32 2131351028, %v2100
  %v2110 = vshrl.u32 2102212464, %v2101
  %v2111 = vor.u32 %v2109, %v2110
  %v2112 = vshll.u32 2102212464, %v2100
  %v2113 = vshrl.u32 920167782, %v2101
  %v2114 = vor.u32 %v2112, %v2113
  %v2115 = vshll.u32 920167782, %v2100
  %v2116 = vshrl.u32 1326507024, %v2101
  %v2117 = vor.u32 %v2115, %v2116
  %vm2118 = vcmp.lt.s32.totalorder %v2099, 1
  %vm2119 = vcmp.lt.s32.totalorder %v2099, 2
  %vm2120 = vcmp.lt.s32.totalorder %v2099, 3
  %vm2121 = vcmp.lt.s32.totalorder %v2099, 4
  %v2122 = vsel %vm2118, %v2102, %v2105
  %v2123 = vsel %vm2121, %v2111, 2102212464
  %v2124 = vsel %vm2120, %v2108, %v2123
  %v2125 = vsel %vm2119, %v2122, %v2124
  %v2126 = vsel %vm2118, %v2105, %v2108
  %v2127 = vsel %vm2121, %v2114, 920167782
  %v2128 = vsel %vm2120, %v2111, %v2127
  %v2129 = vsel %vm2119, %v2126, %v2128
  %v2130 = vsel %vm2118, %v2108, %v2111
  %v2131 = vsel %vm2121, %v2117, 1326507024
  %v2132 = vsel %vm2120, %v2114, %v2131
  %v2133 = vsel %vm2119, %v2130, %v2132
  %v2134 = vshll.u32 %v2094, 8
  %v2135 = vand.u32 %v2134, 65535
  %v2136 = vshrl.u32 %v2134, 16
  %v2137 = vand.u32 %v2133, 65535
  %v2138 = vshrl.u32 %v2133, 16
  %v2139 = vmul.u32 %v2135, %v2137
  %v2140 = vmul.u32 %v2135, %v2138
  %v2141 = vmul.u32 %v2136, %v2137
  %v2142 = vmul.u32 %v2136, %v2138
  %v2143 = vshll.u32 %v2140, 16
  %v2144 = vshrl.u32 %v2140, 16
  %v2145 = vshll.u32 %v2141, 16
  %v2146 = vshrl.u32 %v2141, 16
  %vm2147 = vc.u32 %v2139, %v2143
  %v2148 = vsel %vm2147, 1, 0
  %v2149 = vadd.s32 %v2139, %v2143
  %v2150 = vadd.s32 %v2142, %v2148
  %vm2151 = vc.u32 %v2149, %v2145
  %v2152 = vsel %vm2151, 1, 0
  %v2153 = vadd.s32 %v2149, %v2145
  %v2154 = vadd.s32 %v2150, %v2152
  %v2155 = vadd.s32 %v2154, %v2144
  %v2156 = vadd.s32 %v2155, %v2146
  %v2157 = vand.u32 %v2134, 65535
  %v2158 = vshrl.u32 %v2134, 16
  %v2159 = vand.u32 %v2129, 65535
  %v2160 = vshrl.u32 %v2129, 16
  %v2161 = vmul.u32 %v2157, %v2159
  %v2162 = vmul.u32 %v2157, %v2160
  %v2163 = vmul.u32 %v2158, %v2159
  %v2164 = vmul.u32 %v2158, %v2160
  %v2165 = vshll.u32 %v2162, 16
  %v2166 = vshrl.u32 %v2162, 16
  %v2167 = vshll.u32 %v2163, 16
  %v2168 = vshrl.u32 %v2163, 16
  %vm2169 = vc.u32 %v2161, %v2165
  %v2170 = vsel %vm2169, 1, 0
  %v2171 = vadd.s32 %v2161, %v2165
  %v2172 = vadd.s32 %v2164, %v2170
  %vm2173 = vc.u32 %v2171, %v2167
  %v2174 = vsel %vm2173, 1, 0
  %v2175 = vadd.s32 %v2171, %v2167
  %v2176 = vadd.s32 %v2172, %v2174
  %v2177 = vadd.s32 %v2176, %v2166
  %v2178 = vadd.s32 %v2177, %v2168
  %v2179 = vmul.u32 %v2134, %v2125
  %v2180 = vadd.s32 %v2156, %v2175
  %vm2181 = vc.u32 %v2156, %v2175
  %v2182 = vadd.s32 %v2178, 1
  %v2183 = vsel %vm2181, %v2182, %v2178
  %v2184 = vadd.s32 %v2179, %v2183
  %v2185 = vadd.s32 %v2184, 536870912
  %v2186 = vshrl.u32 %v2185, 30
  %v2187 = vshll.u32 %v2186, 30
  %v2188 = vsub.s32 %v2184, %v2187
  %vm2189 = vcmp.lt.s32.totalorder %v2188, 0
  %v2190 = vsub.s32 0, %v2188
  %v2191 = vsel %vm2189, %v2190, %v2188
  %v2192 = vclz %v2191
  %v2193 = vsub.s32 %v2192, 2
  %vm2194 = vcmp.gt.s32.totalorder 0, %v2193
  %v2195 = vsel %vm2194, 0, %v2193
  %v2196 = vsub.s32 32, %v2195
  %v2197 = vshll.u32 %v2188, %v2195
  %v2198 = vshrl.u32 %v2180, %v2196
  %v2199 = vor.u32 %v2197, %v2198
  %v2200 = vsub.s32 4294967266, %v2195
  %v2201 = vadd.s32 %v2200, 127
  %v2202 = vshll.u32 %v2201, 23
  %v2203 = vor.u32 4788187, %v2202
  %v2204 = vand.u32 2147483647, %v2203
  %v2206 = vcvt.s32.f32 %v2199
  %v2207 = vmul.f32 %v2206, %v2204
  %v2208 = vxor.u32 %v2207, 2147483648
  %v2209 = vsel %vm2088, %v2208, %v2207
  %v2210 = vsub.s32 4, %v2186
  %v2211 = vsel %vm2088, %v2210, %v2186
  %v2212 = vsel %vm2087, %v1462, %v2209
  %v2213 = vsel %vm2087, 0, %v2211
  %v2214 = vmul.f32 %v2212, %v2212
  %v2215 = vmul.f32 %v2214, -0.001358992
  %v2216 = vadd.f32 %v2215, 0.041655596
  %v2217 = vmul.f32 %v2214, %v2216
  %v2218 = vadd.f32 %v2217, -0.4999988
  %v2219 = vmul.f32 %v2214, %v2218
  %v2220 = vadd.f32 1.0, %v2219
  %v2221 = vmul.f32 %v2212, %v2212
  %v2222 = vmul.f32 %v2221, -0.00019511016
  %v2223 = vadd.f32 %v2222, 0.008332121
  %v2224 = vmul.f32 %v2221, %v2223
  %v2225 = vadd.f32 %v2224, -0.16666654
  %v2226 = vmul.f32 %v2221, %v2225
  %v2227 = vadd.f32 %v2226, 1.0
  %v2228 = vmul.f32 %v2227, %v2212
  %vm2229 = vweird.f32 %v1462
  %v2230 = vadd.s32 %v2213, 3
  %v2231 = vand.u32 %v2230, 3
  %vm2232 = vcmp.lt.s32.totalorder %v2231, 2
  %vm2233 = vcmp.eq.s32.totalorder %v2231, 0
  %v2234 = vxor.u32 %v2228, 2147483648
  %v2235 = vsel %vm2233, %v2220, %v2234
  %vm2236 = vcmp.eq.s32.totalorder %v2231, 2
  %v2237 = vxor.u32 %v2220, 2147483648
  %v2238 = vsel %vm2236, %v2237, %v2228
  %v2239 = vsel %vm2232, %v2235, %v2238
  %v2240 = vsel %vm2229, nan, %v2239
  %v2241 = vand.u32 2147483647, %v1463
  %vm2242 = vcmp.le.f32.partialorder %v2241, 0.7853982
  %vm2243 = vcmp.lt.s32.totalorder %v1463, 0
  %v2244 = vand.u32 %v1463, 2139095040
  %v2245 = vshrl.u32 %v2244, 23
  %v2246 = vsub.s32 %v2245, 127
  %v2247 = vand.u32 2147483647, %v1463
  %v2248 = vand.u32 %v2247, 8388607
  %v2249 = vor.u32 %v2248, 8388608
  %v2250 = vsub.s32 0, %v2249
  %v2251 = vadd.s32 %v2246, 1
  %vm2252 = vcmp.gt.s32.totalorder %v2251, 0
  %v2253 = vsel %vm2252, %v2251, 0
  %v2254 = vshrl.u32 %v2253, 5
  %v2255 = vand.u32 %v2253, 31
  %v2256 = vsub.s32 32, %v2255
  %v2257 = vshrl.u32 683565275, %v2256
  %v2258 = vshll.u32 683565275, %v2255
  %v2259 = vshrl.u32 2475754826, %v2256
  %v2260 = vor.u32 %v2258, %v2259
  %v2261 = vshll.u32 2475754826, %v2255
  %v2262 = vshrl.u32 2131351028, %v2256
  %v2263 = vor.u32 %v2261, %v2262
  %v2264 = vshll.u32 2131351028, %v2255
  %v2265 = vshrl.u32 2102212464, %v2256
  %v2266 = vor.u32 %v2264, %v2265
  %v2267 = vshll.u32 2102212464, %v2255
  %v2268 = vshrl.u32 920167782, %v2256
  %v2269 = vor.u32 %v2267, %v2268
  %v2270 = vshll.u32 920167782, %v2255
  %v2271 = vshrl.u32 1326507024, %v2256
  %v2272 = vor.u32 %v2270, %v2271
  %vm2273 = vcmp.lt.s32.totalorder %v2254, 1
  %vm2274 = vcmp.lt.s32.totalorder %v2254, 2
  %vm2275 = vcmp.lt.s32.totalorder %v2254, 3
  %vm2276 = vcmp.lt.s32.totalorder %v2254, 4
  %v2277 = vsel %vm2273, %v2257, %v2260
  %v2278 = vsel %vm2276, %v2266, 2102212464
  %v2279 = vsel %vm2275, %v2263, %v2278
  %v2280 = vsel %vm2274, %v2277, %v2279
  %v2281 = vsel %vm2273, %v2260, %v2263
  %v2282 = vsel %vm2276, %v2269, 920167782
  %v2283 = vsel %vm2275, %v2266, %v2282
  %v2284 = vsel %vm2274, %v2281, %v2283
  %v2285 = vsel %vm2273, %v2263, %v2266
  %v2286 = vsel %vm2276, %v2272, 1326507024
  %v2287 = vsel %vm2275, %v2269, %v2286
  %v2288 = vsel %vm2274, %v2285, %v2287
  %v2289 = vshll.u32 %v2249, 8
  %v2290 = vand.u32 %v2289, 65535
  %v2291 = vshrl.u32 %v2289, 16
  %v2292 = vand.u32 %v2288, 65535
  %v2293 = vshrl.u32 %v2288, 16
  %v2294 = vmul.u32 %v2290, %v2292
  %v2295 = vmul.u32 %v2290, %v2293
  %v2296 = vmul.u32 %v2291, %v2292
  %v2297 = vmul.u32 %v2291, %v2293
  %v2298 = vshll.u32 %v2295, 16
  %v2299 = vshrl.u32 %v2295, 16
  %v2300 = vshll.u32 %v2296, 16
  %v2301 = vshrl.u32 %v2296, 16
  %vm2302 = vc.u32 %v2294, %v2298
  %v2303 = vsel %vm2302, 1, 0
  %v2304 = vadd.s32 %v2294, %v2298
  %v2305 = vadd.s32 %v2297, %v2303
  %vm2306 = vc.u32 %v2304, %v2300
  %v2307 = vsel %vm2306, 1, 0
  %v2308 = vadd.s32 %v2304, %v2300
  %v2309 = vadd.s32 %v2305, %v2307
  %v2310 = vadd.s32 %v2309, %v2299
  %v2311 = vadd.s32 %v2310, %v2301
  %v2312 = vand.u32 %v2289, 65535
  %v2313 = vshrl.u32 %v2289, 16
  %v2314 = vand.u32 %v2284, 65535
  %v2315 = vshrl.u32 %v2284, 16
  %v2316 = vmul.u32 %v2312, %v2314
  %v2317 = vmul.u32 %v2312, %v2315
  %v2318 = vmul.u32 %v2313, %v2314
  %v2319 = vmul.u32 %v2313, %v2315
  %v2320 = vshll.u32 %v2317, 16
  %v2321 = vshrl.u32 %v2317, 16
  %v2322 = vshll.u32 %v2318, 16
  %v2323 = vshrl.u32 %v2318, 16
  %vm2324 = vc.u32 %v2316, %v2320
  %v2325 = vsel %vm2324, 1, 0
  %v2326 = vadd.s32 %v2316, %v2320
  %v2327 = vadd.s32 %v2319, %v2325
  %vm2328 = vc.u32 %v2326, %v2322
  %v2329 = vsel %vm2328, 1, 0
  %v2330 = vadd.s32 %v2326, %v2322
  %v2331 = vadd.s32 %v2327, %v2329
  %v2332 = vadd.s32 %v2331, %v2321
  %v2333 = vadd.s32 %v2332, %v2323
  %v2334 = vmul.u32 %v2289, %v2280
  %v2335 = vadd.s32 %v2311, %v2330
  %vm2336 = vc.u32 %v2311, %v2330
  %v2337 = vadd.s32 %v2333, 1
  %v2338 = vsel %vm2336, %v2337, %v2333
  %v2339 = vadd.s32 %v2334, %v2338
  %v2340 = vadd.s32 %v2339, 536870912
  %v2341 = vshrl.u32 %v2340, 30
  %v2342 = vshll.u32 %v2341, 30
  %v2343 = vsub.s32 %v2339, %v2342
  %vm2344 = vcmp.lt.s32.totalorder %v2343, 0
  %v2345 = vsub.s32 0, %v2343
  %v2346 = vsel %vm2344, %v2345, %v2343
  %v2347 = vclz %v2346
  %v2348 = vsub.s32 %v2347, 2
  %vm2349 = vcmp.gt.s32.totalorder 0, %v2348
  %v2350 = vsel %vm2349, 0, %v2348
  %v2351 = vsub.s32 32, %v2350
  %v2352 = vshll.u32 %v2343, %v2350
  %v2353 = vshrl.u32 %v2335, %v2351
  %v2354 = vor.u32 %v2352, %v2353
  %v2355 = vsub.s32 4294967266, %v2350
  %v2356 = vadd.s32 %v2355, 127
  %v2357 = vshll.u32 %v2356, 23
  %v2358 = vor.u32 4788187, %v2357
  %v2359 = vand.u32 2147483647, %v2358
  %v2361 = vcvt.s32.f32 %v2354
  %v2362 = vmul.f32 %v2361, %v2359
  %v2363 = vxor.u32 %v2362, 2147483648
  %v2364 = vsel %vm2243, %v2363, %v2362
  %v2365 = vsub.s32 4, %v2341
  %v2366 = vsel %vm2243, %v2365, %v2341
  %v2367 = vsel %vm2242, %v1463, %v2364
  %v2368 = vsel %vm2242, 0, %v2366
  %v2369 = vmul.f32 %v2367, %v2367
  %v2370 = vmul.f32 %v2369, -0.001358992
  %v2371 = vadd.f32 %v2370, 0.041655596
  %v2372 = vmul.f32 %v2369, %v2371
  %v2373 = vadd.f32 %v2372, -0.4999988
  %v2374 = vmul.f32 %v2369, %v2373
  %v2375 = vadd.f32 1.0, %v2374
  %v2376 = vmul.f32 %v2367, %v2367
  %v2377 = vmul.f32 %v2376, -0.00019511016
  %v2378 = vadd.f32 %v2377, 0.008332121
  %v2379 = vmul.f32 %v2376, %v2378
  %v2380 = vadd.f32 %v2379, -0.16666654
  %v2381 = vmul.f32 %v2376, %v2380
  %v2382 = vadd.f32 %v2381, 1.0
  %v2383 = vmul.f32 %v2382, %v2367
  %vm2384 = vweird.f32 %v1463
  %v2385 = vadd.s32 %v2368, 3
  %v2386 = vand.u32 %v2385, 3
  %vm2387 = vcmp.lt.s32.totalorder %v2386, 2
  %vm2388 = vcmp.eq.s32.totalorder %v2386, 0
  %v2389 = vxor.u32 %v2383, 2147483648
  %v2390 = vsel %vm2388, %v2375, %v2389
  %vm2391 = vcmp.eq.s32.totalorder %v2386, 2
  %v2392 = vxor.u32 %v2375, 2147483648
  %v2393 = vsel %vm2391, %v2392, %v2383
  %v2394 = vsel %vm2387, %v2390, %v2393
  %v2395 = vsel %vm2384, nan, %v2394
  %v2396 = vand.u32 2147483647, %v1464
  %vm2397 = vcmp.le.f32.partialorder %v2396, 0.7853982
  %vm2398 = vcmp.lt.s32.totalorder %v1464, 0
  %v2399 = vand.u32 %v1464, 2139095040
  %v2400 = vshrl.u32 %v2399, 23
  %v2401 = vsub.s32 %v2400, 127
  %v2402 = vand.u32 2147483647, %v1464
  %v2403 = vand.u32 %v2402, 8388607
  %v2404 = vor.u32 %v2403, 8388608
  %v2405 = vsub.s32 0, %v2404
  %v2406 = vadd.s32 %v2401, 1
  %vm2407 = vcmp.gt.s32.totalorder %v2406, 0
  %v2408 = vsel %vm2407, %v2406, 0
  %v2409 = vshrl.u32 %v2408, 5
  %v2410 = vand.u32 %v2408, 31
  %v2411 = vsub.s32 32, %v2410
  %v2412 = vshrl.u32 683565275, %v2411
  %v2413 = vshll.u32 683565275, %v2410
  %v2414 = vshrl.u32 2475754826, %v2411
  %v2415 = vor.u32 %v2413, %v2414
  %v2416 = vshll.u32 2475754826, %v2410
  %v2417 = vshrl.u32 2131351028, %v2411
  %v2418 = vor.u32 %v2416, %v2417
  %v2419 = vshll.u32 2131351028, %v2410
  %v2420 = vshrl.u32 2102212464, %v2411
  %v2421 = vor.u32 %v2419, %v2420
  %v2422 = vshll.u32 2102212464, %v2410
  %v2423 = vshrl.u32 920167782, %v2411
  %v2424 = vor.u32 %v2422, %v2423
  %v2425 = vshll.u32 920167782, %v2410
  %v2426 = vshrl.u32 1326507024, %v2411
  %v2427 = vor.u32 %v2425, %v2426
  %vm2428 = vcmp.lt.s32.totalorder %v2409, 1
  %vm2429 = vcmp.lt.s32.totalorder %v2409, 2
  %vm2430 = vcmp.lt.s32.totalorder %v2409, 3
  %vm2431 = vcmp.lt.s32.totalorder %v2409, 4
  %v2432 = vsel %vm2428, %v2412, %v2415
  %v2433 = vsel %vm2431, %v2421, 2102212464
  %v2434 = vsel %vm2430, %v2418, %v2433
  %v2435 = vsel %vm2429, %v2432, %v2434
  %v2436 = vsel %vm2428, %v2415, %v2418
  %v2437 = vsel %vm2431, %v2424, 920167782
  %v2438 = vsel %vm2430, %v2421, %v2437
  %v2439 = vsel %vm2429, %v2436, %v2438
  %v2440 = vsel %vm2428, %v2418, %v2421
  %v2441 = vsel %vm2431, %v2427, 1326507024
  %v2442 = vsel %vm2430, %v2424, %v2441
  %v2443 = vsel %vm2429, %v2440, %v2442
  %v2444 = vshll.u32 %v2404, 8
  %v2445 = vand.u32 %v2444, 65535
  %v2446 = vshrl.u32 %v2444, 16
  %v2447 = vand.u32 %v2443, 65535
  %v2448 = vshrl.u32 %v2443, 16
  %v2449 = vmul.u32 %v2445, %v2447
  %v2450 = vmul.u32 %v2445, %v2448
  %v2451 = vmul.u32 %v2446, %v2447
  %v2452 = vmul.u32 %v2446, %v2448
  %v2453 = vshll.u32 %v2450, 16
  %v2454 = vshrl.u32 %v2450, 16
  %v2455 = vshll.u32 %v2451, 16
  %v2456 = vshrl.u32 %v2451, 16
  %vm2457 = vc.u32 %v2449, %v2453
  %v2458 = vsel %vm2457, 1, 0
  %v2459 = vadd.s32 %v2449, %v2453
  %v2460 = vadd.s32 %v2452, %v2458
  %vm2461 = vc.u32 %v2459, %v2455
  %v2462 = vsel %vm2461, 1, 0
  %v2463 = vadd.s32 %v2459, %v2455
  %v2464 = vadd.s32 %v2460, %v2462
  %v2465 = vadd.s32 %v2464, %v2454
  %v2466 = vadd.s32 %v2465, %v2456
  %v2467 = vand.u32 %v2444, 65535
  %v2468 = vshrl.u32 %v2444, 16
  %v2469 = vand.u32 %v2439, 65535
  %v2470 = vshrl.u32 %v2439, 16
  %v2471 = vmul.u32 %v2467, %v2469
  %v2472 = vmul.u32 %v2467, %v2470
  %v2473 = vmul.u32 %v2468, %v2469
  %v2474 = vmul.u32 %v2468, %v2470
  %v2475 = vshll.u32 %v2472, 16
  %v2476 = vshrl.u32 %v2472, 16
  %v2477 = vshll.u32 %v2473, 16
  %v2478 = vshrl.u32 %v2473, 16
  %vm2479 = vc.u32 %v2471, %v2475
  %v2480 = vsel %vm2479, 1, 0
  %v2481 = vadd.s32 %v2471, %v2475
  %v2482 = vadd.s32 %v2474, %v2480
  %vm2483 = vc.u32 %v2481, %v2477
  %v2484 = vsel %vm2483, 1, 0
  %v2485 = vadd.s32 %v2481, %v2477
  %v2486 = vadd.s32 %v2482, %v2484
  %v2487 = vadd.s32 %v2486, %v2476
  %v2488 = vadd.s32 %v2487, %v2478
  %v2489 = vmul.u32 %v2444, %v2435
  %v2490 = vadd.s32 %v2466, %v2485
  %vm2491 = vc.u32 %v2466, %v2485
  %v2492 = vadd.s32 %v2488, 1
  %v2493 = vsel %vm2491, %v2492, %v2488
  %v2494 = vadd.s32 %v2489, %v2493
  %v2495 = vadd.s32 %v2494, 536870912
  %v2496 = vshrl.u32 %v2495, 30
  %v2497 = vshll.u32 %v2496, 30
  %v2498 = vsub.s32 %v2494, %v2497
  %vm2499 = vcmp.lt.s32.totalorder %v2498, 0
  %v2500 = vsub.s32 0, %v2498
  %v2501 = vsel %vm2499, %v2500, %v2498
  %v2502 = vclz %v2501
  %v2503 = vsub.s32 %v2502, 2
  %vm2504 = vcmp.gt.s32.totalorder 0, %v2503
  %v2505 = vsel %vm2504, 0, %v2503
  %v2506 = vsub.s32 32, %v2505
  %v2507 = vshll.u32 %v2498, %v2505
  %v2508 = vshrl.u32 %v2490, %v2506
  %v2509 = vor.u32 %v2507, %v2508
  %v2510 = vsub.s32 4294967266, %v2505
  %v2511 = vadd.s32 %v2510, 127
  %v2512 = vshll.u32 %v2511, 23
  %v2513 = vor.u32 4788187, %v2512
  %v2514 = vand.u32 2147483647, %v2513
  %v2516 = vcvt.s32.f32 %v2509
  %v2517 = vmul.f32 %v2516, %v2514
  %v2518 = vxor.u32 %v2517, 2147483648
  %v2519 = vsel %vm2398, %v2518, %v2517
  %v2520 = vsub.s32 4, %v2496
  %v2521 = vsel %vm2398, %v2520, %v2496
  %v2522 = vsel %vm2397, %v1464, %v2519
  %v2523 = vsel %vm2397, 0, %v2521
  %v2524 = vmul.f32 %v2522, %v2522
  %v2525 = vmul.f32 %v2524, -0.001358992
  %v2526 = vadd.f32 %v2525, 0.041655596
  %v2527 = vmul.f32 %v2524, %v2526
  %v2528 = vadd.f32 %v2527, -0.4999988
  %v2529 = vmul.f32 %v2524, %v2528
  %v2530 = vadd.f32 1.0, %v2529
  %v2531 = vmul.f32 %v2522, %v2522
  %v2532 = vmul.f32 %v2531, -0.00019511016
  %v2533 = vadd.f32 %v2532, 0.008332121
  %v2534 = vmul.f32 %v2531, %v2533
  %v2535 = vadd.f32 %v2534, -0.16666654
  %v2536 = vmul.f32 %v2531, %v2535
  %v2537 = vadd.f32 %v2536, 1.0
  %v2538 = vmul.f32 %v2537, %v2522
  %vm2539 = vweird.f32 %v1464
  %v2540 = vadd.s32 %v2523, 3
  %v2541 = vand.u32 %v2540, 3
  %vm2542 = vcmp.lt.s32.totalorder %v2541, 2
  %vm2543 = vcmp.eq.s32.totalorder %v2541, 0
  %v2544 = vxor.u32 %v2538, 2147483648
  %v2545 = vsel %vm2543, %v2530, %v2544
  %vm2546 = vcmp.eq.s32.totalorder %v2541, 2
  %v2547 = vxor.u32 %v2530, 2147483648
  %v2548 = vsel %vm2546, %v2547, %v2538
  %v2549 = vsel %vm2542, %v2545, %v2548
  %v2550 = vsel %vm2539, nan, %v2549
  %v2551 = vand.u32 2147483647, %v1465
  %vm2552 = vcmp.le.f32.partialorder %v2551, 0.7853982
  %vm2553 = vcmp.lt.s32.totalorder %v1465, 0
  %v2554 = vand.u32 %v1465, 2139095040
  %v2555 = vshrl.u32 %v2554, 23
  %v2556 = vsub.s32 %v2555, 127
  %v2557 = vand.u32 2147483647, %v1465
  %v2558 = vand.u32 %v2557, 8388607
  %v2559 = vor.u32 %v2558, 8388608
  %v2560 = vsub.s32 0, %v2559
  %v2561 = vadd.s32 %v2556, 1
  %vm2562 = vcmp.gt.s32.totalorder %v2561, 0
  %v2563 = vsel %vm2562, %v2561, 0
  %v2564 = vshrl.u32 %v2563, 5
  %v2565 = vand.u32 %v2563, 31
  %v2566 = vsub.s32 32, %v2565
  %v2567 = vshrl.u32 683565275, %v2566
  %v2568 = vshll.u32 683565275, %v2565
  %v2569 = vshrl.u32 2475754826, %v2566
  %v2570 = vor.u32 %v2568, %v2569
  %v2571 = vshll.u32 2475754826, %v2565
  %v2572 = vshrl.u32 2131351028, %v2566
  %v2573 = vor.u32 %v2571, %v2572
  %v2574 = vshll.u32 2131351028, %v2565
  %v2575 = vshrl.u32 2102212464, %v2566
  %v2576 = vor.u32 %v2574, %v2575
  %v2577 = vshll.u32 2102212464, %v2565
  %v2578 = vshrl.u32 920167782, %v2566
  %v2579 = vor.u32 %v2577, %v2578
  %v2580 = vshll.u32 920167782, %v2565
  %v2581 = vshrl.u32 1326507024, %v2566
  %v2582 = vor.u32 %v2580, %v2581
  %vm2583 = vcmp.lt.s32.totalorder %v2564, 1
  %vm2584 = vcmp.lt.s32.totalorder %v2564, 2
  %vm2585 = vcmp.lt.s32.totalorder %v2564, 3
  %vm2586 = vcmp.lt.s32.totalorder %v2564, 4
  %v2587 = vsel %vm2583, %v2567, %v2570
  %v2588 = vsel %vm2586, %v2576, 2102212464
  %v2589 = vsel %vm2585, %v2573, %v2588
  %v2590 = vsel %vm2584, %v2587, %v2589
  %v2591 = vsel %vm2583, %v2570, %v2573
  %v2592 = vsel %vm2586, %v2579, 920167782
  %v2593 = vsel %vm2585, %v2576, %v2592
  %v2594 = vsel %vm2584, %v2591, %v2593
  %v2595 = vsel %vm2583, %v2573, %v2576
  %v2596 = vsel %vm2586, %v2582, 1326507024
  %v2597 = vsel %vm2585, %v2579, %v2596
  %v2598 = vsel %vm2584, %v2595, %v2597
  %v2599 = vshll.u32 %v2559, 8
  %v2600 = vand.u32 %v2599, 65535
  %v2601 = vshrl.u32 %v2599, 16
  %v2602 = vand.u32 %v2598, 65535
  %v2603 = vshrl.u32 %v2598, 16
  %v2604 = vmul.u32 %v2600, %v2602
  %v2605 = vmul.u32 %v2600, %v2603
  %v2606 = vmul.u32 %v2601, %v2602
  %v2607 = vmul.u32 %v2601, %v2603
  %v2608 = vshll.u32 %v2605, 16
  %v2609 = vshrl.u32 %v2605, 16
  %v2610 = vshll.u32 %v2606, 16
  %v2611 = vshrl.u32 %v2606, 16
  %vm2612 = vc.u32 %v2604, %v2608
  %v2613 = vsel %vm2612, 1, 0
  %v2614 = vadd.s32 %v2604, %v2608
  %v2615 = vadd.s32 %v2607, %v2613
  %vm2616 = vc.u32 %v2614, %v2610
  %v2617 = vsel %vm2616, 1, 0
  %v2618 = vadd.s32 %v2614, %v2610
  %v2619 = vadd.s32 %v2615, %v2617
  %v2620 = vadd.s32 %v2619, %v2609
  %v2621 = vadd.s32 %v2620, %v2611
  %v2622 = vand.u32 %v2599, 65535
  %v2623 = vshrl.u32 %v2599, 16
  %v2624 = vand.u32 %v2594, 65535
  %v2625 = vshrl.u32 %v2594, 16
  %v2626 = vmul.u32 %v2622, %v2624
  %v2627 = vmul.u32 %v2622, %v2625
  %v2628 = vmul.u32 %v2623, %v2624
  %v2629 = vmul.u32 %v2623, %v2625
  %v2630 = vshll.u32 %v2627, 16
  %v2631 = vshrl.u32 %v2627, 16
  %v2632 = vshll.u32 %v2628, 16
  %v2633 = vshrl.u32 %v2628, 16
  %vm2634 = vc.u32 %v2626, %v2630
  %v2635 = vsel %vm2634, 1, 0
  %v2636 = vadd.s32 %v2626, %v2630
  %v2637 = vadd.s32 %v2629, %v2635
  %vm2638 = vc.u32 %v2636, %v2632
  %v2639 = vsel %vm2638, 1, 0
  %v2640 = vadd.s32 %v2636, %v2632
  %v2641 = vadd.s32 %v2637, %v2639
  %v2642 = vadd.s32 %v2641, %v2631
  %v2643 = vadd.s32 %v2642, %v2633
  %v2644 = vmul.u32 %v2599, %v2590
  %v2645 = vadd.s32 %v2621, %v2640
  %vm2646 = vc.u32 %v2621, %v2640
  %v2647 = vadd.s32 %v2643, 1
  %v2648 = vsel %vm2646, %v2647, %v2643
  %v2649 = vadd.s32 %v2644, %v2648
  %v2650 = vadd.s32 %v2649, 536870912
  %v2651 = vshrl.u32 %v2650, 30
  %v2652 = vshll.u32 %v2651, 30
  %v2653 = vsub.s32 %v2649, %v2652
  %vm2654 = vcmp.lt.s32.totalorder %v2653, 0
  %v2655 = vsub.s32 0, %v2653
  %v2656 = vsel %vm2654, %v2655, %v2653
  %v2657 = vclz %v2656
  %v2658 = vsub.s32 %v2657, 2
  %vm2659 = vcmp.gt.s32.totalorder 0, %v2658
  %v2660 = vsel %vm2659, 0, %v2658
  %v2661 = vsub.s32 32, %v2660
  %v2662 = vshll.u32 %v2653, %v2660
  %v2663 = vshrl.u32 %v2645, %v2661
  %v2664 = vor.u32 %v2662, %v2663
  %v2665 = vsub.s32 4294967266, %v2660
  %v2666 = vadd.s32 %v2665, 127
  %v2667 = vshll.u32 %v2666, 23
  %v2668 = vor.u32 4788187, %v2667
  %v2669 = vand.u32 2147483647, %v2668
  %v2671 = vcvt.s32.f32 %v2664
  %v2672 = vmul.f32 %v2671, %v2669
  %v2673 = vxor.u32 %v2672, 2147483648
  %v2674 = vsel %vm2553, %v2673, %v2672
  %v2675 = vsub.s32 4, %v2651
  %v2676 = vsel %vm2553, %v2675, %v2651
  %v2677 = vsel %vm2552, %v1465, %v2674
  %v2678 = vsel %vm2552, 0, %v2676
  %v2679 = vmul.f32 %v2677, %v2677
  %v2680 = vmul.f32 %v2679, -0.001358992
  %v2681 = vadd.f32 %v2680, 0.041655596
  %v2682 = vmul.f32 %v2679, %v2681
  %v2683 = vadd.f32 %v2682, -0.4999988
  %v2684 = vmul.f32 %v2679, %v2683
  %v2685 = vadd.f32 1.0, %v2684
  %v2686 = vmul.f32 %v2677, %v2677
  %v2687 = vmul.f32 %v2686, -0.00019511016
  %v2688 = vadd.f32 %v2687, 0.008332121
  %v2689 = vmul.f32 %v2686, %v2688
  %v2690 = vadd.f32 %v2689, -0.16666654
  %v2691 = vmul.f32 %v2686, %v2690
  %v2692 = vadd.f32 %v2691, 1.0
  %v2693 = vmul.f32 %v2692, %v2677
  %vm2694 = vweird.f32 %v1465
  %v2695 = vadd.s32 %v2678, 3
  %v2696 = vand.u32 %v2695, 3
  %vm2697 = vcmp.lt.s32.totalorder %v2696, 2
  %vm2698 = vcmp.eq.s32.totalorder %v2696, 0
  %v2699 = vxor.u32 %v2693, 2147483648
  %v2700 = vsel %vm2698, %v2685, %v2699
  %vm2701 = vcmp.eq.s32.totalorder %v2696, 2
  %v2702 = vxor.u32 %v2685, 2147483648
  %v2703 = vsel %vm2701, %v2702, %v2693
  %v2704 = vsel %vm2697, %v2700, %v2703
  %v2705 = vsel %vm2694, nan, %v2704
  %v2706 = vmul.f32 %v1375, %v1620
  %v2707 = vmul.f32 %v1376, %v1775
  %v2708 = vmul.f32 %v1377, %v1930
  %v2709 = vmul.f32 %v1378, %v2085
  %v2710 = vmul.f32 %v1379, %v2240
  %v2711 = vmul.f32 %v1380, %v2395
  %v2712 = vmul.f32 %v1381, %v2550
  %v2713 = vmul.f32 %v1382, %v2705
  %s2714 = scalar_lea.vmem %s1, 448
  %v2715 = vld [vmem:[%s2714] sm:$0xff]
  %v2716 = vld [vmem:[%s2714 + $0x8] sm:$0xff]
  %v2717 = vld [vmem:[%s2714 + $0x10] sm:$0xff]
  %v2718 = vld [vmem:[%s2714 + $0x18] sm:$0xff]
  %v2719 = vld [vmem:[%s2714 + $0x20] sm:$0xff]
  %v2720 = vld [vmem:[%s2714 + $0x28] sm:$0xff]
  %v2721 = vld [vmem:[%s2714 + $0x30] sm:$0xff]
  %v2722 = vld [vmem:[%s2714 + $0x38] sm:$0xff]
  %s2723 = scalar_lea.vmem %s1, 512
  %v2724 = vld [vmem:[%s2723] sm:$0xff]
  %v2725 = vld [vmem:[%s2723 + $0x8] sm:$0xff]
  %v2726 = vld [vmem:[%s2723 + $0x10] sm:$0xff]
  %v2727 = vld [vmem:[%s2723 + $0x18] sm:$0xff]
  %v2728 = vld [vmem:[%s2723 + $0x20] sm:$0xff]
  %v2729 = vld [vmem:[%s2723 + $0x28] sm:$0xff]
  %v2730 = vld [vmem:[%s2723 + $0x30] sm:$0xff]
  %v2731 = vld [vmem:[%s2723 + $0x38] sm:$0xff]
  %s2732 = scalar_lea.vmem %s2, 128
  %v2733 = vld [vmem:[%s2732] sm:$0xff]
  %v2734 = vld [vmem:[%s2732 + $0x8] sm:$0xff]
  %v2735 = vld [vmem:[%s2732 + $0x10] sm:$0xff]
  %v2736 = vld [vmem:[%s2732 + $0x18] sm:$0xff]
  %v2737 = vld [vmem:[%s2732 + $0x20] sm:$0xff]
  %v2738 = vld [vmem:[%s2732 + $0x28] sm:$0xff]
  %v2739 = vld [vmem:[%s2732 + $0x30] sm:$0xff]
  %v2740 = vld [vmem:[%s2732 + $0x38] sm:$0xff]
  %2742 = vset.pattern.permute.xlu0 0
  %2743 = vperm.xlu0 %2742, %v2733
  %v2744 = vpop.permute.xlu0 %2743
  %2747 = vset.pattern.permute.xlu0 0
  %2748 = vperm.xlu0 %2747, %v2734
  %v2749 = vpop.permute.xlu0 %2748
  %2752 = vset.pattern.permute.xlu0 0
  %2753 = vperm.xlu0 %2752, %v2735
  %v2754 = vpop.permute.xlu0 %2753
  %2757 = vset.pattern.permute.xlu0 0
  %2758 = vperm.xlu0 %2757, %v2736
  %v2759 = vpop.permute.xlu0 %2758
  %2762 = vset.pattern.permute.xlu0 0
  %2763 = vperm.xlu0 %2762, %v2737
  %v2764 = vpop.permute.xlu0 %2763
  %2767 = vset.pattern.permute.xlu0 0
  %2768 = vperm.xlu0 %2767, %v2738
  %v2769 = vpop.permute.xlu0 %2768
  %2772 = vset.pattern.permute.xlu0 0
  %2773 = vperm.xlu0 %2772, %v2739
  %v2774 = vpop.permute.xlu0 %2773
  %2777 = vset.pattern.permute.xlu0 0
  %2778 = vperm.xlu0 %2777, %v2740
  %v2779 = vpop.permute.xlu0 %2778
  %v2781 = vmul.f32 %v2724, %v2744
  %v2782 = vmul.f32 %v2725, %v2749
  %v2783 = vmul.f32 %v2726, %v2754
  %v2784 = vmul.f32 %v2727, %v2759
  %v2785 = vmul.f32 %v2728, %v2764
  %v2786 = vmul.f32 %v2729, %v2769
  %v2787 = vmul.f32 %v2730, %v2774
  %v2788 = vmul.f32 %v2731, %v2779
  %s2789 = scalar_lea.vmem %s1, 576
  %v2790 = vld [vmem:[%s2789] sm:$0xff]
  %v2791 = vld [vmem:[%s2789 + $0x8] sm:$0xff]
  %v2792 = vld [vmem:[%s2789 + $0x10] sm:$0xff]
  %v2793 = vld [vmem:[%s2789 + $0x18] sm:$0xff]
  %v2794 = vld [vmem:[%s2789 + $0x20] sm:$0xff]
  %v2795 = vld [vmem:[%s2789 + $0x28] sm:$0xff]
  %v2796 = vld [vmem:[%s2789 + $0x30] sm:$0xff]
  %v2797 = vld [vmem:[%s2789 + $0x38] sm:$0xff]
  %v2798 = vadd.f32 %v2781, %v2790
  %v2799 = vadd.f32 %v2782, %v2791
  %v2800 = vadd.f32 %v2783, %v2792
  %v2801 = vadd.f32 %v2784, %v2793
  %v2802 = vadd.f32 %v2785, %v2794
  %v2803 = vadd.f32 %v2786, %v2795
  %v2804 = vadd.f32 %v2787, %v2796
  %v2805 = vadd.f32 %v2788, %v2797
  %v2806 = vand.u32 2147483647, %v2798
  %vm2807 = vcmp.le.f32.partialorder %v2806, 0.7853982
  %vm2808 = vcmp.lt.s32.totalorder %v2798, 0
  %v2809 = vand.u32 %v2798, 2139095040
  %v2810 = vshrl.u32 %v2809, 23
  %v2811 = vsub.s32 %v2810, 127
  %v2812 = vand.u32 2147483647, %v2798
  %v2813 = vand.u32 %v2812, 8388607
  %v2814 = vor.u32 %v2813, 8388608
  %v2815 = vsub.s32 0, %v2814
  %v2816 = vadd.s32 %v2811, 1
  %vm2817 = vcmp.gt.s32.totalorder %v2816, 0
  %v2818 = vsel %vm2817, %v2816, 0
  %v2819 = vshrl.u32 %v2818, 5
  %v2820 = vand.u32 %v2818, 31
  %v2821 = vsub.s32 32, %v2820
  %v2822 = vshrl.u32 683565275, %v2821
  %v2823 = vshll.u32 683565275, %v2820
  %v2824 = vshrl.u32 2475754826, %v2821
  %v2825 = vor.u32 %v2823, %v2824
  %v2826 = vshll.u32 2475754826, %v2820
  %v2827 = vshrl.u32 2131351028, %v2821
  %v2828 = vor.u32 %v2826, %v2827
  %v2829 = vshll.u32 2131351028, %v2820
  %v2830 = vshrl.u32 2102212464, %v2821
  %v2831 = vor.u32 %v2829, %v2830
  %v2832 = vshll.u32 2102212464, %v2820
  %v2833 = vshrl.u32 920167782, %v2821
  %v2834 = vor.u32 %v2832, %v2833
  %v2835 = vshll.u32 920167782, %v2820
  %v2836 = vshrl.u32 1326507024, %v2821
  %v2837 = vor.u32 %v2835, %v2836
  %vm2838 = vcmp.lt.s32.totalorder %v2819, 1
  %vm2839 = vcmp.lt.s32.totalorder %v2819, 2
  %vm2840 = vcmp.lt.s32.totalorder %v2819, 3
  %vm2841 = vcmp.lt.s32.totalorder %v2819, 4
  %v2842 = vsel %vm2838, %v2822, %v2825
  %v2843 = vsel %vm2841, %v2831, 2102212464
  %v2844 = vsel %vm2840, %v2828, %v2843
  %v2845 = vsel %vm2839, %v2842, %v2844
  %v2846 = vsel %vm2838, %v2825, %v2828
  %v2847 = vsel %vm2841, %v2834, 920167782
  %v2848 = vsel %vm2840, %v2831, %v2847
  %v2849 = vsel %vm2839, %v2846, %v2848
  %v2850 = vsel %vm2838, %v2828, %v2831
  %v2851 = vsel %vm2841, %v2837, 1326507024
  %v2852 = vsel %vm2840, %v2834, %v2851
  %v2853 = vsel %vm2839, %v2850, %v2852
  %v2854 = vshll.u32 %v2814, 8
  %v2855 = vand.u32 %v2854, 65535
  %v2856 = vshrl.u32 %v2854, 16
  %v2857 = vand.u32 %v2853, 65535
  %v2858 = vshrl.u32 %v2853, 16
  %v2859 = vmul.u32 %v2855, %v2857
  %v2860 = vmul.u32 %v2855, %v2858
  %v2861 = vmul.u32 %v2856, %v2857
  %v2862 = vmul.u32 %v2856, %v2858
  %v2863 = vshll.u32 %v2860, 16
  %v2864 = vshrl.u32 %v2860, 16
  %v2865 = vshll.u32 %v2861, 16
  %v2866 = vshrl.u32 %v2861, 16
  %vm2867 = vc.u32 %v2859, %v2863
  %v2868 = vsel %vm2867, 1, 0
  %v2869 = vadd.s32 %v2859, %v2863
  %v2870 = vadd.s32 %v2862, %v2868
  %vm2871 = vc.u32 %v2869, %v2865
  %v2872 = vsel %vm2871, 1, 0
  %v2873 = vadd.s32 %v2869, %v2865
  %v2874 = vadd.s32 %v2870, %v2872
  %v2875 = vadd.s32 %v2874, %v2864
  %v2876 = vadd.s32 %v2875, %v2866
  %v2877 = vand.u32 %v2854, 65535
  %v2878 = vshrl.u32 %v2854, 16
  %v2879 = vand.u32 %v2849, 65535
  %v2880 = vshrl.u32 %v2849, 16
  %v2881 = vmul.u32 %v2877, %v2879
  %v2882 = vmul.u32 %v2877, %v2880
  %v2883 = vmul.u32 %v2878, %v2879
  %v2884 = vmul.u32 %v2878, %v2880
  %v2885 = vshll.u32 %v2882, 16
  %v2886 = vshrl.u32 %v2882, 16
  %v2887 = vshll.u32 %v2883, 16
  %v2888 = vshrl.u32 %v2883, 16
  %vm2889 = vc.u32 %v2881, %v2885
  %v2890 = vsel %vm2889, 1, 0
  %v2891 = vadd.s32 %v2881, %v2885
  %v2892 = vadd.s32 %v2884, %v2890
  %vm2893 = vc.u32 %v2891, %v2887
  %v2894 = vsel %vm2893, 1, 0
  %v2895 = vadd.s32 %v2891, %v2887
  %v2896 = vadd.s32 %v2892, %v2894
  %v2897 = vadd.s32 %v2896, %v2886
  %v2898 = vadd.s32 %v2897, %v2888
  %v2899 = vmul.u32 %v2854, %v2845
  %v2900 = vadd.s32 %v2876, %v2895
  %vm2901 = vc.u32 %v2876, %v2895
  %v2902 = vadd.s32 %v2898, 1
  %v2903 = vsel %vm2901, %v2902, %v2898
  %v2904 = vadd.s32 %v2899, %v2903
  %v2905 = vadd.s32 %v2904, 536870912
  %v2906 = vshrl.u32 %v2905, 30
  %v2907 = vshll.u32 %v2906, 30
  %v2908 = vsub.s32 %v2904, %v2907
  %vm2909 = vcmp.lt.s32.totalorder %v2908, 0
  %v2910 = vsub.s32 0, %v2908
  %v2911 = vsel %vm2909, %v2910, %v2908
  %v2912 = vclz %v2911
  %v2913 = vsub.s32 %v2912, 2
  %vm2914 = vcmp.gt.s32.totalorder 0, %v2913
  %v2915 = vsel %vm2914, 0, %v2913
  %v2916 = vsub.s32 32, %v2915
  %v2917 = vshll.u32 %v2908, %v2915
  %v2918 = vshrl.u32 %v2900, %v2916
  %v2919 = vor.u32 %v2917, %v2918
  %v2920 = vsub.s32 4294967266, %v2915
  %v2921 = vadd.s32 %v2920, 127
  %v2922 = vshll.u32 %v2921, 23
  %v2923 = vor.u32 4788187, %v2922
  %v2924 = vand.u32 2147483647, %v2923
  %v2926 = vcvt.s32.f32 %v2919
  %v2927 = vmul.f32 %v2926, %v2924
  %v2928 = vxor.u32 %v2927, 2147483648
  %v2929 = vsel %vm2808, %v2928, %v2927
  %v2930 = vsub.s32 4, %v2906
  %v2931 = vsel %vm2808, %v2930, %v2906
  %v2932 = vsel %vm2807, %v2798, %v2929
  %v2933 = vsel %vm2807, 0, %v2931
  %v2934 = vmul.f32 %v2932, %v2932
  %v2935 = vmul.f32 %v2934, -0.001358992
  %v2936 = vadd.f32 %v2935, 0.041655596
  %v2937 = vmul.f32 %v2934, %v2936
  %v2938 = vadd.f32 %v2937, -0.4999988
  %v2939 = vmul.f32 %v2934, %v2938
  %v2940 = vadd.f32 1.0, %v2939
  %v2941 = vmul.f32 %v2932, %v2932
  %v2942 = vmul.f32 %v2941, -0.00019511016
  %v2943 = vadd.f32 %v2942, 0.008332121
  %v2944 = vmul.f32 %v2941, %v2943
  %v2945 = vadd.f32 %v2944, -0.16666654
  %v2946 = vmul.f32 %v2941, %v2945
  %v2947 = vadd.f32 %v2946, 1.0
  %v2948 = vmul.f32 %v2947, %v2932
  %vm2949 = vweird.f32 %v2798
  %v2950 = vadd.s32 %v2933, 3
  %v2951 = vand.u32 %v2950, 3
  %vm2952 = vcmp.lt.s32.totalorder %v2951, 2
  %vm2953 = vcmp.eq.s32.totalorder %v2951, 0
  %v2954 = vxor.u32 %v2948, 2147483648
  %v2955 = vsel %vm2953, %v2940, %v2954
  %vm2956 = vcmp.eq.s32.totalorder %v2951, 2
  %v2957 = vxor.u32 %v2940, 2147483648
  %v2958 = vsel %vm2956, %v2957, %v2948
  %v2959 = vsel %vm2952, %v2955, %v2958
  %v2960 = vsel %vm2949, nan, %v2959
  %v2961 = vand.u32 2147483647, %v2799
  %vm2962 = vcmp.le.f32.partialorder %v2961, 0.7853982
  %vm2963 = vcmp.lt.s32.totalorder %v2799, 0
  %v2964 = vand.u32 %v2799, 2139095040
  %v2965 = vshrl.u32 %v2964, 23
  %v2966 = vsub.s32 %v2965, 127
  %v2967 = vand.u32 2147483647, %v2799
  %v2968 = vand.u32 %v2967, 8388607
  %v2969 = vor.u32 %v2968, 8388608
  %v2970 = vsub.s32 0, %v2969
  %v2971 = vadd.s32 %v2966, 1
  %vm2972 = vcmp.gt.s32.totalorder %v2971, 0
  %v2973 = vsel %vm2972, %v2971, 0
  %v2974 = vshrl.u32 %v2973, 5
  %v2975 = vand.u32 %v2973, 31
  %v2976 = vsub.s32 32, %v2975
  %v2977 = vshrl.u32 683565275, %v2976
  %v2978 = vshll.u32 683565275, %v2975
  %v2979 = vshrl.u32 2475754826, %v2976
  %v2980 = vor.u32 %v2978, %v2979
  %v2981 = vshll.u32 2475754826, %v2975
  %v2982 = vshrl.u32 2131351028, %v2976
  %v2983 = vor.u32 %v2981, %v2982
  %v2984 = vshll.u32 2131351028, %v2975
  %v2985 = vshrl.u32 2102212464, %v2976
  %v2986 = vor.u32 %v2984, %v2985
  %v2987 = vshll.u32 2102212464, %v2975
  %v2988 = vshrl.u32 920167782, %v2976
  %v2989 = vor.u32 %v2987, %v2988
  %v2990 = vshll.u32 920167782, %v2975
  %v2991 = vshrl.u32 1326507024, %v2976
  %v2992 = vor.u32 %v2990, %v2991
  %vm2993 = vcmp.lt.s32.totalorder %v2974, 1
  %vm2994 = vcmp.lt.s32.totalorder %v2974, 2
  %vm2995 = vcmp.lt.s32.totalorder %v2974, 3
  %vm2996 = vcmp.lt.s32.totalorder %v2974, 4
  %v2997 = vsel %vm2993, %v2977, %v2980
  %v2998 = vsel %vm2996, %v2986, 2102212464
  %v2999 = vsel %vm2995, %v2983, %v2998
  %v3000 = vsel %vm2994, %v2997, %v2999
  %v3001 = vsel %vm2993, %v2980, %v2983
  %v3002 = vsel %vm2996, %v2989, 920167782
  %v3003 = vsel %vm2995, %v2986, %v3002
  %v3004 = vsel %vm2994, %v3001, %v3003
  %v3005 = vsel %vm2993, %v2983, %v2986
  %v3006 = vsel %vm2996, %v2992, 1326507024
  %v3007 = vsel %vm2995, %v2989, %v3006
  %v3008 = vsel %vm2994, %v3005, %v3007
  %v3009 = vshll.u32 %v2969, 8
  %v3010 = vand.u32 %v3009, 65535
  %v3011 = vshrl.u32 %v3009, 16
  %v3012 = vand.u32 %v3008, 65535
  %v3013 = vshrl.u32 %v3008, 16
  %v3014 = vmul.u32 %v3010, %v3012
  %v3015 = vmul.u32 %v3010, %v3013
  %v3016 = vmul.u32 %v3011, %v3012
  %v3017 = vmul.u32 %v3011, %v3013
  %v3018 = vshll.u32 %v3015, 16
  %v3019 = vshrl.u32 %v3015, 16
  %v3020 = vshll.u32 %v3016, 16
  %v3021 = vshrl.u32 %v3016, 16
  %vm3022 = vc.u32 %v3014, %v3018
  %v3023 = vsel %vm3022, 1, 0
  %v3024 = vadd.s32 %v3014, %v3018
  %v3025 = vadd.s32 %v3017, %v3023
  %vm3026 = vc.u32 %v3024, %v3020
  %v3027 = vsel %vm3026, 1, 0
  %v3028 = vadd.s32 %v3024, %v3020
  %v3029 = vadd.s32 %v3025, %v3027
  %v3030 = vadd.s32 %v3029, %v3019
  %v3031 = vadd.s32 %v3030, %v3021
  %v3032 = vand.u32 %v3009, 65535
  %v3033 = vshrl.u32 %v3009, 16
  %v3034 = vand.u32 %v3004, 65535
  %v3035 = vshrl.u32 %v3004, 16
  %v3036 = vmul.u32 %v3032, %v3034
  %v3037 = vmul.u32 %v3032, %v3035
  %v3038 = vmul.u32 %v3033, %v3034
  %v3039 = vmul.u32 %v3033, %v3035
  %v3040 = vshll.u32 %v3037, 16
  %v3041 = vshrl.u32 %v3037, 16
  %v3042 = vshll.u32 %v3038, 16
  %v3043 = vshrl.u32 %v3038, 16
  %vm3044 = vc.u32 %v3036, %v3040
  %v3045 = vsel %vm3044, 1, 0
  %v3046 = vadd.s32 %v3036, %v3040
  %v3047 = vadd.s32 %v3039, %v3045
  %vm3048 = vc.u32 %v3046, %v3042
  %v3049 = vsel %vm3048, 1, 0
  %v3050 = vadd.s32 %v3046, %v3042
  %v3051 = vadd.s32 %v3047, %v3049
  %v3052 = vadd.s32 %v3051, %v3041
  %v3053 = vadd.s32 %v3052, %v3043
  %v3054 = vmul.u32 %v3009, %v3000
  %v3055 = vadd.s32 %v3031, %v3050
  %vm3056 = vc.u32 %v3031, %v3050
  %v3057 = vadd.s32 %v3053, 1
  %v3058 = vsel %vm3056, %v3057, %v3053
  %v3059 = vadd.s32 %v3054, %v3058
  %v3060 = vadd.s32 %v3059, 536870912
  %v3061 = vshrl.u32 %v3060, 30
  %v3062 = vshll.u32 %v3061, 30
  %v3063 = vsub.s32 %v3059, %v3062
  %vm3064 = vcmp.lt.s32.totalorder %v3063, 0
  %v3065 = vsub.s32 0, %v3063
  %v3066 = vsel %vm3064, %v3065, %v3063
  %v3067 = vclz %v3066
  %v3068 = vsub.s32 %v3067, 2
  %vm3069 = vcmp.gt.s32.totalorder 0, %v3068
  %v3070 = vsel %vm3069, 0, %v3068
  %v3071 = vsub.s32 32, %v3070
  %v3072 = vshll.u32 %v3063, %v3070
  %v3073 = vshrl.u32 %v3055, %v3071
  %v3074 = vor.u32 %v3072, %v3073
  %v3075 = vsub.s32 4294967266, %v3070
  %v3076 = vadd.s32 %v3075, 127
  %v3077 = vshll.u32 %v3076, 23
  %v3078 = vor.u32 4788187, %v3077
  %v3079 = vand.u32 2147483647, %v3078
  %v3081 = vcvt.s32.f32 %v3074
  %v3082 = vmul.f32 %v3081, %v3079
  %v3083 = vxor.u32 %v3082, 2147483648
  %v3084 = vsel %vm2963, %v3083, %v3082
  %v3085 = vsub.s32 4, %v3061
  %v3086 = vsel %vm2963, %v3085, %v3061
  %v3087 = vsel %vm2962, %v2799, %v3084
  %v3088 = vsel %vm2962, 0, %v3086
  %v3089 = vmul.f32 %v3087, %v3087
  %v3090 = vmul.f32 %v3089, -0.001358992
  %v3091 = vadd.f32 %v3090, 0.041655596
  %v3092 = vmul.f32 %v3089, %v3091
  %v3093 = vadd.f32 %v3092, -0.4999988
  %v3094 = vmul.f32 %v3089, %v3093
  %v3095 = vadd.f32 1.0, %v3094
  %v3096 = vmul.f32 %v3087, %v3087
  %v3097 = vmul.f32 %v3096, -0.00019511016
  %v3098 = vadd.f32 %v3097, 0.008332121
  %v3099 = vmul.f32 %v3096, %v3098
  %v3100 = vadd.f32 %v3099, -0.16666654
  %v3101 = vmul.f32 %v3096, %v3100
  %v3102 = vadd.f32 %v3101, 1.0
  %v3103 = vmul.f32 %v3102, %v3087
  %vm3104 = vweird.f32 %v2799
  %v3105 = vadd.s32 %v3088, 3
  %v3106 = vand.u32 %v3105, 3
  %vm3107 = vcmp.lt.s32.totalorder %v3106, 2
  %vm3108 = vcmp.eq.s32.totalorder %v3106, 0
  %v3109 = vxor.u32 %v3103, 2147483648
  %v3110 = vsel %vm3108, %v3095, %v3109
  %vm3111 = vcmp.eq.s32.totalorder %v3106, 2
  %v3112 = vxor.u32 %v3095, 2147483648
  %v3113 = vsel %vm3111, %v3112, %v3103
  %v3114 = vsel %vm3107, %v3110, %v3113
  %v3115 = vsel %vm3104, nan, %v3114
  %v3116 = vand.u32 2147483647, %v2800
  %vm3117 = vcmp.le.f32.partialorder %v3116, 0.7853982
  %vm3118 = vcmp.lt.s32.totalorder %v2800, 0
  %v3119 = vand.u32 %v2800, 2139095040
  %v3120 = vshrl.u32 %v3119, 23
  %v3121 = vsub.s32 %v3120, 127
  %v3122 = vand.u32 2147483647, %v2800
  %v3123 = vand.u32 %v3122, 8388607
  %v3124 = vor.u32 %v3123, 8388608
  %v3125 = vsub.s32 0, %v3124
  %v3126 = vadd.s32 %v3121, 1
  %vm3127 = vcmp.gt.s32.totalorder %v3126, 0
  %v3128 = vsel %vm3127, %v3126, 0
  %v3129 = vshrl.u32 %v3128, 5
  %v3130 = vand.u32 %v3128, 31
  %v3131 = vsub.s32 32, %v3130
  %v3132 = vshrl.u32 683565275, %v3131
  %v3133 = vshll.u32 683565275, %v3130
  %v3134 = vshrl.u32 2475754826, %v3131
  %v3135 = vor.u32 %v3133, %v3134
  %v3136 = vshll.u32 2475754826, %v3130
  %v3137 = vshrl.u32 2131351028, %v3131
  %v3138 = vor.u32 %v3136, %v3137
  %v3139 = vshll.u32 2131351028, %v3130
  %v3140 = vshrl.u32 2102212464, %v3131
  %v3141 = vor.u32 %v3139, %v3140
  %v3142 = vshll.u32 2102212464, %v3130
  %v3143 = vshrl.u32 920167782, %v3131
  %v3144 = vor.u32 %v3142, %v3143
  %v3145 = vshll.u32 920167782, %v3130
  %v3146 = vshrl.u32 1326507024, %v3131
  %v3147 = vor.u32 %v3145, %v3146
  %vm3148 = vcmp.lt.s32.totalorder %v3129, 1
  %vm3149 = vcmp.lt.s32.totalorder %v3129, 2
  %vm3150 = vcmp.lt.s32.totalorder %v3129, 3
  %vm3151 = vcmp.lt.s32.totalorder %v3129, 4
  %v3152 = vsel %vm3148, %v3132, %v3135
  %v3153 = vsel %vm3151, %v3141, 2102212464
  %v3154 = vsel %vm3150, %v3138, %v3153
  %v3155 = vsel %vm3149, %v3152, %v3154
  %v3156 = vsel %vm3148, %v3135, %v3138
  %v3157 = vsel %vm3151, %v3144, 920167782
  %v3158 = vsel %vm3150, %v3141, %v3157
  %v3159 = vsel %vm3149, %v3156, %v3158
  %v3160 = vsel %vm3148, %v3138, %v3141
  %v3161 = vsel %vm3151, %v3147, 1326507024
  %v3162 = vsel %vm3150, %v3144, %v3161
  %v3163 = vsel %vm3149, %v3160, %v3162
  %v3164 = vshll.u32 %v3124, 8
  %v3165 = vand.u32 %v3164, 65535
  %v3166 = vshrl.u32 %v3164, 16
  %v3167 = vand.u32 %v3163, 65535
  %v3168 = vshrl.u32 %v3163, 16
  %v3169 = vmul.u32 %v3165, %v3167
  %v3170 = vmul.u32 %v3165, %v3168
  %v3171 = vmul.u32 %v3166, %v3167
  %v3172 = vmul.u32 %v3166, %v3168
  %v3173 = vshll.u32 %v3170, 16
  %v3174 = vshrl.u32 %v3170, 16
  %v3175 = vshll.u32 %v3171, 16
  %v3176 = vshrl.u32 %v3171, 16
  %vm3177 = vc.u32 %v3169, %v3173
  %v3178 = vsel %vm3177, 1, 0
  %v3179 = vadd.s32 %v3169, %v3173
  %v3180 = vadd.s32 %v3172, %v3178
  %vm3181 = vc.u32 %v3179, %v3175
  %v3182 = vsel %vm3181, 1, 0
  %v3183 = vadd.s32 %v3179, %v3175
  %v3184 = vadd.s32 %v3180, %v3182
  %v3185 = vadd.s32 %v3184, %v3174
  %v3186 = vadd.s32 %v3185, %v3176
  %v3187 = vand.u32 %v3164, 65535
  %v3188 = vshrl.u32 %v3164, 16
  %v3189 = vand.u32 %v3159, 65535
  %v3190 = vshrl.u32 %v3159, 16
  %v3191 = vmul.u32 %v3187, %v3189
  %v3192 = vmul.u32 %v3187, %v3190
  %v3193 = vmul.u32 %v3188, %v3189
  %v3194 = vmul.u32 %v3188, %v3190
  %v3195 = vshll.u32 %v3192, 16
  %v3196 = vshrl.u32 %v3192, 16
  %v3197 = vshll.u32 %v3193, 16
  %v3198 = vshrl.u32 %v3193, 16
  %vm3199 = vc.u32 %v3191, %v3195
  %v3200 = vsel %vm3199, 1, 0
  %v3201 = vadd.s32 %v3191, %v3195
  %v3202 = vadd.s32 %v3194, %v3200
  %vm3203 = vc.u32 %v3201, %v3197
  %v3204 = vsel %vm3203, 1, 0
  %v3205 = vadd.s32 %v3201, %v3197
  %v3206 = vadd.s32 %v3202, %v3204
  %v3207 = vadd.s32 %v3206, %v3196
  %v3208 = vadd.s32 %v3207, %v3198
  %v3209 = vmul.u32 %v3164, %v3155
  %v3210 = vadd.s32 %v3186, %v3205
  %vm3211 = vc.u32 %v3186, %v3205
  %v3212 = vadd.s32 %v3208, 1
  %v3213 = vsel %vm3211, %v3212, %v3208
  %v3214 = vadd.s32 %v3209, %v3213
  %v3215 = vadd.s32 %v3214, 536870912
  %v3216 = vshrl.u32 %v3215, 30
  %v3217 = vshll.u32 %v3216, 30
  %v3218 = vsub.s32 %v3214, %v3217
  %vm3219 = vcmp.lt.s32.totalorder %v3218, 0
  %v3220 = vsub.s32 0, %v3218
  %v3221 = vsel %vm3219, %v3220, %v3218
  %v3222 = vclz %v3221
  %v3223 = vsub.s32 %v3222, 2
  %vm3224 = vcmp.gt.s32.totalorder 0, %v3223
  %v3225 = vsel %vm3224, 0, %v3223
  %v3226 = vsub.s32 32, %v3225
  %v3227 = vshll.u32 %v3218, %v3225
  %v3228 = vshrl.u32 %v3210, %v3226
  %v3229 = vor.u32 %v3227, %v3228
  %v3230 = vsub.s32 4294967266, %v3225
  %v3231 = vadd.s32 %v3230, 127
  %v3232 = vshll.u32 %v3231, 23
  %v3233 = vor.u32 4788187, %v3232
  %v3234 = vand.u32 2147483647, %v3233
  %v3236 = vcvt.s32.f32 %v3229
  %v3237 = vmul.f32 %v3236, %v3234
  %v3238 = vxor.u32 %v3237, 2147483648
  %v3239 = vsel %vm3118, %v3238, %v3237
  %v3240 = vsub.s32 4, %v3216
  %v3241 = vsel %vm3118, %v3240, %v3216
  %v3242 = vsel %vm3117, %v2800, %v3239
  %v3243 = vsel %vm3117, 0, %v3241
  %v3244 = vmul.f32 %v3242, %v3242
  %v3245 = vmul.f32 %v3244, -0.001358992
  %v3246 = vadd.f32 %v3245, 0.041655596
  %v3247 = vmul.f32 %v3244, %v3246
  %v3248 = vadd.f32 %v3247, -0.4999988
  %v3249 = vmul.f32 %v3244, %v3248
  %v3250 = vadd.f32 1.0, %v3249
  %v3251 = vmul.f32 %v3242, %v3242
  %v3252 = vmul.f32 %v3251, -0.00019511016
  %v3253 = vadd.f32 %v3252, 0.008332121
  %v3254 = vmul.f32 %v3251, %v3253
  %v3255 = vadd.f32 %v3254, -0.16666654
  %v3256 = vmul.f32 %v3251, %v3255
  %v3257 = vadd.f32 %v3256, 1.0
  %v3258 = vmul.f32 %v3257, %v3242
  %vm3259 = vweird.f32 %v2800
  %v3260 = vadd.s32 %v3243, 3
  %v3261 = vand.u32 %v3260, 3
  %vm3262 = vcmp.lt.s32.totalorder %v3261, 2
  %vm3263 = vcmp.eq.s32.totalorder %v3261, 0
  %v3264 = vxor.u32 %v3258, 2147483648
  %v3265 = vsel %vm3263, %v3250, %v3264
  %vm3266 = vcmp.eq.s32.totalorder %v3261, 2
  %v3267 = vxor.u32 %v3250, 2147483648
  %v3268 = vsel %vm3266, %v3267, %v3258
  %v3269 = vsel %vm3262, %v3265, %v3268
  %v3270 = vsel %vm3259, nan, %v3269
  %v3271 = vand.u32 2147483647, %v2801
  %vm3272 = vcmp.le.f32.partialorder %v3271, 0.7853982
  %vm3273 = vcmp.lt.s32.totalorder %v2801, 0
  %v3274 = vand.u32 %v2801, 2139095040
  %v3275 = vshrl.u32 %v3274, 23
  %v3276 = vsub.s32 %v3275, 127
  %v3277 = vand.u32 2147483647, %v2801
  %v3278 = vand.u32 %v3277, 8388607
  %v3279 = vor.u32 %v3278, 8388608
  %v3280 = vsub.s32 0, %v3279
  %v3281 = vadd.s32 %v3276, 1
  %vm3282 = vcmp.gt.s32.totalorder %v3281, 0
  %v3283 = vsel %vm3282, %v3281, 0
  %v3284 = vshrl.u32 %v3283, 5
  %v3285 = vand.u32 %v3283, 31
  %v3286 = vsub.s32 32, %v3285
  %v3287 = vshrl.u32 683565275, %v3286
  %v3288 = vshll.u32 683565275, %v3285
  %v3289 = vshrl.u32 2475754826, %v3286
  %v3290 = vor.u32 %v3288, %v3289
  %v3291 = vshll.u32 2475754826, %v3285
  %v3292 = vshrl.u32 2131351028, %v3286
  %v3293 = vor.u32 %v3291, %v3292
  %v3294 = vshll.u32 2131351028, %v3285
  %v3295 = vshrl.u32 2102212464, %v3286
  %v3296 = vor.u32 %v3294, %v3295
  %v3297 = vshll.u32 2102212464, %v3285
  %v3298 = vshrl.u32 920167782, %v3286
  %v3299 = vor.u32 %v3297, %v3298
  %v3300 = vshll.u32 920167782, %v3285
  %v3301 = vshrl.u32 1326507024, %v3286
  %v3302 = vor.u32 %v3300, %v3301
  %vm3303 = vcmp.lt.s32.totalorder %v3284, 1
  %vm3304 = vcmp.lt.s32.totalorder %v3284, 2
  %vm3305 = vcmp.lt.s32.totalorder %v3284, 3
  %vm3306 = vcmp.lt.s32.totalorder %v3284, 4
  %v3307 = vsel %vm3303, %v3287, %v3290
  %v3308 = vsel %vm3306, %v3296, 2102212464
  %v3309 = vsel %vm3305, %v3293, %v3308
  %v3310 = vsel %vm3304, %v3307, %v3309
  %v3311 = vsel %vm3303, %v3290, %v3293
  %v3312 = vsel %vm3306, %v3299, 920167782
  %v3313 = vsel %vm3305, %v3296, %v3312
  %v3314 = vsel %vm3304, %v3311, %v3313
  %v3315 = vsel %vm3303, %v3293, %v3296
  %v3316 = vsel %vm3306, %v3302, 1326507024
  %v3317 = vsel %vm3305, %v3299, %v3316
  %v3318 = vsel %vm3304, %v3315, %v3317
  %v3319 = vshll.u32 %v3279, 8
  %v3320 = vand.u32 %v3319, 65535
  %v3321 = vshrl.u32 %v3319, 16
  %v3322 = vand.u32 %v3318, 65535
  %v3323 = vshrl.u32 %v3318, 16
  %v3324 = vmul.u32 %v3320, %v3322
  %v3325 = vmul.u32 %v3320, %v3323
  %v3326 = vmul.u32 %v3321, %v3322
  %v3327 = vmul.u32 %v3321, %v3323
  %v3328 = vshll.u32 %v3325, 16
  %v3329 = vshrl.u32 %v3325, 16
  %v3330 = vshll.u32 %v3326, 16
  %v3331 = vshrl.u32 %v3326, 16
  %vm3332 = vc.u32 %v3324, %v3328
  %v3333 = vsel %vm3332, 1, 0
  %v3334 = vadd.s32 %v3324, %v3328
  %v3335 = vadd.s32 %v3327, %v3333
  %vm3336 = vc.u32 %v3334, %v3330
  %v3337 = vsel %vm3336, 1, 0
  %v3338 = vadd.s32 %v3334, %v3330
  %v3339 = vadd.s32 %v3335, %v3337
  %v3340 = vadd.s32 %v3339, %v3329
  %v3341 = vadd.s32 %v3340, %v3331
  %v3342 = vand.u32 %v3319, 65535
  %v3343 = vshrl.u32 %v3319, 16
  %v3344 = vand.u32 %v3314, 65535
  %v3345 = vshrl.u32 %v3314, 16
  %v3346 = vmul.u32 %v3342, %v3344
  %v3347 = vmul.u32 %v3342, %v3345
  %v3348 = vmul.u32 %v3343, %v3344
  %v3349 = vmul.u32 %v3343, %v3345
  %v3350 = vshll.u32 %v3347, 16
  %v3351 = vshrl.u32 %v3347, 16
  %v3352 = vshll.u32 %v3348, 16
  %v3353 = vshrl.u32 %v3348, 16
  %vm3354 = vc.u32 %v3346, %v3350
  %v3355 = vsel %vm3354, 1, 0
  %v3356 = vadd.s32 %v3346, %v3350
  %v3357 = vadd.s32 %v3349, %v3355
  %vm3358 = vc.u32 %v3356, %v3352
  %v3359 = vsel %vm3358, 1, 0
  %v3360 = vadd.s32 %v3356, %v3352
  %v3361 = vadd.s32 %v3357, %v3359
  %v3362 = vadd.s32 %v3361, %v3351
  %v3363 = vadd.s32 %v3362, %v3353
  %v3364 = vmul.u32 %v3319, %v3310
  %v3365 = vadd.s32 %v3341, %v3360
  %vm3366 = vc.u32 %v3341, %v3360
  %v3367 = vadd.s32 %v3363, 1
  %v3368 = vsel %vm3366, %v3367, %v3363
  %v3369 = vadd.s32 %v3364, %v3368
  %v3370 = vadd.s32 %v3369, 536870912
  %v3371 = vshrl.u32 %v3370, 30
  %v3372 = vshll.u32 %v3371, 30
  %v3373 = vsub.s32 %v3369, %v3372
  %vm3374 = vcmp.lt.s32.totalorder %v3373, 0
  %v3375 = vsub.s32 0, %v3373
  %v3376 = vsel %vm3374, %v3375, %v3373
  %v3377 = vclz %v3376
  %v3378 = vsub.s32 %v3377, 2
  %vm3379 = vcmp.gt.s32.totalorder 0, %v3378
  %v3380 = vsel %vm3379, 0, %v3378
  %v3381 = vsub.s32 32, %v3380
  %v3382 = vshll.u32 %v3373, %v3380
  %v3383 = vshrl.u32 %v3365, %v3381
  %v3384 = vor.u32 %v3382, %v3383
  %v3385 = vsub.s32 4294967266, %v3380
  %v3386 = vadd.s32 %v3385, 127
  %v3387 = vshll.u32 %v3386, 23
  %v3388 = vor.u32 4788187, %v3387
  %v3389 = vand.u32 2147483647, %v3388
  %v3391 = vcvt.s32.f32 %v3384
  %v3392 = vmul.f32 %v3391, %v3389
  %v3393 = vxor.u32 %v3392, 2147483648
  %v3394 = vsel %vm3273, %v3393, %v3392
  %v3395 = vsub.s32 4, %v3371
  %v3396 = vsel %vm3273, %v3395, %v3371
  %v3397 = vsel %vm3272, %v2801, %v3394
  %v3398 = vsel %vm3272, 0, %v3396
  %v3399 = vmul.f32 %v3397, %v3397
  %v3400 = vmul.f32 %v3399, -0.001358992
  %v3401 = vadd.f32 %v3400, 0.041655596
  %v3402 = vmul.f32 %v3399, %v3401
  %v3403 = vadd.f32 %v3402, -0.4999988
  %v3404 = vmul.f32 %v3399, %v3403
  %v3405 = vadd.f32 1.0, %v3404
  %v3406 = vmul.f32 %v3397, %v3397
  %v3407 = vmul.f32 %v3406, -0.00019511016
  %v3408 = vadd.f32 %v3407, 0.008332121
  %v3409 = vmul.f32 %v3406, %v3408
  %v3410 = vadd.f32 %v3409, -0.16666654
  %v3411 = vmul.f32 %v3406, %v3410
  %v3412 = vadd.f32 %v3411, 1.0
  %v3413 = vmul.f32 %v3412, %v3397
  %vm3414 = vweird.f32 %v2801
  %v3415 = vadd.s32 %v3398, 3
  %v3416 = vand.u32 %v3415, 3
  %vm3417 = vcmp.lt.s32.totalorder %v3416, 2
  %vm3418 = vcmp.eq.s32.totalorder %v3416, 0
  %v3419 = vxor.u32 %v3413, 2147483648
  %v3420 = vsel %vm3418, %v3405, %v3419
  %vm3421 = vcmp.eq.s32.totalorder %v3416, 2
  %v3422 = vxor.u32 %v3405, 2147483648
  %v3423 = vsel %vm3421, %v3422, %v3413
  %v3424 = vsel %vm3417, %v3420, %v3423
  %v3425 = vsel %vm3414, nan, %v3424
  %v3426 = vand.u32 2147483647, %v2802
  %vm3427 = vcmp.le.f32.partialorder %v3426, 0.7853982
  %vm3428 = vcmp.lt.s32.totalorder %v2802, 0
  %v3429 = vand.u32 %v2802, 2139095040
  %v3430 = vshrl.u32 %v3429, 23
  %v3431 = vsub.s32 %v3430, 127
  %v3432 = vand.u32 2147483647, %v2802
  %v3433 = vand.u32 %v3432, 8388607
  %v3434 = vor.u32 %v3433, 8388608
  %v3435 = vsub.s32 0, %v3434
  %v3436 = vadd.s32 %v3431, 1
  %vm3437 = vcmp.gt.s32.totalorder %v3436, 0
  %v3438 = vsel %vm3437, %v3436, 0
  %v3439 = vshrl.u32 %v3438, 5
  %v3440 = vand.u32 %v3438, 31
  %v3441 = vsub.s32 32, %v3440
  %v3442 = vshrl.u32 683565275, %v3441
  %v3443 = vshll.u32 683565275, %v3440
  %v3444 = vshrl.u32 2475754826, %v3441
  %v3445 = vor.u32 %v3443, %v3444
  %v3446 = vshll.u32 2475754826, %v3440
  %v3447 = vshrl.u32 2131351028, %v3441
  %v3448 = vor.u32 %v3446, %v3447
  %v3449 = vshll.u32 2131351028, %v3440
  %v3450 = vshrl.u32 2102212464, %v3441
  %v3451 = vor.u32 %v3449, %v3450
  %v3452 = vshll.u32 2102212464, %v3440
  %v3453 = vshrl.u32 920167782, %v3441
  %v3454 = vor.u32 %v3452, %v3453
  %v3455 = vshll.u32 920167782, %v3440
  %v3456 = vshrl.u32 1326507024, %v3441
  %v3457 = vor.u32 %v3455, %v3456
  %vm3458 = vcmp.lt.s32.totalorder %v3439, 1
  %vm3459 = vcmp.lt.s32.totalorder %v3439, 2
  %vm3460 = vcmp.lt.s32.totalorder %v3439, 3
  %vm3461 = vcmp.lt.s32.totalorder %v3439, 4
  %v3462 = vsel %vm3458, %v3442, %v3445
  %v3463 = vsel %vm3461, %v3451, 2102212464
  %v3464 = vsel %vm3460, %v3448, %v3463
  %v3465 = vsel %vm3459, %v3462, %v3464
  %v3466 = vsel %vm3458, %v3445, %v3448
  %v3467 = vsel %vm3461, %v3454, 920167782
  %v3468 = vsel %vm3460, %v3451, %v3467
  %v3469 = vsel %vm3459, %v3466, %v3468
  %v3470 = vsel %vm3458, %v3448, %v3451
  %v3471 = vsel %vm3461, %v3457, 1326507024
  %v3472 = vsel %vm3460, %v3454, %v3471
  %v3473 = vsel %vm3459, %v3470, %v3472
  %v3474 = vshll.u32 %v3434, 8
  %v3475 = vand.u32 %v3474, 65535
  %v3476 = vshrl.u32 %v3474, 16
  %v3477 = vand.u32 %v3473, 65535
  %v3478 = vshrl.u32 %v3473, 16
  %v3479 = vmul.u32 %v3475, %v3477
  %v3480 = vmul.u32 %v3475, %v3478
  %v3481 = vmul.u32 %v3476, %v3477
  %v3482 = vmul.u32 %v3476, %v3478
  %v3483 = vshll.u32 %v3480, 16
  %v3484 = vshrl.u32 %v3480, 16
  %v3485 = vshll.u32 %v3481, 16
  %v3486 = vshrl.u32 %v3481, 16
  %vm3487 = vc.u32 %v3479, %v3483
  %v3488 = vsel %vm3487, 1, 0
  %v3489 = vadd.s32 %v3479, %v3483
  %v3490 = vadd.s32 %v3482, %v3488
  %vm3491 = vc.u32 %v3489, %v3485
  %v3492 = vsel %vm3491, 1, 0
  %v3493 = vadd.s32 %v3489, %v3485
  %v3494 = vadd.s32 %v3490, %v3492
  %v3495 = vadd.s32 %v3494, %v3484
  %v3496 = vadd.s32 %v3495, %v3486
  %v3497 = vand.u32 %v3474, 65535
  %v3498 = vshrl.u32 %v3474, 16
  %v3499 = vand.u32 %v3469, 65535
  %v3500 = vshrl.u32 %v3469, 16
  %v3501 = vmul.u32 %v3497, %v3499
  %v3502 = vmul.u32 %v3497, %v3500
  %v3503 = vmul.u32 %v3498, %v3499
  %v3504 = vmul.u32 %v3498, %v3500
  %v3505 = vshll.u32 %v3502, 16
  %v3506 = vshrl.u32 %v3502, 16
  %v3507 = vshll.u32 %v3503, 16
  %v3508 = vshrl.u32 %v3503, 16
  %vm3509 = vc.u32 %v3501, %v3505
  %v3510 = vsel %vm3509, 1, 0
  %v3511 = vadd.s32 %v3501, %v3505
  %v3512 = vadd.s32 %v3504, %v3510
  %vm3513 = vc.u32 %v3511, %v3507
  %v3514 = vsel %vm3513, 1, 0
  %v3515 = vadd.s32 %v3511, %v3507
  %v3516 = vadd.s32 %v3512, %v3514
  %v3517 = vadd.s32 %v3516, %v3506
  %v3518 = vadd.s32 %v3517, %v3508
  %v3519 = vmul.u32 %v3474, %v3465
  %v3520 = vadd.s32 %v3496, %v3515
  %vm3521 = vc.u32 %v3496, %v3515
  %v3522 = vadd.s32 %v3518, 1
  %v3523 = vsel %vm3521, %v3522, %v3518
  %v3524 = vadd.s32 %v3519, %v3523
  %v3525 = vadd.s32 %v3524, 536870912
  %v3526 = vshrl.u32 %v3525, 30
  %v3527 = vshll.u32 %v3526, 30
  %v3528 = vsub.s32 %v3524, %v3527
  %vm3529 = vcmp.lt.s32.totalorder %v3528, 0
  %v3530 = vsub.s32 0, %v3528
  %v3531 = vsel %vm3529, %v3530, %v3528
  %v3532 = vclz %v3531
  %v3533 = vsub.s32 %v3532, 2
  %vm3534 = vcmp.gt.s32.totalorder 0, %v3533
  %v3535 = vsel %vm3534, 0, %v3533
  %v3536 = vsub.s32 32, %v3535
  %v3537 = vshll.u32 %v3528, %v3535
  %v3538 = vshrl.u32 %v3520, %v3536
  %v3539 = vor.u32 %v3537, %v3538
  %v3540 = vsub.s32 4294967266, %v3535
  %v3541 = vadd.s32 %v3540, 127
  %v3542 = vshll.u32 %v3541, 23
  %v3543 = vor.u32 4788187, %v3542
  %v3544 = vand.u32 2147483647, %v3543
  %v3546 = vcvt.s32.f32 %v3539
  %v3547 = vmul.f32 %v3546, %v3544
  %v3548 = vxor.u32 %v3547, 2147483648
  %v3549 = vsel %vm3428, %v3548, %v3547
  %v3550 = vsub.s32 4, %v3526
  %v3551 = vsel %vm3428, %v3550, %v3526
  %v3552 = vsel %vm3427, %v2802, %v3549
  %v3553 = vsel %vm3427, 0, %v3551
  %v3554 = vmul.f32 %v3552, %v3552
  %v3555 = vmul.f32 %v3554, -0.001358992
  %v3556 = vadd.f32 %v3555, 0.041655596
  %v3557 = vmul.f32 %v3554, %v3556
  %v3558 = vadd.f32 %v3557, -0.4999988
  %v3559 = vmul.f32 %v3554, %v3558
  %v3560 = vadd.f32 1.0, %v3559
  %v3561 = vmul.f32 %v3552, %v3552
  %v3562 = vmul.f32 %v3561, -0.00019511016
  %v3563 = vadd.f32 %v3562, 0.008332121
  %v3564 = vmul.f32 %v3561, %v3563
  %v3565 = vadd.f32 %v3564, -0.16666654
  %v3566 = vmul.f32 %v3561, %v3565
  %v3567 = vadd.f32 %v3566, 1.0
  %v3568 = vmul.f32 %v3567, %v3552
  %vm3569 = vweird.f32 %v2802
  %v3570 = vadd.s32 %v3553, 3
  %v3571 = vand.u32 %v3570, 3
  %vm3572 = vcmp.lt.s32.totalorder %v3571, 2
  %vm3573 = vcmp.eq.s32.totalorder %v3571, 0
  %v3574 = vxor.u32 %v3568, 2147483648
  %v3575 = vsel %vm3573, %v3560, %v3574
  %vm3576 = vcmp.eq.s32.totalorder %v3571, 2
  %v3577 = vxor.u32 %v3560, 2147483648
  %v3578 = vsel %vm3576, %v3577, %v3568
  %v3579 = vsel %vm3572, %v3575, %v3578
  %v3580 = vsel %vm3569, nan, %v3579
  %v3581 = vand.u32 2147483647, %v2803
  %vm3582 = vcmp.le.f32.partialorder %v3581, 0.7853982
  %vm3583 = vcmp.lt.s32.totalorder %v2803, 0
  %v3584 = vand.u32 %v2803, 2139095040
  %v3585 = vshrl.u32 %v3584, 23
  %v3586 = vsub.s32 %v3585, 127
  %v3587 = vand.u32 2147483647, %v2803
  %v3588 = vand.u32 %v3587, 8388607
  %v3589 = vor.u32 %v3588, 8388608
  %v3590 = vsub.s32 0, %v3589
  %v3591 = vadd.s32 %v3586, 1
  %vm3592 = vcmp.gt.s32.totalorder %v3591, 0
  %v3593 = vsel %vm3592, %v3591, 0
  %v3594 = vshrl.u32 %v3593, 5
  %v3595 = vand.u32 %v3593, 31
  %v3596 = vsub.s32 32, %v3595
  %v3597 = vshrl.u32 683565275, %v3596
  %v3598 = vshll.u32 683565275, %v3595
  %v3599 = vshrl.u32 2475754826, %v3596
  %v3600 = vor.u32 %v3598, %v3599
  %v3601 = vshll.u32 2475754826, %v3595
  %v3602 = vshrl.u32 2131351028, %v3596
  %v3603 = vor.u32 %v3601, %v3602
  %v3604 = vshll.u32 2131351028, %v3595
  %v3605 = vshrl.u32 2102212464, %v3596
  %v3606 = vor.u32 %v3604, %v3605
  %v3607 = vshll.u32 2102212464, %v3595
  %v3608 = vshrl.u32 920167782, %v3596
  %v3609 = vor.u32 %v3607, %v3608
  %v3610 = vshll.u32 920167782, %v3595
  %v3611 = vshrl.u32 1326507024, %v3596
  %v3612 = vor.u32 %v3610, %v3611
  %vm3613 = vcmp.lt.s32.totalorder %v3594, 1
  %vm3614 = vcmp.lt.s32.totalorder %v3594, 2
  %vm3615 = vcmp.lt.s32.totalorder %v3594, 3
  %vm3616 = vcmp.lt.s32.totalorder %v3594, 4
  %v3617 = vsel %vm3613, %v3597, %v3600
  %v3618 = vsel %vm3616, %v3606, 2102212464
  %v3619 = vsel %vm3615, %v3603, %v3618
  %v3620 = vsel %vm3614, %v3617, %v3619
  %v3621 = vsel %vm3613, %v3600, %v3603
  %v3622 = vsel %vm3616, %v3609, 920167782
  %v3623 = vsel %vm3615, %v3606, %v3622
  %v3624 = vsel %vm3614, %v3621, %v3623
  %v3625 = vsel %vm3613, %v3603, %v3606
  %v3626 = vsel %vm3616, %v3612, 1326507024
  %v3627 = vsel %vm3615, %v3609, %v3626
  %v3628 = vsel %vm3614, %v3625, %v3627
  %v3629 = vshll.u32 %v3589, 8
  %v3630 = vand.u32 %v3629, 65535
  %v3631 = vshrl.u32 %v3629, 16
  %v3632 = vand.u32 %v3628, 65535
  %v3633 = vshrl.u32 %v3628, 16
  %v3634 = vmul.u32 %v3630, %v3632
  %v3635 = vmul.u32 %v3630, %v3633
  %v3636 = vmul.u32 %v3631, %v3632
  %v3637 = vmul.u32 %v3631, %v3633
  %v3638 = vshll.u32 %v3635, 16
  %v3639 = vshrl.u32 %v3635, 16
  %v3640 = vshll.u32 %v3636, 16
  %v3641 = vshrl.u32 %v3636, 16
  %vm3642 = vc.u32 %v3634, %v3638
  %v3643 = vsel %vm3642, 1, 0
  %v3644 = vadd.s32 %v3634, %v3638
  %v3645 = vadd.s32 %v3637, %v3643
  %vm3646 = vc.u32 %v3644, %v3640
  %v3647 = vsel %vm3646, 1, 0
  %v3648 = vadd.s32 %v3644, %v3640
  %v3649 = vadd.s32 %v3645, %v3647
  %v3650 = vadd.s32 %v3649, %v3639
  %v3651 = vadd.s32 %v3650, %v3641
  %v3652 = vand.u32 %v3629, 65535
  %v3653 = vshrl.u32 %v3629, 16
  %v3654 = vand.u32 %v3624, 65535
  %v3655 = vshrl.u32 %v3624, 16
  %v3656 = vmul.u32 %v3652, %v3654
  %v3657 = vmul.u32 %v3652, %v3655
  %v3658 = vmul.u32 %v3653, %v3654
  %v3659 = vmul.u32 %v3653, %v3655
  %v3660 = vshll.u32 %v3657, 16
  %v3661 = vshrl.u32 %v3657, 16
  %v3662 = vshll.u32 %v3658, 16
  %v3663 = vshrl.u32 %v3658, 16
  %vm3664 = vc.u32 %v3656, %v3660
  %v3665 = vsel %vm3664, 1, 0
  %v3666 = vadd.s32 %v3656, %v3660
  %v3667 = vadd.s32 %v3659, %v3665
  %vm3668 = vc.u32 %v3666, %v3662
  %v3669 = vsel %vm3668, 1, 0
  %v3670 = vadd.s32 %v3666, %v3662
  %v3671 = vadd.s32 %v3667, %v3669
  %v3672 = vadd.s32 %v3671, %v3661
  %v3673 = vadd.s32 %v3672, %v3663
  %v3674 = vmul.u32 %v3629, %v3620
  %v3675 = vadd.s32 %v3651, %v3670
  %vm3676 = vc.u32 %v3651, %v3670
  %v3677 = vadd.s32 %v3673, 1
  %v3678 = vsel %vm3676, %v3677, %v3673
  %v3679 = vadd.s32 %v3674, %v3678
  %v3680 = vadd.s32 %v3679, 536870912
  %v3681 = vshrl.u32 %v3680, 30
  %v3682 = vshll.u32 %v3681, 30
  %v3683 = vsub.s32 %v3679, %v3682
  %vm3684 = vcmp.lt.s32.totalorder %v3683, 0
  %v3685 = vsub.s32 0, %v3683
  %v3686 = vsel %vm3684, %v3685, %v3683
  %v3687 = vclz %v3686
  %v3688 = vsub.s32 %v3687, 2
  %vm3689 = vcmp.gt.s32.totalorder 0, %v3688
  %v3690 = vsel %vm3689, 0, %v3688
  %v3691 = vsub.s32 32, %v3690
  %v3692 = vshll.u32 %v3683, %v3690
  %v3693 = vshrl.u32 %v3675, %v3691
  %v3694 = vor.u32 %v3692, %v3693
  %v3695 = vsub.s32 4294967266, %v3690
  %v3696 = vadd.s32 %v3695, 127
  %v3697 = vshll.u32 %v3696, 23
  %v3698 = vor.u32 4788187, %v3697
  %v3699 = vand.u32 2147483647, %v3698
  %v3701 = vcvt.s32.f32 %v3694
  %v3702 = vmul.f32 %v3701, %v3699
  %v3703 = vxor.u32 %v3702, 2147483648
  %v3704 = vsel %vm3583, %v3703, %v3702
  %v3705 = vsub.s32 4, %v3681
  %v3706 = vsel %vm3583, %v3705, %v3681
  %v3707 = vsel %vm3582, %v2803, %v3704
  %v3708 = vsel %vm3582, 0, %v3706
  %v3709 = vmul.f32 %v3707, %v3707
  %v3710 = vmul.f32 %v3709, -0.001358992
  %v3711 = vadd.f32 %v3710, 0.041655596
  %v3712 = vmul.f32 %v3709, %v3711
  %v3713 = vadd.f32 %v3712, -0.4999988
  %v3714 = vmul.f32 %v3709, %v3713
  %v3715 = vadd.f32 1.0, %v3714
  %v3716 = vmul.f32 %v3707, %v3707
  %v3717 = vmul.f32 %v3716, -0.00019511016
  %v3718 = vadd.f32 %v3717, 0.008332121
  %v3719 = vmul.f32 %v3716, %v3718
  %v3720 = vadd.f32 %v3719, -0.16666654
  %v3721 = vmul.f32 %v3716, %v3720
  %v3722 = vadd.f32 %v3721, 1.0
  %v3723 = vmul.f32 %v3722, %v3707
  %vm3724 = vweird.f32 %v2803
  %v3725 = vadd.s32 %v3708, 3
  %v3726 = vand.u32 %v3725, 3
  %vm3727 = vcmp.lt.s32.totalorder %v3726, 2
  %vm3728 = vcmp.eq.s32.totalorder %v3726, 0
  %v3729 = vxor.u32 %v3723, 2147483648
  %v3730 = vsel %vm3728, %v3715, %v3729
  %vm3731 = vcmp.eq.s32.totalorder %v3726, 2
  %v3732 = vxor.u32 %v3715, 2147483648
  %v3733 = vsel %vm3731, %v3732, %v3723
  %v3734 = vsel %vm3727, %v3730, %v3733
  %v3735 = vsel %vm3724, nan, %v3734
  %v3736 = vand.u32 2147483647, %v2804
  %vm3737 = vcmp.le.f32.partialorder %v3736, 0.7853982
  %vm3738 = vcmp.lt.s32.totalorder %v2804, 0
  %v3739 = vand.u32 %v2804, 2139095040
  %v3740 = vshrl.u32 %v3739, 23
  %v3741 = vsub.s32 %v3740, 127
  %v3742 = vand.u32 2147483647, %v2804
  %v3743 = vand.u32 %v3742, 8388607
  %v3744 = vor.u32 %v3743, 8388608
  %v3745 = vsub.s32 0, %v3744
  %v3746 = vadd.s32 %v3741, 1
  %vm3747 = vcmp.gt.s32.totalorder %v3746, 0
  %v3748 = vsel %vm3747, %v3746, 0
  %v3749 = vshrl.u32 %v3748, 5
  %v3750 = vand.u32 %v3748, 31
  %v3751 = vsub.s32 32, %v3750
  %v3752 = vshrl.u32 683565275, %v3751
  %v3753 = vshll.u32 683565275, %v3750
  %v3754 = vshrl.u32 2475754826, %v3751
  %v3755 = vor.u32 %v3753, %v3754
  %v3756 = vshll.u32 2475754826, %v3750
  %v3757 = vshrl.u32 2131351028, %v3751
  %v3758 = vor.u32 %v3756, %v3757
  %v3759 = vshll.u32 2131351028, %v3750
  %v3760 = vshrl.u32 2102212464, %v3751
  %v3761 = vor.u32 %v3759, %v3760
  %v3762 = vshll.u32 2102212464, %v3750
  %v3763 = vshrl.u32 920167782, %v3751
  %v3764 = vor.u32 %v3762, %v3763
  %v3765 = vshll.u32 920167782, %v3750
  %v3766 = vshrl.u32 1326507024, %v3751
  %v3767 = vor.u32 %v3765, %v3766
  %vm3768 = vcmp.lt.s32.totalorder %v3749, 1
  %vm3769 = vcmp.lt.s32.totalorder %v3749, 2
  %vm3770 = vcmp.lt.s32.totalorder %v3749, 3
  %vm3771 = vcmp.lt.s32.totalorder %v3749, 4
  %v3772 = vsel %vm3768, %v3752, %v3755
  %v3773 = vsel %vm3771, %v3761, 2102212464
  %v3774 = vsel %vm3770, %v3758, %v3773
  %v3775 = vsel %vm3769, %v3772, %v3774
  %v3776 = vsel %vm3768, %v3755, %v3758
  %v3777 = vsel %vm3771, %v3764, 920167782
  %v3778 = vsel %vm3770, %v3761, %v3777
  %v3779 = vsel %vm3769, %v3776, %v3778
  %v3780 = vsel %vm3768, %v3758, %v3761
  %v3781 = vsel %vm3771, %v3767, 1326507024
  %v3782 = vsel %vm3770, %v3764, %v3781
  %v3783 = vsel %vm3769, %v3780, %v3782
  %v3784 = vshll.u32 %v3744, 8
  %v3785 = vand.u32 %v3784, 65535
  %v3786 = vshrl.u32 %v3784, 16
  %v3787 = vand.u32 %v3783, 65535
  %v3788 = vshrl.u32 %v3783, 16
  %v3789 = vmul.u32 %v3785, %v3787
  %v3790 = vmul.u32 %v3785, %v3788
  %v3791 = vmul.u32 %v3786, %v3787
  %v3792 = vmul.u32 %v3786, %v3788
  %v3793 = vshll.u32 %v3790, 16
  %v3794 = vshrl.u32 %v3790, 16
  %v3795 = vshll.u32 %v3791, 16
  %v3796 = vshrl.u32 %v3791, 16
  %vm3797 = vc.u32 %v3789, %v3793
  %v3798 = vsel %vm3797, 1, 0
  %v3799 = vadd.s32 %v3789, %v3793
  %v3800 = vadd.s32 %v3792, %v3798
  %vm3801 = vc.u32 %v3799, %v3795
  %v3802 = vsel %vm3801, 1, 0
  %v3803 = vadd.s32 %v3799, %v3795
  %v3804 = vadd.s32 %v3800, %v3802
  %v3805 = vadd.s32 %v3804, %v3794
  %v3806 = vadd.s32 %v3805, %v3796
  %v3807 = vand.u32 %v3784, 65535
  %v3808 = vshrl.u32 %v3784, 16
  %v3809 = vand.u32 %v3779, 65535
  %v3810 = vshrl.u32 %v3779, 16
  %v3811 = vmul.u32 %v3807, %v3809
  %v3812 = vmul.u32 %v3807, %v3810
  %v3813 = vmul.u32 %v3808, %v3809
  %v3814 = vmul.u32 %v3808, %v3810
  %v3815 = vshll.u32 %v3812, 16
  %v3816 = vshrl.u32 %v3812, 16
  %v3817 = vshll.u32 %v3813, 16
  %v3818 = vshrl.u32 %v3813, 16
  %vm3819 = vc.u32 %v3811, %v3815
  %v3820 = vsel %vm3819, 1, 0
  %v3821 = vadd.s32 %v3811, %v3815
  %v3822 = vadd.s32 %v3814, %v3820
  %vm3823 = vc.u32 %v3821, %v3817
  %v3824 = vsel %vm3823, 1, 0
  %v3825 = vadd.s32 %v3821, %v3817
  %v3826 = vadd.s32 %v3822, %v3824
  %v3827 = vadd.s32 %v3826, %v3816
  %v3828 = vadd.s32 %v3827, %v3818
  %v3829 = vmul.u32 %v3784, %v3775
  %v3830 = vadd.s32 %v3806, %v3825
  %vm3831 = vc.u32 %v3806, %v3825
  %v3832 = vadd.s32 %v3828, 1
  %v3833 = vsel %vm3831, %v3832, %v3828
  %v3834 = vadd.s32 %v3829, %v3833
  %v3835 = vadd.s32 %v3834, 536870912
  %v3836 = vshrl.u32 %v3835, 30
  %v3837 = vshll.u32 %v3836, 30
  %v3838 = vsub.s32 %v3834, %v3837
  %vm3839 = vcmp.lt.s32.totalorder %v3838, 0
  %v3840 = vsub.s32 0, %v3838
  %v3841 = vsel %vm3839, %v3840, %v3838
  %v3842 = vclz %v3841
  %v3843 = vsub.s32 %v3842, 2
  %vm3844 = vcmp.gt.s32.totalorder 0, %v3843
  %v3845 = vsel %vm3844, 0, %v3843
  %v3846 = vsub.s32 32, %v3845
  %v3847 = vshll.u32 %v3838, %v3845
  %v3848 = vshrl.u32 %v3830, %v3846
  %v3849 = vor.u32 %v3847, %v3848
  %v3850 = vsub.s32 4294967266, %v3845
  %v3851 = vadd.s32 %v3850, 127
  %v3852 = vshll.u32 %v3851, 23
  %v3853 = vor.u32 4788187, %v3852
  %v3854 = vand.u32 2147483647, %v3853
  %v3856 = vcvt.s32.f32 %v3849
  %v3857 = vmul.f32 %v3856, %v3854
  %v3858 = vxor.u32 %v3857, 2147483648
  %v3859 = vsel %vm3738, %v3858, %v3857
  %v3860 = vsub.s32 4, %v3836
  %v3861 = vsel %vm3738, %v3860, %v3836
  %v3862 = vsel %vm3737, %v2804, %v3859
  %v3863 = vsel %vm3737, 0, %v3861
  %v3864 = vmul.f32 %v3862, %v3862
  %v3865 = vmul.f32 %v3864, -0.001358992
  %v3866 = vadd.f32 %v3865, 0.041655596
  %v3867 = vmul.f32 %v3864, %v3866
  %v3868 = vadd.f32 %v3867, -0.4999988
  %v3869 = vmul.f32 %v3864, %v3868
  %v3870 = vadd.f32 1.0, %v3869
  %v3871 = vmul.f32 %v3862, %v3862
  %v3872 = vmul.f32 %v3871, -0.00019511016
  %v3873 = vadd.f32 %v3872, 0.008332121
  %v3874 = vmul.f32 %v3871, %v3873
  %v3875 = vadd.f32 %v3874, -0.16666654
  %v3876 = vmul.f32 %v3871, %v3875
  %v3877 = vadd.f32 %v3876, 1.0
  %v3878 = vmul.f32 %v3877, %v3862
  %vm3879 = vweird.f32 %v2804
  %v3880 = vadd.s32 %v3863, 3
  %v3881 = vand.u32 %v3880, 3
  %vm3882 = vcmp.lt.s32.totalorder %v3881, 2
  %vm3883 = vcmp.eq.s32.totalorder %v3881, 0
  %v3884 = vxor.u32 %v3878, 2147483648
  %v3885 = vsel %vm3883, %v3870, %v3884
  %vm3886 = vcmp.eq.s32.totalorder %v3881, 2
  %v3887 = vxor.u32 %v3870, 2147483648
  %v3888 = vsel %vm3886, %v3887, %v3878
  %v3889 = vsel %vm3882, %v3885, %v3888
  %v3890 = vsel %vm3879, nan, %v3889
  %v3891 = vand.u32 2147483647, %v2805
  %vm3892 = vcmp.le.f32.partialorder %v3891, 0.7853982
  %vm3893 = vcmp.lt.s32.totalorder %v2805, 0
  %v3894 = vand.u32 %v2805, 2139095040
  %v3895 = vshrl.u32 %v3894, 23
  %v3896 = vsub.s32 %v3895, 127
  %v3897 = vand.u32 2147483647, %v2805
  %v3898 = vand.u32 %v3897, 8388607
  %v3899 = vor.u32 %v3898, 8388608
  %v3900 = vsub.s32 0, %v3899
  %v3901 = vadd.s32 %v3896, 1
  %vm3902 = vcmp.gt.s32.totalorder %v3901, 0
  %v3903 = vsel %vm3902, %v3901, 0
  %v3904 = vshrl.u32 %v3903, 5
  %v3905 = vand.u32 %v3903, 31
  %v3906 = vsub.s32 32, %v3905
  %v3907 = vshrl.u32 683565275, %v3906
  %v3908 = vshll.u32 683565275, %v3905
  %v3909 = vshrl.u32 2475754826, %v3906
  %v3910 = vor.u32 %v3908, %v3909
  %v3911 = vshll.u32 2475754826, %v3905
  %v3912 = vshrl.u32 2131351028, %v3906
  %v3913 = vor.u32 %v3911, %v3912
  %v3914 = vshll.u32 2131351028, %v3905
  %v3915 = vshrl.u32 2102212464, %v3906
  %v3916 = vor.u32 %v3914, %v3915
  %v3917 = vshll.u32 2102212464, %v3905
  %v3918 = vshrl.u32 920167782, %v3906
  %v3919 = vor.u32 %v3917, %v3918
  %v3920 = vshll.u32 920167782, %v3905
  %v3921 = vshrl.u32 1326507024, %v3906
  %v3922 = vor.u32 %v3920, %v3921
  %vm3923 = vcmp.lt.s32.totalorder %v3904, 1
  %vm3924 = vcmp.lt.s32.totalorder %v3904, 2
  %vm3925 = vcmp.lt.s32.totalorder %v3904, 3
  %vm3926 = vcmp.lt.s32.totalorder %v3904, 4
  %v3927 = vsel %vm3923, %v3907, %v3910
  %v3928 = vsel %vm3926, %v3916, 2102212464
  %v3929 = vsel %vm3925, %v3913, %v3928
  %v3930 = vsel %vm3924, %v3927, %v3929
  %v3931 = vsel %vm3923, %v3910, %v3913
  %v3932 = vsel %vm3926, %v3919, 920167782
  %v3933 = vsel %vm3925, %v3916, %v3932
  %v3934 = vsel %vm3924, %v3931, %v3933
  %v3935 = vsel %vm3923, %v3913, %v3916
  %v3936 = vsel %vm3926, %v3922, 1326507024
  %v3937 = vsel %vm3925, %v3919, %v3936
  %v3938 = vsel %vm3924, %v3935, %v3937
  %v3939 = vshll.u32 %v3899, 8
  %v3940 = vand.u32 %v3939, 65535
  %v3941 = vshrl.u32 %v3939, 16
  %v3942 = vand.u32 %v3938, 65535
  %v3943 = vshrl.u32 %v3938, 16
  %v3944 = vmul.u32 %v3940, %v3942
  %v3945 = vmul.u32 %v3940, %v3943
  %v3946 = vmul.u32 %v3941, %v3942
  %v3947 = vmul.u32 %v3941, %v3943
  %v3948 = vshll.u32 %v3945, 16
  %v3949 = vshrl.u32 %v3945, 16
  %v3950 = vshll.u32 %v3946, 16
  %v3951 = vshrl.u32 %v3946, 16
  %vm3952 = vc.u32 %v3944, %v3948
  %v3953 = vsel %vm3952, 1, 0
  %v3954 = vadd.s32 %v3944, %v3948
  %v3955 = vadd.s32 %v3947, %v3953
  %vm3956 = vc.u32 %v3954, %v3950
  %v3957 = vsel %vm3956, 1, 0
  %v3958 = vadd.s32 %v3954, %v3950
  %v3959 = vadd.s32 %v3955, %v3957
  %v3960 = vadd.s32 %v3959, %v3949
  %v3961 = vadd.s32 %v3960, %v3951
  %v3962 = vand.u32 %v3939, 65535
  %v3963 = vshrl.u32 %v3939, 16
  %v3964 = vand.u32 %v3934, 65535
  %v3965 = vshrl.u32 %v3934, 16
  %v3966 = vmul.u32 %v3962, %v3964
  %v3967 = vmul.u32 %v3962, %v3965
  %v3968 = vmul.u32 %v3963, %v3964
  %v3969 = vmul.u32 %v3963, %v3965
  %v3970 = vshll.u32 %v3967, 16
  %v3971 = vshrl.u32 %v3967, 16
  %v3972 = vshll.u32 %v3968, 16
  %v3973 = vshrl.u32 %v3968, 16
  %vm3974 = vc.u32 %v3966, %v3970
  %v3975 = vsel %vm3974, 1, 0
  %v3976 = vadd.s32 %v3966, %v3970
  %v3977 = vadd.s32 %v3969, %v3975
  %vm3978 = vc.u32 %v3976, %v3972
  %v3979 = vsel %vm3978, 1, 0
  %v3980 = vadd.s32 %v3976, %v3972
  %v3981 = vadd.s32 %v3977, %v3979
  %v3982 = vadd.s32 %v3981, %v3971
  %v3983 = vadd.s32 %v3982, %v3973
  %v3984 = vmul.u32 %v3939, %v3930
  %v3985 = vadd.s32 %v3961, %v3980
  %vm3986 = vc.u32 %v3961, %v3980
  %v3987 = vadd.s32 %v3983, 1
  %v3988 = vsel %vm3986, %v3987, %v3983
  %v3989 = vadd.s32 %v3984, %v3988
  %v3990 = vadd.s32 %v3989, 536870912
  %v3991 = vshrl.u32 %v3990, 30
  %v3992 = vshll.u32 %v3991, 30
  %v3993 = vsub.s32 %v3989, %v3992
  %vm3994 = vcmp.lt.s32.totalorder %v3993, 0
  %v3995 = vsub.s32 0, %v3993
  %v3996 = vsel %vm3994, %v3995, %v3993
  %v3997 = vclz %v3996
  %v3998 = vsub.s32 %v3997, 2
  %vm3999 = vcmp.gt.s32.totalorder 0, %v3998
  %v4000 = vsel %vm3999, 0, %v3998
  %v4001 = vsub.s32 32, %v4000
  %v4002 = vshll.u32 %v3993, %v4000
  %v4003 = vshrl.u32 %v3985, %v4001
  %v4004 = vor.u32 %v4002, %v4003
  %v4005 = vsub.s32 4294967266, %v4000
  %v4006 = vadd.s32 %v4005, 127
  %v4007 = vshll.u32 %v4006, 23
  %v4008 = vor.u32 4788187, %v4007
  %v4009 = vand.u32 2147483647, %v4008
  %v4011 = vcvt.s32.f32 %v4004
  %v4012 = vmul.f32 %v4011, %v4009
  %v4013 = vxor.u32 %v4012, 2147483648
  %v4014 = vsel %vm3893, %v4013, %v4012
  %v4015 = vsub.s32 4, %v3991
  %v4016 = vsel %vm3893, %v4015, %v3991
  %v4017 = vsel %vm3892, %v2805, %v4014
  %v4018 = vsel %vm3892, 0, %v4016
  %v4019 = vmul.f32 %v4017, %v4017
  %v4020 = vmul.f32 %v4019, -0.001358992
  %v4021 = vadd.f32 %v4020, 0.041655596
  %v4022 = vmul.f32 %v4019, %v4021
  %v4023 = vadd.f32 %v4022, -0.4999988
  %v4024 = vmul.f32 %v4019, %v4023
  %v4025 = vadd.f32 1.0, %v4024
  %v4026 = vmul.f32 %v4017, %v4017
  %v4027 = vmul.f32 %v4026, -0.00019511016
  %v4028 = vadd.f32 %v4027, 0.008332121
  %v4029 = vmul.f32 %v4026, %v4028
  %v4030 = vadd.f32 %v4029, -0.16666654
  %v4031 = vmul.f32 %v4026, %v4030
  %v4032 = vadd.f32 %v4031, 1.0
  %v4033 = vmul.f32 %v4032, %v4017
  %vm4034 = vweird.f32 %v2805
  %v4035 = vadd.s32 %v4018, 3
  %v4036 = vand.u32 %v4035, 3
  %vm4037 = vcmp.lt.s32.totalorder %v4036, 2
  %vm4038 = vcmp.eq.s32.totalorder %v4036, 0
  %v4039 = vxor.u32 %v4033, 2147483648
  %v4040 = vsel %vm4038, %v4025, %v4039
  %vm4041 = vcmp.eq.s32.totalorder %v4036, 2
  %v4042 = vxor.u32 %v4025, 2147483648
  %v4043 = vsel %vm4041, %v4042, %v4033
  %v4044 = vsel %vm4037, %v4040, %v4043
  %v4045 = vsel %vm4034, nan, %v4044
  %v4046 = vmul.f32 %v2715, %v2960
  %v4047 = vmul.f32 %v2716, %v3115
  %v4048 = vmul.f32 %v2717, %v3270
  %v4049 = vmul.f32 %v2718, %v3425
  %v4050 = vmul.f32 %v2719, %v3580
  %v4051 = vmul.f32 %v2720, %v3735
  %v4052 = vmul.f32 %v2721, %v3890
  %v4053 = vmul.f32 %v2722, %v4045
  %v4054 = vadd.f32 %v27, %v1366
  %v4055 = vadd.f32 %v28, %v1367
  %v4056 = vadd.f32 %v29, %v1368
  %v4057 = vadd.f32 %v30, %v1369
  %v4058 = vadd.f32 %v31, %v1370
  %v4059 = vadd.f32 %v32, %v1371
  %v4060 = vadd.f32 %v33, %v1372
  %v4061 = vadd.f32 %v34, %v1373
  %v4062 = vadd.f32 %v4054, %v2706
  %v4063 = vadd.f32 %v4055, %v2707
  %v4064 = vadd.f32 %v4056, %v2708
  %v4065 = vadd.f32 %v4057, %v2709
  %v4066 = vadd.f32 %v4058, %v2710
  %v4067 = vadd.f32 %v4059, %v2711
  %v4068 = vadd.f32 %v4060, %v2712
  %v4069 = vadd.f32 %v4061, %v2713
  %v4070 = vadd.f32 %v4062, %v4046
  %v4071 = vadd.f32 %v4063, %v4047
  %v4072 = vadd.f32 %v4064, %v4048
  %v4073 = vadd.f32 %v4065, %v4049
  %v4074 = vadd.f32 %v4066, %v4050
  %v4075 = vadd.f32 %v4067, %v4051
  %v4076 = vadd.f32 %v4068, %v4052
  %v4077 = vadd.f32 %v4069, %v4053
  %v4078 = vpack.c.bf16 %v4070, %v4070
  %v4079 = vpack.c.bf16 %v4071, %v4071
  %v4080 = vpack.c.bf16 %v4072, %v4072
  %v4081 = vpack.c.bf16 %v4073, %v4073
  %v4082 = vpack.c.bf16 %v4074, %v4074
  %v4083 = vpack.c.bf16 %v4075, %v4075
  %v4084 = vpack.c.bf16 %v4076, %v4076
  %v4085 = vpack.c.bf16 %v4077, %v4077
  %s4086 = smul.u32 0, 8
  %s4087 = sld [smem:[#allocation3 + %s4086]]
  %v4088 = vld [vmem:[%s3] sm:$0xf]
  %v4089 = vld [vmem:[%s3 + $0x4] sm:$0xf]
  %v4090 = vld [vmem:[%s3 + $0x8] sm:$0xf]
  %v4091 = vld [vmem:[%s3 + $0xc] sm:$0xf]
  %v4092 = vld [vmem:[%s4] sm:$0xff]
  %v4093 = vperm.slane %v4092, 0
  %v4098 = vunpack.c.l.b16 %v4088
  %v4099 = vunpack.c.l.b16 %v4089
  %v4100 = vunpack.c.l.b16 %v4090
  %v4101 = vunpack.c.l.b16 %v4091
  %v4102 = vpack.c.b16 %v4099, %v4098
  %v4103 = vpack.c.b16 %v4101, %v4100
  %vm4106 = vcmask 261120
  %v4108 = vsel %vm4106, %v4078, 0
  %4110 = vmatpush.bf16.msra.mxu0 0
  %4111 = vmatpush.bf16.msra.mxu0 0
  %4112 = vmatpush.bf16.msra.mxu0 0
  %4113 = vmatpush.bf16.msra.mxu0 0
  %4114 = vmatpush.bf16.msra.mxu0 0
  %4115 = vmatpush.bf16.msra.mxu0 0
  %4116 = vmatpush.bf16.msra.mxu0 %v4103
  %4117 = vmatpush.bf16.msra.mxu0 %v4102
  %4118 = vmatmul.bf16.gmra.mxu0 %v4108
  %v4119 = vpop.f32.mrf.mxu0
  %v4120 = vadd.f32 %v4093, %v4119
  %v4121 = vpop.f32.mrf.mxu0
  %4122 = vdwg.mxu0
  %v4123 = vlaneseq
  %v4124 = vshrl.u32 %v4123, 7
  %v4125 = vstv %s4087
  %vm4126 = vcmp.lt.s32.totalorder %v4124, %v4125
  %v4127 = vsel %vm4126, 1, 0
  %v4128 = vcvt.s32.f32 %v4127
  %p4129 = scmp.gt.s32.totalorder %s4087, 1
  %s4130 = scalar_select %p4129, %s4087, 1
  %s4131 = scvt.s32.f32 %s4130
  %v4132 = vstv %s4131
  %v4133 = vrcp.pop %v4132
  %v4134 = vmul.f32 %v4132, %v4133
  %v4135 = vsub.f32 1.0, %v4134
  %v4136 = vmul.f32 %v4133, %v4135
  %v4137 = vadd.f32 %v4133, %v4136
  %vm4138 = vweird.f32 %v4132
  %vm4139 = vweird.f32 %v4133
  %vm4140 = vmor %vm4138, %vm4139
  %v4141 = vsel %vm4140, %v4133, %v4137
  %v4142 = vand.u32 2147483647, %v4132
  %vm4143 = vcmp.eq.f32.partialorder %v4142, 8.507059e+37
  %v4144 = vand.u32 %v4132, 2147483648
  %v4145 = vor.u32 1.1754944e-38, %v4144
  %v4146 = vsel %vm4143, %v4145, %v4141
  %s4147 = vtos %v4146
  %v4148 = vmul.f32 %v4120, %v4128
  %v4149 = vsel %vm4106, %v4148, 0.0
  %v4150 = vrot.slane %v4149, 4
  %v4151 = vadd.f32 %v4149, %v4150
  %v4152 = vrot.slane %v4151, 2
  %v4153 = vadd.f32 %v4151, %v4152
  %v4154 = vrot.slane %v4153, 1
  %v4155 = vadd.f32 %v4153, %v4154
  %v4156 = vstv %s4147
  %v4157 = vmul.f32 %v4155, %v4156
  %v4158 = vsub.f32 %v4120, %v4157
  %v4159 = vmul.f32 %v4158, %v4128
  %v4160 = vmul.f32 %v4159, %v4159
  %v4161 = vsel %vm4106, %v4160, 0.0
  %v4162 = vrot.slane %v4161, 4
  %v4163 = vadd.f32 %v4161, %v4162
  %v4164 = vrot.slane %v4163, 2
  %v4165 = vadd.f32 %v4163, %v4164
  %v4166 = vrot.slane %v4165, 1
  %v4167 = vadd.f32 %v4165, %v4166
  %v4168 = vmul.f32 %v4167, %v4156
  %v4169 = vadd.f32 %v4168, 1e-05
  %v4170 = vrsqrt.pop %v4169
  %v4171 = vmul.f32 %v4170, %v4169
  %v4172 = vmul.f32 %v4171, %v4170
  %v4173 = vmul.f32 0.5, %v4172
  %v4174 = vsub.f32 1.5, %v4173
  %v4175 = vmul.f32 %v4170, %v4174
  %vm4176 = vweird.f32 %v4169
  %vm4177 = vweird.f32 %v4170
  %vm4178 = vmor %vm4176, %vm4177
  %v4179 = vsel %vm4178, %v4170, %v4175
  %v4180 = vmul.f32 %v4158, %v4179
  %v4181 = vperm.slane %v4092, 1
  %v4182 = vmul.f32 %v4180, %v4181
  %v4183 = vperm.slane %v4092, 2
  %v4184 = vadd.f32 %v4182, %v4183
  %p4185 = scmp.gt.s32.totalorder %s4087, 1
  %s4186 = scalar_select %p4185, 1, 0
  %s4187 = scvt.s32.f32 %s4186
  %v4188 = vstv %s4187
  %v4189 = vmul.f32 %v4188, %v4184
  %s4190 = ssub.f32 1.0, %s4187
  %v4191 = vstv %s4190
  %v4192 = vmul.f32 %v4191, %v4120
  %v4193 = vadd.f32 %v4189, %v4192
  %v4194 = vmax.f32 %v4193, 0.0
  %v4195 = vmul.f32 %v4194, %v4128
  %4196 = vst.msk [vmem:[%s5] sm:$0xff] %vm4106, %v4195
  %s4197 = sadd.s32 %s4086, 1
  %s4198 = sld [smem:[#allocation3 + %s4197]]
  %s4199 = scalar_lea.vmem %s3, 16
  %v4200 = vld [vmem:[%s4199] sm:$0xf]
  %v4201 = vld [vmem:[%s4199 + $0x4] sm:$0xf]
  %v4202 = vld [vmem:[%s4199 + $0x8] sm:$0xf]
  %v4203 = vld [vmem:[%s4199 + $0xc] sm:$0xf]
  %s4204 = scalar_lea.vmem %s4, 8
  %v4205 = vld [vmem:[%s4204] sm:$0xff]
  %v4206 = vperm.slane %v4205, 0
  %v4211 = vunpack.c.l.b16 %v4200
  %v4212 = vunpack.c.l.b16 %v4201
  %v4213 = vunpack.c.l.b16 %v4202
  %v4214 = vunpack.c.l.b16 %v4203
  %v4215 = vpack.c.b16 %v4212, %v4211
  %v4216 = vpack.c.b16 %v4214, %v4213
  %v4220 = vsel %vm4106, %v4079, 0
  %4222 = vmatpush.bf16.msra.mxu0 0
  %4223 = vmatpush.bf16.msra.mxu0 0
  %4224 = vmatpush.bf16.msra.mxu0 0
  %4225 = vmatpush.bf16.msra.mxu0 0
  %4226 = vmatpush.bf16.msra.mxu0 0
  %4227 = vmatpush.bf16.msra.mxu0 0
  %4228 = vmatpush.bf16.msra.mxu0 %v4216
  %4229 = vmatpush.bf16.msra.mxu0 %v4215
  %4230 = vmatmul.bf16.gmra.mxu0 %v4220
  %v4231 = vpop.f32.mrf.mxu0
  %v4232 = vadd.f32 %v4206, %v4231
  %v4233 = vpop.f32.mrf.mxu0
  %4234 = vdwg.mxu0
  %v4235 = vstv %s4198
  %vm4236 = vcmp.lt.s32.totalorder %v4124, %v4235
  %v4237 = vsel %vm4236, 1, 0
  %v4238 = vcvt.s32.f32 %v4237
  %p4239 = scmp.gt.s32.totalorder %s4198, 1
  %s4240 = scalar_select %p4239, %s4198, 1
  %s4241 = scvt.s32.f32 %s4240
  %v4242 = vstv %s4241
  %v4243 = vrcp.pop %v4242
  %v4244 = vmul.f32 %v4242, %v4243
  %v4245 = vsub.f32 1.0, %v4244
  %v4246 = vmul.f32 %v4243, %v4245
  %v4247 = vadd.f32 %v4243, %v4246
  %vm4248 = vweird.f32 %v4242
  %vm4249 = vweird.f32 %v4243
  %vm4250 = vmor %vm4248, %vm4249
  %v4251 = vsel %vm4250, %v4243, %v4247
  %v4252 = vand.u32 2147483647, %v4242
  %vm4253 = vcmp.eq.f32.partialorder %v4252, 8.507059e+37
  %v4254 = vand.u32 %v4242, 2147483648
  %v4255 = vor.u32 1.1754944e-38, %v4254
  %v4256 = vsel %vm4253, %v4255, %v4251
  %s4257 = vtos %v4256
  %v4258 = vmul.f32 %v4232, %v4238
  %v4259 = vsel %vm4106, %v4258, 0.0
  %v4260 = vrot.slane %v4259, 4
  %v4261 = vadd.f32 %v4259, %v4260
  %v4262 = vrot.slane %v4261, 2
  %v4263 = vadd.f32 %v4261, %v4262
  %v4264 = vrot.slane %v4263, 1
  %v4265 = vadd.f32 %v4263, %v4264
  %v4266 = vstv %s4257
  %v4267 = vmul.f32 %v4265, %v4266
  %v4268 = vsub.f32 %v4232, %v4267
  %v4269 = vmul.f32 %v4268, %v4238
  %v4270 = vmul.f32 %v4269, %v4269
  %v4271 = vsel %vm4106, %v4270, 0.0
  %v4272 = vrot.slane %v4271, 4
  %v4273 = vadd.f32 %v4271, %v4272
  %v4274 = vrot.slane %v4273, 2
  %v4275 = vadd.f32 %v4273, %v4274
  %v4276 = vrot.slane %v4275, 1
  %v4277 = vadd.f32 %v4275, %v4276
  %v4278 = vmul.f32 %v4277, %v4266
  %v4279 = vadd.f32 %v4278, 1e-05
  %v4280 = vrsqrt.pop %v4279
  %v4281 = vmul.f32 %v4280, %v4279
  %v4282 = vmul.f32 %v4281, %v4280
  %v4283 = vmul.f32 0.5, %v4282
  %v4284 = vsub.f32 1.5, %v4283
  %v4285 = vmul.f32 %v4280, %v4284
  %vm4286 = vweird.f32 %v4279
  %vm4287 = vweird.f32 %v4280
  %vm4288 = vmor %vm4286, %vm4287
  %v4289 = vsel %vm4288, %v4280, %v4285
  %v4290 = vmul.f32 %v4268, %v4289
  %v4291 = vperm.slane %v4205, 1
  %v4292 = vmul.f32 %v4290, %v4291
  %v4293 = vperm.slane %v4205, 2
  %v4294 = vadd.f32 %v4292, %v4293
  %p4295 = scmp.gt.s32.totalorder %s4198, 1
  %s4296 = scalar_select %p4295, 1, 0
  %s4297 = scvt.s32.f32 %s4296
  %v4298 = vstv %s4297
  %v4299 = vmul.f32 %v4298, %v4294
  %s4300 = ssub.f32 1.0, %s4297
  %v4301 = vstv %s4300
  %v4302 = vmul.f32 %v4301, %v4232
  %v4303 = vadd.f32 %v4299, %v4302
  %v4304 = vmax.f32 %v4303, 0.0
  %v4305 = vmul.f32 %v4304, %v4238
  %4306 = vst.msk [vmem:[%s5 + $0x8] sm:$0xff] %vm4106, %v4305
  %s4307 = sadd.s32 %s4086, 2
  %s4308 = sld [smem:[#allocation3 + %s4307]]
  %s4309 = scalar_lea.vmem %s3, 32
  %v4310 = vld [vmem:[%s4309] sm:$0xf]
  %v4311 = vld [vmem:[%s4309 + $0x4] sm:$0xf]
  %v4312 = vld [vmem:[%s4309 + $0x8] sm:$0xf]
  %v4313 = vld [vmem:[%s4309 + $0xc] sm:$0xf]
  %s4314 = scalar_lea.vmem %s4, 16
  %v4315 = vld [vmem:[%s4314] sm:$0xff]
  %v4316 = vperm.slane %v4315, 0
  %v4321 = vunpack.c.l.b16 %v4310
  %v4322 = vunpack.c.l.b16 %v4311
  %v4323 = vunpack.c.l.b16 %v4312
  %v4324 = vunpack.c.l.b16 %v4313
  %v4325 = vpack.c.b16 %v4322, %v4321
  %v4326 = vpack.c.b16 %v4324, %v4323
  %v4330 = vsel %vm4106, %v4080, 0
  %4332 = vmatpush.bf16.msra.mxu0 0
  %4333 = vmatpush.bf16.msra.mxu0 0
  %4334 = vmatpush.bf16.msra.mxu0 0
  %4335 = vmatpush.bf16.msra.mxu0 0
  %4336 = vmatpush.bf16.msra.mxu0 0
  %4337 = vmatpush.bf16.msra.mxu0 0
  %4338 = vmatpush.bf16.msra.mxu0 %v4326
  %4339 = vmatpush.bf16.msra.mxu0 %v4325
  %4340 = vmatmul.bf16.gmra.mxu0 %v4330
  %v4341 = vpop.f32.mrf.mxu0
  %v4342 = vadd.f32 %v4316, %v4341
  %v4343 = vpop.f32.mrf.mxu0
  %4344 = vdwg.mxu0
  %v4345 = vstv %s4308
  %vm4346 = vcmp.lt.s32.totalorder %v4124, %v4345
  %v4347 = vsel %vm4346, 1, 0
  %v4348 = vcvt.s32.f32 %v4347
  %p4349 = scmp.gt.s32.totalorder %s4308, 1
  %s4350 = scalar_select %p4349, %s4308, 1
  %s4351 = scvt.s32.f32 %s4350
  %v4352 = vstv %s4351
  %v4353 = vrcp.pop %v4352
  %v4354 = vmul.f32 %v4352, %v4353
  %v4355 = vsub.f32 1.0, %v4354
  %v4356 = vmul.f32 %v4353, %v4355
  %v4357 = vadd.f32 %v4353, %v4356
  %vm4358 = vweird.f32 %v4352
  %vm4359 = vweird.f32 %v4353
  %vm4360 = vmor %vm4358, %vm4359
  %v4361 = vsel %vm4360, %v4353, %v4357
  %v4362 = vand.u32 2147483647, %v4352
  %vm4363 = vcmp.eq.f32.partialorder %v4362, 8.507059e+37
  %v4364 = vand.u32 %v4352, 2147483648
  %v4365 = vor.u32 1.1754944e-38, %v4364
  %v4366 = vsel %vm4363, %v4365, %v4361
  %s4367 = vtos %v4366
  %v4368 = vmul.f32 %v4342, %v4348
  %v4369 = vsel %vm4106, %v4368, 0.0
  %v4370 = vrot.slane %v4369, 4
  %v4371 = vadd.f32 %v4369, %v4370
  %v4372 = vrot.slane %v4371, 2
  %v4373 = vadd.f32 %v4371, %v4372
  %v4374 = vrot.slane %v4373, 1
  %v4375 = vadd.f32 %v4373, %v4374
  %v4376 = vstv %s4367
  %v4377 = vmul.f32 %v4375, %v4376
  %v4378 = vsub.f32 %v4342, %v4377
  %v4379 = vmul.f32 %v4378, %v4348
  %v4380 = vmul.f32 %v4379, %v4379
  %v4381 = vsel %vm4106, %v4380, 0.0
  %v4382 = vrot.slane %v4381, 4
  %v4383 = vadd.f32 %v4381, %v4382
  %v4384 = vrot.slane %v4383, 2
  %v4385 = vadd.f32 %v4383, %v4384
  %v4386 = vrot.slane %v4385, 1
  %v4387 = vadd.f32 %v4385, %v4386
  %v4388 = vmul.f32 %v4387, %v4376
  %v4389 = vadd.f32 %v4388, 1e-05
  %v4390 = vrsqrt.pop %v4389
  %v4391 = vmul.f32 %v4390, %v4389
  %v4392 = vmul.f32 %v4391, %v4390
  %v4393 = vmul.f32 0.5, %v4392
  %v4394 = vsub.f32 1.5, %v4393
  %v4395 = vmul.f32 %v4390, %v4394
  %vm4396 = vweird.f32 %v4389
  %vm4397 = vweird.f32 %v4390
  %vm4398 = vmor %vm4396, %vm4397
  %v4399 = vsel %vm4398, %v4390, %v4395
  %v4400 = vmul.f32 %v4378, %v4399
  %v4401 = vperm.slane %v4315, 1
  %v4402 = vmul.f32 %v4400, %v4401
  %v4403 = vperm.slane %v4315, 2
  %v4404 = vadd.f32 %v4402, %v4403
  %p4405 = scmp.gt.s32.totalorder %s4308, 1
  %s4406 = scalar_select %p4405, 1, 0
  %s4407 = scvt.s32.f32 %s4406
  %v4408 = vstv %s4407
  %v4409 = vmul.f32 %v4408, %v4404
  %s4410 = ssub.f32 1.0, %s4407
  %v4411 = vstv %s4410
  %v4412 = vmul.f32 %v4411, %v4342
  %v4413 = vadd.f32 %v4409, %v4412
  %v4414 = vmax.f32 %v4413, 0.0
  %v4415 = vmul.f32 %v4414, %v4348
  %4416 = vst.msk [vmem:[%s5 + $0x10] sm:$0xff] %vm4106, %v4415
  %s4417 = sadd.s32 %s4086, 3
  %s4418 = sld [smem:[#allocation3 + %s4417]]
  %s4419 = scalar_lea.vmem %s3, 48
  %v4420 = vld [vmem:[%s4419] sm:$0xf]
  %v4421 = vld [vmem:[%s4419 + $0x4] sm:$0xf]
  %v4422 = vld [vmem:[%s4419 + $0x8] sm:$0xf]
  %v4423 = vld [vmem:[%s4419 + $0xc] sm:$0xf]
  %s4424 = scalar_lea.vmem %s4, 24
  %v4425 = vld [vmem:[%s4424] sm:$0xff]
  %v4426 = vperm.slane %v4425, 0
  %v4431 = vunpack.c.l.b16 %v4420
  %v4432 = vunpack.c.l.b16 %v4421
  %v4433 = vunpack.c.l.b16 %v4422
  %v4434 = vunpack.c.l.b16 %v4423
  %v4435 = vpack.c.b16 %v4432, %v4431
  %v4436 = vpack.c.b16 %v4434, %v4433
  %v4440 = vsel %vm4106, %v4081, 0
  %4442 = vmatpush.bf16.msra.mxu0 0
  %4443 = vmatpush.bf16.msra.mxu0 0
  %4444 = vmatpush.bf16.msra.mxu0 0
  %4445 = vmatpush.bf16.msra.mxu0 0
  %4446 = vmatpush.bf16.msra.mxu0 0
  %4447 = vmatpush.bf16.msra.mxu0 0
  %4448 = vmatpush.bf16.msra.mxu0 %v4436
  %4449 = vmatpush.bf16.msra.mxu0 %v4435
  %4450 = vmatmul.bf16.gmra.mxu0 %v4440
  %v4451 = vpop.f32.mrf.mxu0
  %v4452 = vadd.f32 %v4426, %v4451
  %v4453 = vpop.f32.mrf.mxu0
  %4454 = vdwg.mxu0
  %v4455 = vstv %s4418
  %vm4456 = vcmp.lt.s32.totalorder %v4124, %v4455
  %v4457 = vsel %vm4456, 1, 0
  %v4458 = vcvt.s32.f32 %v4457
  %p4459 = scmp.gt.s32.totalorder %s4418, 1
  %s4460 = scalar_select %p4459, %s4418, 1
  %s4461 = scvt.s32.f32 %s4460
  %v4462 = vstv %s4461
  %v4463 = vrcp.pop %v4462
  %v4464 = vmul.f32 %v4462, %v4463
  %v4465 = vsub.f32 1.0, %v4464
  %v4466 = vmul.f32 %v4463, %v4465
  %v4467 = vadd.f32 %v4463, %v4466
  %vm4468 = vweird.f32 %v4462
  %vm4469 = vweird.f32 %v4463
  %vm4470 = vmor %vm4468, %vm4469
  %v4471 = vsel %vm4470, %v4463, %v4467
  %v4472 = vand.u32 2147483647, %v4462
  %vm4473 = vcmp.eq.f32.partialorder %v4472, 8.507059e+37
  %v4474 = vand.u32 %v4462, 2147483648
  %v4475 = vor.u32 1.1754944e-38, %v4474
  %v4476 = vsel %vm4473, %v4475, %v4471
  %s4477 = vtos %v4476
  %v4478 = vmul.f32 %v4452, %v4458
  %v4479 = vsel %vm4106, %v4478, 0.0
  %v4480 = vrot.slane %v4479, 4
  %v4481 = vadd.f32 %v4479, %v4480
  %v4482 = vrot.slane %v4481, 2
  %v4483 = vadd.f32 %v4481, %v4482
  %v4484 = vrot.slane %v4483, 1
  %v4485 = vadd.f32 %v4483, %v4484
  %v4486 = vstv %s4477
  %v4487 = vmul.f32 %v4485, %v4486
  %v4488 = vsub.f32 %v4452, %v4487
  %v4489 = vmul.f32 %v4488, %v4458
  %v4490 = vmul.f32 %v4489, %v4489
  %v4491 = vsel %vm4106, %v4490, 0.0
  %v4492 = vrot.slane %v4491, 4
  %v4493 = vadd.f32 %v4491, %v4492
  %v4494 = vrot.slane %v4493, 2
  %v4495 = vadd.f32 %v4493, %v4494
  %v4496 = vrot.slane %v4495, 1
  %v4497 = vadd.f32 %v4495, %v4496
  %v4498 = vmul.f32 %v4497, %v4486
  %v4499 = vadd.f32 %v4498, 1e-05
  %v4500 = vrsqrt.pop %v4499
  %v4501 = vmul.f32 %v4500, %v4499
  %v4502 = vmul.f32 %v4501, %v4500
  %v4503 = vmul.f32 0.5, %v4502
  %v4504 = vsub.f32 1.5, %v4503
  %v4505 = vmul.f32 %v4500, %v4504
  %vm4506 = vweird.f32 %v4499
  %vm4507 = vweird.f32 %v4500
  %vm4508 = vmor %vm4506, %vm4507
  %v4509 = vsel %vm4508, %v4500, %v4505
  %v4510 = vmul.f32 %v4488, %v4509
  %v4511 = vperm.slane %v4425, 1
  %v4512 = vmul.f32 %v4510, %v4511
  %v4513 = vperm.slane %v4425, 2
  %v4514 = vadd.f32 %v4512, %v4513
  %p4515 = scmp.gt.s32.totalorder %s4418, 1
  %s4516 = scalar_select %p4515, 1, 0
  %s4517 = scvt.s32.f32 %s4516
  %v4518 = vstv %s4517
  %v4519 = vmul.f32 %v4518, %v4514
  %s4520 = ssub.f32 1.0, %s4517
  %v4521 = vstv %s4520
  %v4522 = vmul.f32 %v4521, %v4452
  %v4523 = vadd.f32 %v4519, %v4522
  %v4524 = vmax.f32 %v4523, 0.0
  %v4525 = vmul.f32 %v4524, %v4458
  %4526 = vst.msk [vmem:[%s5 + $0x18] sm:$0xff] %vm4106, %v4525
  %s4527 = sadd.s32 %s4086, 4
  %s4528 = sld [smem:[#allocation3 + %s4527]]
  %s4529 = scalar_lea.vmem %s3, 64
  %v4530 = vld [vmem:[%s4529] sm:$0xf]
  %v4531 = vld [vmem:[%s4529 + $0x4] sm:$0xf]
  %v4532 = vld [vmem:[%s4529 + $0x8] sm:$0xf]
  %v4533 = vld [vmem:[%s4529 + $0xc] sm:$0xf]
  %s4534 = scalar_lea.vmem %s4, 32
  %v4535 = vld [vmem:[%s4534] sm:$0xff]
  %v4536 = vperm.slane %v4535, 0
  %v4541 = vunpack.c.l.b16 %v4530
  %v4542 = vunpack.c.l.b16 %v4531
  %v4543 = vunpack.c.l.b16 %v4532
  %v4544 = vunpack.c.l.b16 %v4533
  %v4545 = vpack.c.b16 %v4542, %v4541
  %v4546 = vpack.c.b16 %v4544, %v4543
  %v4550 = vsel %vm4106, %v4082, 0
  %4552 = vmatpush.bf16.msra.mxu0 0
  %4553 = vmatpush.bf16.msra.mxu0 0
  %4554 = vmatpush.bf16.msra.mxu0 0
  %4555 = vmatpush.bf16.msra.mxu0 0
  %4556 = vmatpush.bf16.msra.mxu0 0
  %4557 = vmatpush.bf16.msra.mxu0 0
  %4558 = vmatpush.bf16.msra.mxu0 %v4546
  %4559 = vmatpush.bf16.msra.mxu0 %v4545
  %4560 = vmatmul.bf16.gmra.mxu0 %v4550
  %v4561 = vpop.f32.mrf.mxu0
  %v4562 = vadd.f32 %v4536, %v4561
  %v4563 = vpop.f32.mrf.mxu0
  %4564 = vdwg.mxu0
  %v4565 = vstv %s4528
  %vm4566 = vcmp.lt.s32.totalorder %v4124, %v4565
  %v4567 = vsel %vm4566, 1, 0
  %v4568 = vcvt.s32.f32 %v4567
  %p4569 = scmp.gt.s32.totalorder %s4528, 1
  %s4570 = scalar_select %p4569, %s4528, 1
  %s4571 = scvt.s32.f32 %s4570
  %v4572 = vstv %s4571
  %v4573 = vrcp.pop %v4572
  %v4574 = vmul.f32 %v4572, %v4573
  %v4575 = vsub.f32 1.0, %v4574
  %v4576 = vmul.f32 %v4573, %v4575
  %v4577 = vadd.f32 %v4573, %v4576
  %vm4578 = vweird.f32 %v4572
  %vm4579 = vweird.f32 %v4573
  %vm4580 = vmor %vm4578, %vm4579
  %v4581 = vsel %vm4580, %v4573, %v4577
  %v4582 = vand.u32 2147483647, %v4572
  %vm4583 = vcmp.eq.f32.partialorder %v4582, 8.507059e+37
  %v4584 = vand.u32 %v4572, 2147483648
  %v4585 = vor.u32 1.1754944e-38, %v4584
  %v4586 = vsel %vm4583, %v4585, %v4581
  %s4587 = vtos %v4586
  %v4588 = vmul.f32 %v4562, %v4568
  %v4589 = vsel %vm4106, %v4588, 0.0
  %v4590 = vrot.slane %v4589, 4
  %v4591 = vadd.f32 %v4589, %v4590
  %v4592 = vrot.slane %v4591, 2
  %v4593 = vadd.f32 %v4591, %v4592
  %v4594 = vrot.slane %v4593, 1
  %v4595 = vadd.f32 %v4593, %v4594
  %v4596 = vstv %s4587
  %v4597 = vmul.f32 %v4595, %v4596
  %v4598 = vsub.f32 %v4562, %v4597
  %v4599 = vmul.f32 %v4598, %v4568
  %v4600 = vmul.f32 %v4599, %v4599
  %v4601 = vsel %vm4106, %v4600, 0.0
  %v4602 = vrot.slane %v4601, 4
  %v4603 = vadd.f32 %v4601, %v4602
  %v4604 = vrot.slane %v4603, 2
  %v4605 = vadd.f32 %v4603, %v4604
  %v4606 = vrot.slane %v4605, 1
  %v4607 = vadd.f32 %v4605, %v4606
  %v4608 = vmul.f32 %v4607, %v4596
  %v4609 = vadd.f32 %v4608, 1e-05
  %v4610 = vrsqrt.pop %v4609
  %v4611 = vmul.f32 %v4610, %v4609
  %v4612 = vmul.f32 %v4611, %v4610
  %v4613 = vmul.f32 0.5, %v4612
  %v4614 = vsub.f32 1.5, %v4613
  %v4615 = vmul.f32 %v4610, %v4614
  %vm4616 = vweird.f32 %v4609
  %vm4617 = vweird.f32 %v4610
  %vm4618 = vmor %vm4616, %vm4617
  %v4619 = vsel %vm4618, %v4610, %v4615
  %v4620 = vmul.f32 %v4598, %v4619
  %v4621 = vperm.slane %v4535, 1
  %v4622 = vmul.f32 %v4620, %v4621
  %v4623 = vperm.slane %v4535, 2
  %v4624 = vadd.f32 %v4622, %v4623
  %p4625 = scmp.gt.s32.totalorder %s4528, 1
  %s4626 = scalar_select %p4625, 1, 0
  %s4627 = scvt.s32.f32 %s4626
  %v4628 = vstv %s4627
  %v4629 = vmul.f32 %v4628, %v4624
  %s4630 = ssub.f32 1.0, %s4627
  %v4631 = vstv %s4630
  %v4632 = vmul.f32 %v4631, %v4562
  %v4633 = vadd.f32 %v4629, %v4632
  %v4634 = vmax.f32 %v4633, 0.0
  %v4635 = vmul.f32 %v4634, %v4568
  %4636 = vst.msk [vmem:[%s5 + $0x20] sm:$0xff] %vm4106, %v4635
  %s4637 = sadd.s32 %s4086, 5
  %s4638 = sld [smem:[#allocation3 + %s4637]]
  %s4639 = scalar_lea.vmem %s3, 80
  %v4640 = vld [vmem:[%s4639] sm:$0xf]
  %v4641 = vld [vmem:[%s4639 + $0x4] sm:$0xf]
  %v4642 = vld [vmem:[%s4639 + $0x8] sm:$0xf]
  %v4643 = vld [vmem:[%s4639 + $0xc] sm:$0xf]
  %s4644 = scalar_lea.vmem %s4, 40
  %v4645 = vld [vmem:[%s4644] sm:$0xff]
  %v4646 = vperm.slane %v4645, 0
  %v4651 = vunpack.c.l.b16 %v4640
  %v4652 = vunpack.c.l.b16 %v4641
  %v4653 = vunpack.c.l.b16 %v4642
  %v4654 = vunpack.c.l.b16 %v4643
  %v4655 = vpack.c.b16 %v4652, %v4651
  %v4656 = vpack.c.b16 %v4654, %v4653
  %v4660 = vsel %vm4106, %v4083, 0
  %4662 = vmatpush.bf16.msra.mxu0 0
  %4663 = vmatpush.bf16.msra.mxu0 0
  %4664 = vmatpush.bf16.msra.mxu0 0
  %4665 = vmatpush.bf16.msra.mxu0 0
  %4666 = vmatpush.bf16.msra.mxu0 0
  %4667 = vmatpush.bf16.msra.mxu0 0
  %4668 = vmatpush.bf16.msra.mxu0 %v4656
  %4669 = vmatpush.bf16.msra.mxu0 %v4655
  %4670 = vmatmul.bf16.gmra.mxu0 %v4660
  %v4671 = vpop.f32.mrf.mxu0
  %v4672 = vadd.f32 %v4646, %v4671
  %v4673 = vpop.f32.mrf.mxu0
  %4674 = vdwg.mxu0
  %v4675 = vstv %s4638
  %vm4676 = vcmp.lt.s32.totalorder %v4124, %v4675
  %v4677 = vsel %vm4676, 1, 0
  %v4678 = vcvt.s32.f32 %v4677
  %p4679 = scmp.gt.s32.totalorder %s4638, 1
  %s4680 = scalar_select %p4679, %s4638, 1
  %s4681 = scvt.s32.f32 %s4680
  %v4682 = vstv %s4681
  %v4683 = vrcp.pop %v4682
  %v4684 = vmul.f32 %v4682, %v4683
  %v4685 = vsub.f32 1.0, %v4684
  %v4686 = vmul.f32 %v4683, %v4685
  %v4687 = vadd.f32 %v4683, %v4686
  %vm4688 = vweird.f32 %v4682
  %vm4689 = vweird.f32 %v4683
  %vm4690 = vmor %vm4688, %vm4689
  %v4691 = vsel %vm4690, %v4683, %v4687
  %v4692 = vand.u32 2147483647, %v4682
  %vm4693 = vcmp.eq.f32.partialorder %v4692, 8.507059e+37
  %v4694 = vand.u32 %v4682, 2147483648
  %v4695 = vor.u32 1.1754944e-38, %v4694
  %v4696 = vsel %vm4693, %v4695, %v4691
  %s4697 = vtos %v4696
  %v4698 = vmul.f32 %v4672, %v4678
  %v4699 = vsel %vm4106, %v4698, 0.0
  %v4700 = vrot.slane %v4699, 4
  %v4701 = vadd.f32 %v4699, %v4700
  %v4702 = vrot.slane %v4701, 2
  %v4703 = vadd.f32 %v4701, %v4702
  %v4704 = vrot.slane %v4703, 1
  %v4705 = vadd.f32 %v4703, %v4704
  %v4706 = vstv %s4697
  %v4707 = vmul.f32 %v4705, %v4706
  %v4708 = vsub.f32 %v4672, %v4707
  %v4709 = vmul.f32 %v4708, %v4678
  %v4710 = vmul.f32 %v4709, %v4709
  %v4711 = vsel %vm4106, %v4710, 0.0
  %v4712 = vrot.slane %v4711, 4
  %v4713 = vadd.f32 %v4711, %v4712
  %v4714 = vrot.slane %v4713, 2
  %v4715 = vadd.f32 %v4713, %v4714
  %v4716 = vrot.slane %v4715, 1
  %v4717 = vadd.f32 %v4715, %v4716
  %v4718 = vmul.f32 %v4717, %v4706
  %v4719 = vadd.f32 %v4718, 1e-05
  %v4720 = vrsqrt.pop %v4719
  %v4721 = vmul.f32 %v4720, %v4719
  %v4722 = vmul.f32 %v4721, %v4720
  %v4723 = vmul.f32 0.5, %v4722
  %v4724 = vsub.f32 1.5, %v4723
  %v4725 = vmul.f32 %v4720, %v4724
  %vm4726 = vweird.f32 %v4719
  %vm4727 = vweird.f32 %v4720
  %vm4728 = vmor %vm4726, %vm4727
  %v4729 = vsel %vm4728, %v4720, %v4725
  %v4730 = vmul.f32 %v4708, %v4729
  %v4731 = vperm.slane %v4645, 1
  %v4732 = vmul.f32 %v4730, %v4731
  %v4733 = vperm.slane %v4645, 2
  %v4734 = vadd.f32 %v4732, %v4733
  %p4735 = scmp.gt.s32.totalorder %s4638, 1
  %s4736 = scalar_select %p4735, 1, 0
  %s4737 = scvt.s32.f32 %s4736
  %v4738 = vstv %s4737
  %v4739 = vmul.f32 %v4738, %v4734
  %s4740 = ssub.f32 1.0, %s4737
  %v4741 = vstv %s4740
  %v4742 = vmul.f32 %v4741, %v4672
  %v4743 = vadd.f32 %v4739, %v4742
  %v4744 = vmax.f32 %v4743, 0.0
  %v4745 = vmul.f32 %v4744, %v4678
  %4746 = vst.msk [vmem:[%s5 + $0x28] sm:$0xff] %vm4106, %v4745
  %s4747 = sadd.s32 %s4086, 6
  %s4748 = sld [smem:[#allocation3 + %s4747]]
  %s4749 = scalar_lea.vmem %s3, 96
  %v4750 = vld [vmem:[%s4749] sm:$0xf]
  %v4751 = vld [vmem:[%s4749 + $0x4] sm:$0xf]
  %v4752 = vld [vmem:[%s4749 + $0x8] sm:$0xf]
  %v4753 = vld [vmem:[%s4749 + $0xc] sm:$0xf]
  %s4754 = scalar_lea.vmem %s4, 48
  %v4755 = vld [vmem:[%s4754] sm:$0xff]
  %v4756 = vperm.slane %v4755, 0
  %v4761 = vunpack.c.l.b16 %v4750
  %v4762 = vunpack.c.l.b16 %v4751
  %v4763 = vunpack.c.l.b16 %v4752
  %v4764 = vunpack.c.l.b16 %v4753
  %v4765 = vpack.c.b16 %v4762, %v4761
  %v4766 = vpack.c.b16 %v4764, %v4763
  %v4770 = vsel %vm4106, %v4084, 0
  %4772 = vmatpush.bf16.msra.mxu0 0
  %4773 = vmatpush.bf16.msra.mxu0 0
  %4774 = vmatpush.bf16.msra.mxu0 0
  %4775 = vmatpush.bf16.msra.mxu0 0
  %4776 = vmatpush.bf16.msra.mxu0 0
  %4777 = vmatpush.bf16.msra.mxu0 0
  %4778 = vmatpush.bf16.msra.mxu0 %v4766
  %4779 = vmatpush.bf16.msra.mxu0 %v4765
  %4780 = vmatmul.bf16.gmra.mxu0 %v4770
  %v4781 = vpop.f32.mrf.mxu0
  %v4782 = vadd.f32 %v4756, %v4781
  %v4783 = vpop.f32.mrf.mxu0
  %4784 = vdwg.mxu0
  %v4785 = vstv %s4748
  %vm4786 = vcmp.lt.s32.totalorder %v4124, %v4785
  %v4787 = vsel %vm4786, 1, 0
  %v4788 = vcvt.s32.f32 %v4787
  %p4789 = scmp.gt.s32.totalorder %s4748, 1
  %s4790 = scalar_select %p4789, %s4748, 1
  %s4791 = scvt.s32.f32 %s4790
  %v4792 = vstv %s4791
  %v4793 = vrcp.pop %v4792
  %v4794 = vmul.f32 %v4792, %v4793
  %v4795 = vsub.f32 1.0, %v4794
  %v4796 = vmul.f32 %v4793, %v4795
  %v4797 = vadd.f32 %v4793, %v4796
  %vm4798 = vweird.f32 %v4792
  %vm4799 = vweird.f32 %v4793
  %vm4800 = vmor %vm4798, %vm4799
  %v4801 = vsel %vm4800, %v4793, %v4797
  %v4802 = vand.u32 2147483647, %v4792
  %vm4803 = vcmp.eq.f32.partialorder %v4802, 8.507059e+37
  %v4804 = vand.u32 %v4792, 2147483648
  %v4805 = vor.u32 1.1754944e-38, %v4804
  %v4806 = vsel %vm4803, %v4805, %v4801
  %s4807 = vtos %v4806
  %v4808 = vmul.f32 %v4782, %v4788
  %v4809 = vsel %vm4106, %v4808, 0.0
  %v4810 = vrot.slane %v4809, 4
  %v4811 = vadd.f32 %v4809, %v4810
  %v4812 = vrot.slane %v4811, 2
  %v4813 = vadd.f32 %v4811, %v4812
  %v4814 = vrot.slane %v4813, 1
  %v4815 = vadd.f32 %v4813, %v4814
  %v4816 = vstv %s4807
  %v4817 = vmul.f32 %v4815, %v4816
  %v4818 = vsub.f32 %v4782, %v4817
  %v4819 = vmul.f32 %v4818, %v4788
  %v4820 = vmul.f32 %v4819, %v4819
  %v4821 = vsel %vm4106, %v4820, 0.0
  %v4822 = vrot.slane %v4821, 4
  %v4823 = vadd.f32 %v4821, %v4822
  %v4824 = vrot.slane %v4823, 2
  %v4825 = vadd.f32 %v4823, %v4824
  %v4826 = vrot.slane %v4825, 1
  %v4827 = vadd.f32 %v4825, %v4826
  %v4828 = vmul.f32 %v4827, %v4816
  %v4829 = vadd.f32 %v4828, 1e-05
  %v4830 = vrsqrt.pop %v4829
  %v4831 = vmul.f32 %v4830, %v4829
  %v4832 = vmul.f32 %v4831, %v4830
  %v4833 = vmul.f32 0.5, %v4832
  %v4834 = vsub.f32 1.5, %v4833
  %v4835 = vmul.f32 %v4830, %v4834
  %vm4836 = vweird.f32 %v4829
  %vm4837 = vweird.f32 %v4830
  %vm4838 = vmor %vm4836, %vm4837
  %v4839 = vsel %vm4838, %v4830, %v4835
  %v4840 = vmul.f32 %v4818, %v4839
  %v4841 = vperm.slane %v4755, 1
  %v4842 = vmul.f32 %v4840, %v4841
  %v4843 = vperm.slane %v4755, 2
  %v4844 = vadd.f32 %v4842, %v4843
  %p4845 = scmp.gt.s32.totalorder %s4748, 1
  %s4846 = scalar_select %p4845, 1, 0
  %s4847 = scvt.s32.f32 %s4846
  %v4848 = vstv %s4847
  %v4849 = vmul.f32 %v4848, %v4844
  %s4850 = ssub.f32 1.0, %s4847
  %v4851 = vstv %s4850
  %v4852 = vmul.f32 %v4851, %v4782
  %v4853 = vadd.f32 %v4849, %v4852
  %v4854 = vmax.f32 %v4853, 0.0
  %v4855 = vmul.f32 %v4854, %v4788
  %4856 = vst.msk [vmem:[%s5 + $0x30] sm:$0xff] %vm4106, %v4855
  %s4857 = sadd.s32 %s4086, 7
  %s4858 = sld [smem:[#allocation3 + %s4857]]
  %s4859 = scalar_lea.vmem %s3, 112
  %v4860 = vld [vmem:[%s4859] sm:$0xf]
  %v4861 = vld [vmem:[%s4859 + $0x4] sm:$0xf]
  %v4862 = vld [vmem:[%s4859 + $0x8] sm:$0xf]
  %v4863 = vld [vmem:[%s4859 + $0xc] sm:$0xf]
  %s4864 = scalar_lea.vmem %s4, 56
  %v4865 = vld [vmem:[%s4864] sm:$0xff]
  %v4866 = vperm.slane %v4865, 0
  %v4871 = vunpack.c.l.b16 %v4860
  %v4872 = vunpack.c.l.b16 %v4861
  %v4873 = vunpack.c.l.b16 %v4862
  %v4874 = vunpack.c.l.b16 %v4863
  %v4875 = vpack.c.b16 %v4872, %v4871
  %v4876 = vpack.c.b16 %v4874, %v4873
  %v4880 = vsel %vm4106, %v4085, 0
  %4882 = vmatpush.bf16.msra.mxu0 0
  %4883 = vmatpush.bf16.msra.mxu0 0
  %4884 = vmatpush.bf16.msra.mxu0 0
  %4885 = vmatpush.bf16.msra.mxu0 0
  %4886 = vmatpush.bf16.msra.mxu0 0
  %4887 = vmatpush.bf16.msra.mxu0 0
  %4888 = vmatpush.bf16.msra.mxu0 %v4876
  %4889 = vmatpush.bf16.msra.mxu0 %v4875
  %4890 = vmatmul.bf16.gmra.mxu0 %v4880
  %v4891 = vpop.f32.mrf.mxu0
  %v4892 = vadd.f32 %v4866, %v4891
  %v4893 = vpop.f32.mrf.mxu0
  %4894 = vdwg.mxu0
  %v4895 = vstv %s4858
  %vm4896 = vcmp.lt.s32.totalorder %v4124, %v4895
  %v4897 = vsel %vm4896, 1, 0
  %v4898 = vcvt.s32.f32 %v4897
  %p4899 = scmp.gt.s32.totalorder %s4858, 1
  %s4900 = scalar_select %p4899, %s4858, 1
  %s4901 = scvt.s32.f32 %s4900
  %v4902 = vstv %s4901
  %v4903 = vrcp.pop %v4902
  %v4904 = vmul.f32 %v4902, %v4903
  %v4905 = vsub.f32 1.0, %v4904
  %v4906 = vmul.f32 %v4903, %v4905
  %v4907 = vadd.f32 %v4903, %v4906
  %vm4908 = vweird.f32 %v4902
  %vm4909 = vweird.f32 %v4903
  %vm4910 = vmor %vm4908, %vm4909
  %v4911 = vsel %vm4910, %v4903, %v4907
  %v4912 = vand.u32 2147483647, %v4902
  %vm4913 = vcmp.eq.f32.partialorder %v4912, 8.507059e+37
  %v4914 = vand.u32 %v4902, 2147483648
  %v4915 = vor.u32 1.1754944e-38, %v4914
  %v4916 = vsel %vm4913, %v4915, %v4911
  %s4917 = vtos %v4916
  %v4918 = vmul.f32 %v4892, %v4898
  %v4919 = vsel %vm4106, %v4918, 0.0
  %v4920 = vrot.slane %v4919, 4
  %v4921 = vadd.f32 %v4919, %v4920
  %v4922 = vrot.slane %v4921, 2
  %v4923 = vadd.f32 %v4921, %v4922
  %v4924 = vrot.slane %v4923, 1
  %v4925 = vadd.f32 %v4923, %v4924
  %v4926 = vstv %s4917
  %v4927 = vmul.f32 %v4925, %v4926
  %v4928 = vsub.f32 %v4892, %v4927
  %v4929 = vmul.f32 %v4928, %v4898
  %v4930 = vmul.f32 %v4929, %v4929
  %v4931 = vsel %vm4106, %v4930, 0.0
  %v4932 = vrot.slane %v4931, 4
  %v4933 = vadd.f32 %v4931, %v4932
  %v4934 = vrot.slane %v4933, 2
  %v4935 = vadd.f32 %v4933, %v4934
  %v4936 = vrot.slane %v4935, 1
  %v4937 = vadd.f32 %v4935, %v4936
  %v4938 = vmul.f32 %v4937, %v4926
  %v4939 = vadd.f32 %v4938, 1e-05
  %v4940 = vrsqrt.pop %v4939
  %v4941 = vmul.f32 %v4940, %v4939
  %v4942 = vmul.f32 %v4941, %v4940
  %v4943 = vmul.f32 0.5, %v4942
  %v4944 = vsub.f32 1.5, %v4943
  %v4945 = vmul.f32 %v4940, %v4944
  %vm4946 = vweird.f32 %v4939
  %vm4947 = vweird.f32 %v4940
  %vm4948 = vmor %vm4946, %vm4947
  %v4949 = vsel %vm4948, %v4940, %v4945
  %v4950 = vmul.f32 %v4928, %v4949
  %v4951 = vperm.slane %v4865, 1
  %v4952 = vmul.f32 %v4950, %v4951
  %v4953 = vperm.slane %v4865, 2
  %v4954 = vadd.f32 %v4952, %v4953
  %p4955 = scmp.gt.s32.totalorder %s4858, 1
  %s4956 = scalar_select %p4955, 1, 0
  %s4957 = scvt.s32.f32 %s4956
  %v4958 = vstv %s4957
  %v4959 = vmul.f32 %v4958, %v4954
  %s4960 = ssub.f32 1.0, %s4957
  %v4961 = vstv %s4960
  %v4962 = vmul.f32 %v4961, %v4892
  %v4963 = vadd.f32 %v4959, %v4962
  %v4964 = vmax.f32 %v4963, 0.0
  %v4965 = vmul.f32 %v4964, %v4898
  %4966 = vst.msk [vmem:[%s5 + $0x38] sm:$0xff] %vm4106, %v4965
  // Predicated region
  $region18: #{tpu_custom_call.1} parent=0 // pred_check
    _
  $region19: #{tpu_custom_call.1} parent=0 // pred_check_branch
    %4968 = sbr.rel (0) target = $region21
  $region20: #{tpu_custom_call.1} parent=0 // pred_region
    _
  $region21: #{tpu_custom_call.1} parent=0 // pred_fallthru
    _
  // Predicated region
  $region22: #{tpu_custom_call.1} parent=0 // pred_check
    _
  $region23: #{tpu_custom_call.1} parent=0 // pred_check_branch
    %4970 = sbr.rel (0) target = $region25
  $region24: #{tpu_custom_call.1} parent=0 // pred_region
    _
  $region25: #{tpu_custom_call.1} parent=0 // pred_fallthru
    _

</llo_original>
